<compile_context>
chip_gen: v7x
topology: tpu7x:2x2x1
jax: 0.10.0
libtpu: 0.0.40
codegen_flags: <defaults>
</compile_context>

<pallas_src>
import math
from functools import partial

import jax
import jax.numpy as jnp
from jax.experimental import pallas as pl
from jax.experimental.pallas import tpu as pltpu

_LN_EPS = 1e-5


def _layernorm(x, gamma, beta, eps=_LN_EPS):
    # One-pass variance: E[x^2] - mu^2 (clamped at 0).
    mu = jnp.mean(x, axis=-1, keepdims=True)
    var = jnp.maximum(jnp.mean(x * x, axis=-1, keepdims=True) - mu * mu, 0.0)
    return (x - mu) * jax.lax.rsqrt(var + eps) * gamma + beta


# --------------------------------------------------------------------------
# Fused FeedbackLayer forward over one (batch, T-tile) block
# --------------------------------------------------------------------------
def feedback_layer_kernel(
    x_ref, k_ref, v_ref, pos_ref,
    g1_ref, b1_ref, g2_ref, b2_ref,
    wq_ref, wo_ref,
    wg_ref, bg_ref, wvf_ref, bvf_ref, wout_ref, bout_ref,
    o_ref,
    ctx_ref,                      # VMEM scratch (tq, H*Dh) bf16
    *, n_head, d_head,
):
    f32, bf16 = jnp.float32, jnp.bfloat16

    x = x_ref[0]                                                   # (tq, D) f32

    # ---- x = LayerNorm_0(x)
    h1 = _layernorm(x, g1_ref[...], b1_ref[...])                   # (tq, D) f32
    h1b = h1.astype(bf16)

    # ---- FeedbackAttention(h1, memory, pos)
    # Single wide Q projection (scale 1/sqrt(d_head) is folded into wq).
    qw = jnp.dot(h1b, wq_ref[...], preferred_element_type=f32).astype(bf16)

    # Per-head attention with static lane slices; contexts go straight to a
    # VMEM scratch so only one (tq, Dh) f32 context is live at a time.
    for h in range(n_head):                                        # small static unroll
        lo, hi = h * d_head, (h + 1) * d_head
        qh = qw[:, lo:hi]                                          # (tq, Dh) bf16
        kh = k_ref[0, :, lo:hi]                                    # (M, Dh)  bf16
        vh = v_ref[0, :, lo:hi]                                    # (M, Dh)  bf16
        s = jnp.einsum("td,md->tm", qh, kh,
                       preferred_element_type=f32)                 # (tq, M) f32
        s = s + pos_ref[h].astype(f32)                             # additive pos bias
        s = s - jnp.max(s, axis=-1, keepdims=True)
        p = jnp.exp(s)
        p = p * pl.reciprocal(jnp.sum(p, axis=-1, keepdims=True), approx=True)
        ctx_h = jnp.dot(p.astype(bf16), vh, preferred_element_type=f32)
        ctx_ref[:, lo:hi] = ctx_h.astype(bf16)

    # Single output projection over the concatenated heads (read from scratch).
    attn_out = jnp.dot(ctx_ref[...], wo_ref[...], preferred_element_type=f32)
    x1 = h1 + attn_out                                             # residual on post-norm x

    # ---- x = LayerNorm_1(x)
    h2 = _layernorm(x1, g2_ref[...], b2_ref[...])
    h2b = h2.astype(bf16)

    # ---- GatedFeedForward:  W_out( gelu(W_g h) * (W_v h) )
    gate = jax.nn.gelu(jnp.dot(h2b, wg_ref[...],
                               preferred_element_type=f32) + bg_ref[...])
    val = jnp.dot(h2b, wvf_ref[...], preferred_element_type=f32) + bvf_ref[...]
    ff = jnp.dot((gate * val).astype(bf16), wout_ref[...],
                 preferred_element_type=f32) + bout_ref[...]

    o_ref[0] = (h2 + ff).astype(o_ref.dtype)


# --------------------------------------------------------------------------
# Wrapper
# --------------------------------------------------------------------------
def _pick_vmem_limit_bytes():
    # ~75% of physical VMEM, capped at 100 MiB:
    #   v7x (64 MiB phys) -> ~48 MiB; v5e/v6e (128 MiB phys) -> ~96-100 MiB.
    try:
        cap = pltpu.get_tpu_info().vmem_capacity_bytes
    except Exception:
        cap = 64 * 1024 * 1024
    return min(int(cap * 3 // 4), 100 * 1024 * 1024)


def feedback_layer(x, mem, pos_bias, params, *, n_head, d_head, tq=None):
    B, T, D = x.shape
    M = mem.shape[1]
    hd = n_head * d_head
    f32, bf16 = jnp.float32, jnp.bfloat16
    scale = 1.0 / math.sqrt(d_head)

    if tq is None:
        tq = T if T <= 256 else 256
        # v7x has 2 TensorCores: keep the parallel grid at >= 2 blocks.
        while B * (T // tq) < 2 and tq >= 16 and tq % 16 == 0:
            tq //= 2
    assert T % tq == 0 and (tq == T or tq % 8 == 0), "tq must divide T and be 8-aligned"

    # ---- Host/XLA-side prep (wide, lane-dense layouts; bf16 matmul weights).
    wq_s = (params["wq"] * scale).astype(bf16)        # scale folded into wq
    wo_b = params["wo"].astype(bf16)
    wg_b = params["wg"].astype(bf16)
    wvf_b = params["wvf"].astype(bf16)
    wout_b = params["wout"].astype(bf16)

    # K/V projection once per batch as plain XLA matmuls, lane-dense (B, M, H*Dh).
    mem_b = mem.astype(bf16)
    k = jnp.einsum("bmd,dk->bmk", mem_b, params["wk"].astype(bf16),
                   preferred_element_type=f32).astype(bf16)
    v = jnp.einsum("bmd,dk->bmk", mem_b, params["wv"].astype(bf16),
                   preferred_element_type=f32).astype(bf16)

    pos_b = pos_bias.astype(bf16)                     # (H, T, M) streamed as bf16

    args = (
        x, k, v, pos_b,
        params["g1"], params["b1"], params["g2"], params["b2"],
        wq_s, wo_b,
        wg_b, params["bg"], wvf_b, params["bvf"], wout_b, params["bout"],
    )

    def const_spec(a):
        # Grid-invariant operand: single-buffered (reclaims VMEM, no pipelining
        # benefit since its block index never changes).
        return pl.BlockSpec(a.shape, lambda b, t: (0,) * a.ndim,
                            pipeline_mode=pl.Buffered(1))

    in_specs = [
        pl.BlockSpec((1, tq, D), lambda b, t: (b, t, 0)),            # x
        pl.BlockSpec((1, M, hd), lambda b, t: (b, 0, 0),
                     pipeline_mode=pl.Buffered(1)),                  # k (changes only with b)
        pl.BlockSpec((1, M, hd), lambda b, t: (b, 0, 0),
                     pipeline_mode=pl.Buffered(1)),                  # v
        pl.BlockSpec((n_head, tq, M), lambda b, t: (0, t, 0)),       # pos bias (bf16)
    ] + [const_spec(a) for a in args[4:]]

    return pl.pallas_call(
        partial(feedback_layer_kernel, n_head=n_head, d_head=d_head),
        out_shape=jax.ShapeDtypeStruct((B, T, D), x.dtype),
        grid=(B, T // tq),
        in_specs=in_specs,
        out_specs=pl.BlockSpec((1, tq, D), lambda b, t: (b, t, 0)),
        scratch_shapes=[pltpu.VMEM((tq, hd), bf16)],
        compiler_params=pltpu.CompilerParams(
            dimension_semantics=("parallel", "parallel"),
            vmem_limit_bytes=_pick_vmem_limit_bytes(),
        ),
    )(*args)


# --------------------------------------------------------------------------
# Pure-JAX reference (same bf16 cast points; exact softmax divide)
# --------------------------------------------------------------------------
def feedback_layer_ref(x, mem, pos_bias, params, *, n_head, d_head):
    f32, bf16 = jnp.float32, jnp.bfloat16
    h1 = _layernorm(x, params["g1"], params["b1"])
    scale = 1.0 / math.sqrt(d_head)
    wq_s = (params["wq"] * scale).astype(bf16)
    q = jnp.einsum("btd,dk->btk", h1.astype(bf16), wq_s, preferred_element_type=f32)
    mem_b = mem.astype(bf16)
    kk = jnp.einsum("bmd,dk->bmk", mem_b, params["wk"].astype(bf16),
                    preferred_element_type=f32).astype(bf16)
    vv = jnp.einsum("bmd,dk->bmk", mem_b, params["wv"].astype(bf16),
                    preferred_element_type=f32).astype(bf16)
    B, T, _ = x.shape
    M = mem.shape[1]
    qh = q.reshape(B, T, n_head, d_head).astype(bf16)
    kh = kk.reshape(B, M, n_head, d_head)
    vh = vv.reshape(B, M, n_head, d_head)
    s = jnp.einsum("bthd,bmhd->bhtm", qh, kh, preferred_element_type=f32)
    s = s + pos_bias[None]
    p = jax.nn.softmax(s, axis=-1)
    ctx = jnp.einsum("bhtm,bmhd->bthd", p.astype(bf16), vh, preferred_element_type=f32)
    ctx = ctx.reshape(B, T, n_head * d_head).astype(bf16)
    x1 = h1 + jnp.einsum("btk,kd->btd", ctx, params["wo"].astype(bf16),
                         preferred_element_type=f32)
    h2 = _layernorm(x1, params["g2"], params["b2"])
    h2b = h2.astype(bf16)
    gate = jax.nn.gelu(jnp.einsum("btd,di->bti", h2b, params["wg"].astype(bf16),
                                  preferred_element_type=f32) + params["bg"])
    val = jnp.einsum("btd,di->bti", h2b, params["wvf"].astype(bf16),
                     preferred_element_type=f32) + params["bvf"]
    ff = jnp.einsum("bti,id->btd", (gate * val).astype(bf16),
                    params["wout"].astype(bf16),
                    preferred_element_type=f32) + params["bout"]
    return h2 + ff


if __name__ == "__main__":
    B, T, M = 2, 128, 128
    d_model, n_head, d_head, d_inner = 128, 4, 32, 256
    hd = n_head * d_head

    key = jax.random.PRNGKey(0)
    ks = jax.random.split(key, 10)
    f32 = jnp.float32
    n = lambda k, s: (0.02 * jax.random.normal(k, s)).astype(f32)

    params = {
        "g1": jnp.ones((1, d_model), f32), "b1": jnp.zeros((1, d_model), f32),
        "g2": jnp.ones((1, d_model), f32), "b2": jnp.zeros((1, d_model), f32),
        "wq": n(ks[0], (d_model, hd)),
        "wk": n(ks[1], (d_model, hd)),
        "wv": n(ks[2], (d_model, hd)),
        "wo": n(ks[3], (hd, d_model)),
        "wg": n(ks[4], (d_model, d_inner)), "bg": jnp.zeros((1, d_inner), f32),
        "wvf": n(ks[5], (d_model, d_inner)), "bvf": jnp.zeros((1, d_inner), f32),
        "wout": n(ks[6], (d_inner, d_model)), "bout": jnp.zeros((1, d_model), f32),
    }

    x = jax.random.normal(ks[7], (B, T, d_model), f32)
    mem = jax.random.normal(ks[8], (B, M, d_model), f32)
    # Pre-round the position bias to bf16-representable values so the kernel
    # (which streams it as bf16) and the reference see identical inputs.
    pos_bias = (0.1 * jax.random.normal(ks[9], (n_head, T, M))
                ).astype(jnp.bfloat16).astype(f32)

    out = feedback_layer(x, mem, pos_bias, params,
                         n_head=n_head, d_head=d_head, tq=64)
    out = jax.block_until_ready(out)

    ref = feedback_layer_ref(x, mem, pos_bias, params,
                             n_head=n_head, d_head=d_head)
    assert out.shape == (B, T, d_model)
    assert jnp.allclose(out, ref, rtol=2e-2, atol=2e-2), "mismatch vs JAX reference"
    print("KERNEL_OK")
</pallas_src>

<mosaic_0001>
module attributes {stable_mosaic.version = 11 : i64} {
  func.func @feedback_layer_kernel(%arg0: i32, %arg1: i32, %arg2: memref<1x64x128xf32, #tpu.memory_space<vmem>>, %arg3: memref<1x128x128xbf16, #tpu.memory_space<vmem>>, %arg4: memref<1x128x128xbf16, #tpu.memory_space<vmem>>, %arg5: memref<4x64x128xbf16, #tpu.memory_space<vmem>>, %arg6: memref<1x128xf32, #tpu.memory_space<vmem>>, %arg7: memref<1x128xf32, #tpu.memory_space<vmem>>, %arg8: memref<1x128xf32, #tpu.memory_space<vmem>>, %arg9: memref<1x128xf32, #tpu.memory_space<vmem>>, %arg10: memref<128x128xbf16, #tpu.memory_space<vmem>>, %arg11: memref<128x128xbf16, #tpu.memory_space<vmem>>, %arg12: memref<128x256xbf16, #tpu.memory_space<vmem>>, %arg13: memref<1x256xf32, #tpu.memory_space<vmem>>, %arg14: memref<128x256xbf16, #tpu.memory_space<vmem>>, %arg15: memref<1x256xf32, #tpu.memory_space<vmem>>, %arg16: memref<256x128xbf16, #tpu.memory_space<vmem>>, %arg17: memref<1x128xf32, #tpu.memory_space<vmem>>, %arg18: memref<1x64x128xf32, #tpu.memory_space<vmem>>, %arg19: memref<64x128xbf16, #tpu.memory_space<vmem>>) attributes {dimension_semantics = [#tpu.dimension_semantics<parallel>, #tpu.dimension_semantics<parallel>], iteration_bounds = array<i64: 2, 2>, scalar_prefetch = 0 : i64, scratch_operands = 1 : i64, tpu.core_type = #tpu.core_type<tc>, window_params = [{transform_indices = @transform_0, window_bounds = array<i64: 1, 64, 128>}, {pipeline_mode = #tpu.pipeline_mode<synchronous>, transform_indices = @transform_1, window_bounds = array<i64: 1, 128, 128>}, {pipeline_mode = #tpu.pipeline_mode<synchronous>, transform_indices = @transform_2, window_bounds = array<i64: 1, 128, 128>}, {transform_indices = @transform_3, window_bounds = array<i64: 4, 64, 128>}, {pipeline_mode = #tpu.pipeline_mode<synchronous>, transform_indices = @transform_4, window_bounds = array<i64: 1, 128>}, {pipeline_mode = #tpu.pipeline_mode<synchronous>, transform_indices = @transform_5, window_bounds = array<i64: 1, 128>}, {pipeline_mode = #tpu.pipeline_mode<synchronous>, transform_indices = @transform_6, window_bounds = array<i64: 1, 128>}, {pipeline_mode = #tpu.pipeline_mode<synchronous>, transform_indices = @transform_7, window_bounds = array<i64: 1, 128>}, {pipeline_mode = #tpu.pipeline_mode<synchronous>, transform_indices = @transform_8, window_bounds = array<i64: 128, 128>}, {pipeline_mode = #tpu.pipeline_mode<synchronous>, transform_indices = @transform_9, window_bounds = array<i64: 128, 128>}, {pipeline_mode = #tpu.pipeline_mode<synchronous>, transform_indices = @transform_10, window_bounds = array<i64: 128, 256>}, {pipeline_mode = #tpu.pipeline_mode<synchronous>, transform_indices = @transform_11, window_bounds = array<i64: 1, 256>}, {pipeline_mode = #tpu.pipeline_mode<synchronous>, transform_indices = @transform_12, window_bounds = array<i64: 128, 256>}, {pipeline_mode = #tpu.pipeline_mode<synchronous>, transform_indices = @transform_13, window_bounds = array<i64: 1, 256>}, {pipeline_mode = #tpu.pipeline_mode<synchronous>, transform_indices = @transform_14, window_bounds = array<i64: 256, 128>}, {pipeline_mode = #tpu.pipeline_mode<synchronous>, transform_indices = @transform_15, window_bounds = array<i64: 1, 128>}, {transform_indices = @transform_16, window_bounds = array<i64: 1, 64, 128>}]} {
    %c0 = arith.constant 0 : index
    %c0_0 = arith.constant 0 : index
    %c0_1 = arith.constant 0 : index
    %0 = vector.load %arg2[%c0, %c0_0, %c0_1] : memref<1x64x128xf32, #tpu.memory_space<vmem>>, vector<1x64x128xf32>
    %1 = vector.shape_cast %0 : vector<1x64x128xf32> to vector<64x128xf32>
    %c0_2 = arith.constant 0 : index
    %c0_3 = arith.constant 0 : index
    %2 = vector.load %arg6[%c0_2, %c0_3] : memref<1x128xf32, #tpu.memory_space<vmem>>, vector<1x128xf32>
    %c0_4 = arith.constant 0 : index
    %c0_5 = arith.constant 0 : index
    %3 = vector.load %arg7[%c0_4, %c0_5] : memref<1x128xf32, #tpu.memory_space<vmem>>, vector<1x128xf32>
    %cst = arith.constant dense<0.000000e+00> : vector<64xf32>
    %4 = vector.multi_reduction <add>, %1, %cst [1] : vector<64x128xf32> to vector<64xf32>
    %5 = vector.shape_cast %4 : vector<64xf32> to vector<64x1xf32>
    %cst_6 = arith.constant 1.280000e+02 : f32
    %6 = vector.broadcast %cst_6 : f32 to vector<64x1xf32>
    %7 = arith.divf %5, %6 : vector<64x1xf32>
    %8 = arith.mulf %1, %1 : vector<64x128xf32>
    %cst_7 = arith.constant dense<0.000000e+00> : vector<64xf32>
    %9 = vector.multi_reduction <add>, %8, %cst_7 [1] : vector<64x128xf32> to vector<64xf32>
    %10 = vector.shape_cast %9 : vector<64xf32> to vector<64x1xf32>
    %cst_8 = arith.constant 1.280000e+02 : f32
    %11 = vector.broadcast %cst_8 : f32 to vector<64x1xf32>
    %12 = arith.divf %10, %11 : vector<64x1xf32>
    %13 = arith.mulf %7, %7 : vector<64x1xf32>
    %14 = arith.subf %12, %13 : vector<64x1xf32>
    %cst_9 = arith.constant 0.000000e+00 : f32
    %15 = vector.broadcast %cst_9 : f32 to vector<64x1xf32>
    %16 = arith.maximumf %14, %15 : vector<64x1xf32>
    %17 = vector.broadcast %7 : vector<64x1xf32> to vector<64x128xf32>
    %18 = arith.subf %1, %17 : vector<64x128xf32>
    %cst_10 = arith.constant 9.99999974E-6 : f32
    %19 = vector.broadcast %cst_10 : f32 to vector<64x1xf32>
    %20 = arith.addf %16, %19 : vector<64x1xf32>
    %21 = math.rsqrt %20 : vector<64x1xf32>
    %22 = vector.broadcast %21 : vector<64x1xf32> to vector<64x128xf32>
    %23 = arith.mulf %18, %22 : vector<64x128xf32>
    %24 = vector.broadcast %2 : vector<1x128xf32> to vector<64x128xf32>
    %25 = arith.mulf %23, %24 : vector<64x128xf32>
    %26 = vector.broadcast %3 : vector<1x128xf32> to vector<64x128xf32>
    %27 = arith.addf %25, %26 : vector<64x128xf32>
    %28 = arith.truncf %27 : vector<64x128xf32> to vector<64x128xbf16>
    %c0_11 = arith.constant 0 : index
    %c0_12 = arith.constant 0 : index
    %29 = vector.load %arg10[%c0_11, %c0_12] : memref<128x128xbf16, #tpu.memory_space<vmem>>, vector<128x128xbf16>
    %cst_13 = arith.constant dense<0.000000e+00> : vector<64x128xf32>
    %30 = tpu.matmul %28, %29, %cst_13 {dimension_numbers = #tpu.dot_dimension_numbers<[1], [0], [0], [1], [0, 0, 1, 1], [], []>} : vector<64x128xbf16>, vector<128x128xbf16>, vector<64x128xf32> -> vector<64x128xf32>
    %31 = arith.truncf %30 : vector<64x128xf32> to vector<64x128xbf16>
    %32 = vector.extract_strided_slice %31 {offsets = [0, 0], sizes = [64, 32], strides = [1, 1]} : vector<64x128xbf16> to vector<64x32xbf16>
    %c0_14 = arith.constant 0 : index
    %c0_15 = arith.constant 0 : index
    %c0_16 = arith.constant 0 : index
    %33 = vector.load %arg3[%c0_14, %c0_15, %c0_16] : memref<1x128x128xbf16, #tpu.memory_space<vmem>>, vector<1x128x32xbf16>
    %34 = vector.shape_cast %33 : vector<1x128x32xbf16> to vector<128x32xbf16>
    %c0_17 = arith.constant 0 : index
    %c0_18 = arith.constant 0 : index
    %c0_19 = arith.constant 0 : index
    %35 = vector.load %arg4[%c0_17, %c0_18, %c0_19] : memref<1x128x128xbf16, #tpu.memory_space<vmem>>, vector<1x128x32xbf16>
    %36 = vector.shape_cast %35 : vector<1x128x32xbf16> to vector<128x32xbf16>
    "tpu.trace_start"() <{level = 10 : i32, message = "td,md->tm"}> : () -> ()
    %cst_20 = arith.constant dense<0.000000e+00> : vector<64x128xf32>
    %37 = tpu.matmul %32, %34, %cst_20 {dimension_numbers = #tpu.dot_dimension_numbers<[1], [1], [0], [0], [0, 0, 1, 0], [], []>} : vector<64x32xbf16>, vector<128x32xbf16>, vector<64x128xf32> -> vector<64x128xf32>
    "tpu.trace_stop"() : () -> ()
    %c0_21 = arith.constant 0 : index
    %c0_22 = arith.constant 0 : index
    %c0_23 = arith.constant 0 : index
    %38 = vector.load %arg5[%c0_21, %c0_22, %c0_23] : memref<4x64x128xbf16, #tpu.memory_space<vmem>>, vector<1x64x128xbf16>
    %39 = vector.shape_cast %38 : vector<1x64x128xbf16> to vector<64x128xbf16>
    %40 = arith.extf %39 : vector<64x128xbf16> to vector<64x128xf32>
    %41 = arith.addf %37, %40 : vector<64x128xf32>
    %cst_24 = arith.constant dense<0xFF800000> : vector<64xf32>
    %42 = vector.multi_reduction <maximumf>, %41, %cst_24 [1] : vector<64x128xf32> to vector<64xf32>
    %43 = vector.shape_cast %42 : vector<64xf32> to vector<64x1xf32>
    %44 = vector.broadcast %43 : vector<64x1xf32> to vector<64x128xf32>
    %45 = arith.subf %41, %44 : vector<64x128xf32>
    %46 = math.exp %45 : vector<64x128xf32>
    %cst_25 = arith.constant dense<0.000000e+00> : vector<64xf32>
    %47 = vector.multi_reduction <add>, %46, %cst_25 [1] : vector<64x128xf32> to vector<64xf32>
    %48 = vector.shape_cast %47 : vector<64xf32> to vector<64x1xf32>
    %49 = tpu.reciprocal %48 {approx = true} : vector<64x1xf32> -> vector<64x1xf32>
    %50 = vector.broadcast %49 : vector<64x1xf32> to vector<64x128xf32>
    %51 = arith.mulf %46, %50 : vector<64x128xf32>
    %52 = arith.truncf %51 : vector<64x128xf32> to vector<64x128xbf16>
    %cst_26 = arith.constant dense<0.000000e+00> : vector<64x32xf32>
    %53 = tpu.matmul %52, %36, %cst_26 {dimension_numbers = #tpu.dot_dimension_numbers<[1], [0], [0], [1], [0, 0, 1, 1], [], []>} : vector<64x128xbf16>, vector<128x32xbf16>, vector<64x32xf32> -> vector<64x32xf32>
    %54 = arith.truncf %53 : vector<64x32xf32> to vector<64x32xbf16>
    %c0_27 = arith.constant 0 : index
    %c0_28 = arith.constant 0 : index
    %55 = vector.load %arg19[%c0_27, %c0_28] : memref<64x128xbf16, #tpu.memory_space<vmem>>, vector<64x32xbf16>
    tpu.vector_store %arg19[%c0_27, %c0_28], %54 {strides = array<i32>} : memref<64x128xbf16, #tpu.memory_space<vmem>>, vector<64x32xbf16>,
    %56 = vector.extract_strided_slice %31 {offsets = [0, 32], sizes = [64, 32], strides = [1, 1]} : vector<64x128xbf16> to vector<64x32xbf16>
    %c0_29 = arith.constant 0 : index
    %c0_30 = arith.constant 0 : index
    %c32 = arith.constant 32 : index
    %57 = vector.load %arg3[%c0_29, %c0_30, %c32] : memref<1x128x128xbf16, #tpu.memory_space<vmem>>, vector<1x128x32xbf16>
    %58 = vector.shape_cast %57 : vector<1x128x32xbf16> to vector<128x32xbf16>
    %c0_31 = arith.constant 0 : index
    %c0_32 = arith.constant 0 : index
    %c32_33 = arith.constant 32 : index
    %59 = vector.load %arg4[%c0_31, %c0_32, %c32_33] : memref<1x128x128xbf16, #tpu.memory_space<vmem>>, vector<1x128x32xbf16>
    %60 = vector.shape_cast %59 : vector<1x128x32xbf16> to vector<128x32xbf16>
    "tpu.trace_start"() <{level = 10 : i32, message = "td,md->tm"}> : () -> ()
    %cst_34 = arith.constant dense<0.000000e+00> : vector<64x128xf32>
    %61 = tpu.matmul %56, %58, %cst_34 {dimension_numbers = #tpu.dot_dimension_numbers<[1], [1], [0], [0], [0, 0, 1, 0], [], []>} : vector<64x32xbf16>, vector<128x32xbf16>, vector<64x128xf32> -> vector<64x128xf32>
    "tpu.trace_stop"() : () -> ()
    %c1 = arith.constant 1 : index
    %c0_35 = arith.constant 0 : index
    %c0_36 = arith.constant 0 : index
    %62 = vector.load %arg5[%c1, %c0_35, %c0_36] : memref<4x64x128xbf16, #tpu.memory_space<vmem>>, vector<1x64x128xbf16>
    %63 = vector.shape_cast %62 : vector<1x64x128xbf16> to vector<64x128xbf16>
    %64 = arith.extf %63 : vector<64x128xbf16> to vector<64x128xf32>
    %65 = arith.addf %61, %64 : vector<64x128xf32>
    %cst_37 = arith.constant dense<0xFF800000> : vector<64xf32>
    %66 = vector.multi_reduction <maximumf>, %65, %cst_37 [1] : vector<64x128xf32> to vector<64xf32>
    %67 = vector.shape_cast %66 : vector<64xf32> to vector<64x1xf32>
    %68 = vector.broadcast %67 : vector<64x1xf32> to vector<64x128xf32>
    %69 = arith.subf %65, %68 : vector<64x128xf32>
    %70 = math.exp %69 : vector<64x128xf32>
    %cst_38 = arith.constant dense<0.000000e+00> : vector<64xf32>
    %71 = vector.multi_reduction <add>, %70, %cst_38 [1] : vector<64x128xf32> to vector<64xf32>
    %72 = vector.shape_cast %71 : vector<64xf32> to vector<64x1xf32>
    %73 = tpu.reciprocal %72 {approx = true} : vector<64x1xf32> -> vector<64x1xf32>
    %74 = vector.broadcast %73 : vector<64x1xf32> to vector<64x128xf32>
    %75 = arith.mulf %70, %74 : vector<64x128xf32>
    %76 = arith.truncf %75 : vector<64x128xf32> to vector<64x128xbf16>
    %cst_39 = arith.constant dense<0.000000e+00> : vector<64x32xf32>
    %77 = tpu.matmul %76, %60, %cst_39 {dimension_numbers = #tpu.dot_dimension_numbers<[1], [0], [0], [1], [0, 0, 1, 1], [], []>} : vector<64x128xbf16>, vector<128x32xbf16>, vector<64x32xf32> -> vector<64x32xf32>
    %78 = arith.truncf %77 : vector<64x32xf32> to vector<64x32xbf16>
    %c0_40 = arith.constant 0 : index
    %c32_41 = arith.constant 32 : index
    %79 = vector.load %arg19[%c0_40, %c32_41] : memref<64x128xbf16, #tpu.memory_space<vmem>>, vector<64x32xbf16>
    tpu.vector_store %arg19[%c0_40, %c32_41], %78 {strides = array<i32>} : memref<64x128xbf16, #tpu.memory_space<vmem>>, vector<64x32xbf16>,
    %80 = vector.extract_strided_slice %31 {offsets = [0, 64], sizes = [64, 32], strides = [1, 1]} : vector<64x128xbf16> to vector<64x32xbf16>
    %c0_42 = arith.constant 0 : index
    %c0_43 = arith.constant 0 : index
    %c64 = arith.constant 64 : index
    %81 = vector.load %arg3[%c0_42, %c0_43, %c64] : memref<1x128x128xbf16, #tpu.memory_space<vmem>>, vector<1x128x32xbf16>
    %82 = vector.shape_cast %81 : vector<1x128x32xbf16> to vector<128x32xbf16>
    %c0_44 = arith.constant 0 : index
    %c0_45 = arith.constant 0 : index
    %c64_46 = arith.constant 64 : index
    %83 = vector.load %arg4[%c0_44, %c0_45, %c64_46] : memref<1x128x128xbf16, #tpu.memory_space<vmem>>, vector<1x128x32xbf16>
    %84 = vector.shape_cast %83 : vector<1x128x32xbf16> to vector<128x32xbf16>
    "tpu.trace_start"() <{level = 10 : i32, message = "td,md->tm"}> : () -> ()
    %cst_47 = arith.constant dense<0.000000e+00> : vector<64x128xf32>
    %85 = tpu.matmul %80, %82, %cst_47 {dimension_numbers = #tpu.dot_dimension_numbers<[1], [1], [0], [0], [0, 0, 1, 0], [], []>} : vector<64x32xbf16>, vector<128x32xbf16>, vector<64x128xf32> -> vector<64x128xf32>
    "tpu.trace_stop"() : () -> ()
    %c2 = arith.constant 2 : index
    %c0_48 = arith.constant 0 : index
    %c0_49 = arith.constant 0 : index
    %86 = vector.load %arg5[%c2, %c0_48, %c0_49] : memref<4x64x128xbf16, #tpu.memory_space<vmem>>, vector<1x64x128xbf16>
    %87 = vector.shape_cast %86 : vector<1x64x128xbf16> to vector<64x128xbf16>
    %88 = arith.extf %87 : vector<64x128xbf16> to vector<64x128xf32>
    %89 = arith.addf %85, %88 : vector<64x128xf32>
    %cst_50 = arith.constant dense<0xFF800000> : vector<64xf32>
    %90 = vector.multi_reduction <maximumf>, %89, %cst_50 [1] : vector<64x128xf32> to vector<64xf32>
    %91 = vector.shape_cast %90 : vector<64xf32> to vector<64x1xf32>
    %92 = vector.broadcast %91 : vector<64x1xf32> to vector<64x128xf32>
    %93 = arith.subf %89, %92 : vector<64x128xf32>
    %94 = math.exp %93 : vector<64x128xf32>
    %cst_51 = arith.constant dense<0.000000e+00> : vector<64xf32>
    %95 = vector.multi_reduction <add>, %94, %cst_51 [1] : vector<64x128xf32> to vector<64xf32>
    %96 = vector.shape_cast %95 : vector<64xf32> to vector<64x1xf32>
    %97 = tpu.reciprocal %96 {approx = true} : vector<64x1xf32> -> vector<64x1xf32>
    %98 = vector.broadcast %97 : vector<64x1xf32> to vector<64x128xf32>
    %99 = arith.mulf %94, %98 : vector<64x128xf32>
    %100 = arith.truncf %99 : vector<64x128xf32> to vector<64x128xbf16>
    %cst_52 = arith.constant dense<0.000000e+00> : vector<64x32xf32>
    %101 = tpu.matmul %100, %84, %cst_52 {dimension_numbers = #tpu.dot_dimension_numbers<[1], [0], [0], [1], [0, 0, 1, 1], [], []>} : vector<64x128xbf16>, vector<128x32xbf16>, vector<64x32xf32> -> vector<64x32xf32>
    %102 = arith.truncf %101 : vector<64x32xf32> to vector<64x32xbf16>
    %c0_53 = arith.constant 0 : index
    %c64_54 = arith.constant 64 : index
    %103 = vector.load %arg19[%c0_53, %c64_54] : memref<64x128xbf16, #tpu.memory_space<vmem>>, vector<64x32xbf16>
    tpu.vector_store %arg19[%c0_53, %c64_54], %102 {strides = array<i32>} : memref<64x128xbf16, #tpu.memory_space<vmem>>, vector<64x32xbf16>,
    %104 = vector.extract_strided_slice %31 {offsets = [0, 96], sizes = [64, 32], strides = [1, 1]} : vector<64x128xbf16> to vector<64x32xbf16>
    %c0_55 = arith.constant 0 : index
    %c0_56 = arith.constant 0 : index
    %c96 = arith.constant 96 : index
    %105 = vector.load %arg3[%c0_55, %c0_56, %c96] : memref<1x128x128xbf16, #tpu.memory_space<vmem>>, vector<1x128x32xbf16>
    %106 = vector.shape_cast %105 : vector<1x128x32xbf16> to vector<128x32xbf16>
    %c0_57 = arith.constant 0 : index
    %c0_58 = arith.constant 0 : index
    %c96_59 = arith.constant 96 : index
    %107 = vector.load %arg4[%c0_57, %c0_58, %c96_59] : memref<1x128x128xbf16, #tpu.memory_space<vmem>>, vector<1x128x32xbf16>
    %108 = vector.shape_cast %107 : vector<1x128x32xbf16> to vector<128x32xbf16>
    "tpu.trace_start"() <{level = 10 : i32, message = "td,md->tm"}> : () -> ()
    %cst_60 = arith.constant dense<0.000000e+00> : vector<64x128xf32>
    %109 = tpu.matmul %104, %106, %cst_60 {dimension_numbers = #tpu.dot_dimension_numbers<[1], [1], [0], [0], [0, 0, 1, 0], [], []>} : vector<64x32xbf16>, vector<128x32xbf16>, vector<64x128xf32> -> vector<64x128xf32>
    "tpu.trace_stop"() : () -> ()
    %c3 = arith.constant 3 : index
    %c0_61 = arith.constant 0 : index
    %c0_62 = arith.constant 0 : index
    %110 = vector.load %arg5[%c3, %c0_61, %c0_62] : memref<4x64x128xbf16, #tpu.memory_space<vmem>>, vector<1x64x128xbf16>
    %111 = vector.shape_cast %110 : vector<1x64x128xbf16> to vector<64x128xbf16>
    %112 = arith.extf %111 : vector<64x128xbf16> to vector<64x128xf32>
    %113 = arith.addf %109, %112 : vector<64x128xf32>
    %cst_63 = arith.constant dense<0xFF800000> : vector<64xf32>
    %114 = vector.multi_reduction <maximumf>, %113, %cst_63 [1] : vector<64x128xf32> to vector<64xf32>
    %115 = vector.shape_cast %114 : vector<64xf32> to vector<64x1xf32>
    %116 = vector.broadcast %115 : vector<64x1xf32> to vector<64x128xf32>
    %117 = arith.subf %113, %116 : vector<64x128xf32>
    %118 = math.exp %117 : vector<64x128xf32>
    %cst_64 = arith.constant dense<0.000000e+00> : vector<64xf32>
    %119 = vector.multi_reduction <add>, %118, %cst_64 [1] : vector<64x128xf32> to vector<64xf32>
    %120 = vector.shape_cast %119 : vector<64xf32> to vector<64x1xf32>
    %121 = tpu.reciprocal %120 {approx = true} : vector<64x1xf32> -> vector<64x1xf32>
    %122 = vector.broadcast %121 : vector<64x1xf32> to vector<64x128xf32>
    %123 = arith.mulf %118, %122 : vector<64x128xf32>
    %124 = arith.truncf %123 : vector<64x128xf32> to vector<64x128xbf16>
    %cst_65 = arith.constant dense<0.000000e+00> : vector<64x32xf32>
    %125 = tpu.matmul %124, %108, %cst_65 {dimension_numbers = #tpu.dot_dimension_numbers<[1], [0], [0], [1], [0, 0, 1, 1], [], []>} : vector<64x128xbf16>, vector<128x32xbf16>, vector<64x32xf32> -> vector<64x32xf32>
    %126 = arith.truncf %125 : vector<64x32xf32> to vector<64x32xbf16>
    %c0_66 = arith.constant 0 : index
    %c96_67 = arith.constant 96 : index
    %127 = vector.load %arg19[%c0_66, %c96_67] : memref<64x128xbf16, #tpu.memory_space<vmem>>, vector<64x32xbf16>
    tpu.vector_store %arg19[%c0_66, %c96_67], %126 {strides = array<i32>} : memref<64x128xbf16, #tpu.memory_space<vmem>>, vector<64x32xbf16>,
    %c0_68 = arith.constant 0 : index
    %c0_69 = arith.constant 0 : index
    %128 = vector.load %arg19[%c0_68, %c0_69] : memref<64x128xbf16, #tpu.memory_space<vmem>>, vector<64x128xbf16>
    %c0_70 = arith.constant 0 : index
    %c0_71 = arith.constant 0 : index
    %129 = vector.load %arg11[%c0_70, %c0_71] : memref<128x128xbf16, #tpu.memory_space<vmem>>, vector<128x128xbf16>
    %cst_72 = arith.constant dense<0.000000e+00> : vector<64x128xf32>
    %130 = tpu.matmul %128, %129, %cst_72 {dimension_numbers = #tpu.dot_dimension_numbers<[1], [0], [0], [1], [0, 0, 1, 1], [], []>} : vector<64x128xbf16>, vector<128x128xbf16>, vector<64x128xf32> -> vector<64x128xf32>
    %131 = arith.addf %27, %130 : vector<64x128xf32>
    %c0_73 = arith.constant 0 : index
    %c0_74 = arith.constant 0 : index
    %132 = vector.load %arg8[%c0_73, %c0_74] : memref<1x128xf32, #tpu.memory_space<vmem>>, vector<1x128xf32>
    %c0_75 = arith.constant 0 : index
    %c0_76 = arith.constant 0 : index
    %133 = vector.load %arg9[%c0_75, %c0_76] : memref<1x128xf32, #tpu.memory_space<vmem>>, vector<1x128xf32>
    %cst_77 = arith.constant dense<0.000000e+00> : vector<64xf32>
    %134 = vector.multi_reduction <add>, %131, %cst_77 [1] : vector<64x128xf32> to vector<64xf32>
    %135 = vector.shape_cast %134 : vector<64xf32> to vector<64x1xf32>
    %cst_78 = arith.constant 1.280000e+02 : f32
    %136 = vector.broadcast %cst_78 : f32 to vector<64x1xf32>
    %137 = arith.divf %135, %136 : vector<64x1xf32>
    %138 = arith.mulf %131, %131 : vector<64x128xf32>
    %cst_79 = arith.constant dense<0.000000e+00> : vector<64xf32>
    %139 = vector.multi_reduction <add>, %138, %cst_79 [1] : vector<64x128xf32> to vector<64xf32>
    %140 = vector.shape_cast %139 : vector<64xf32> to vector<64x1xf32>
    %cst_80 = arith.constant 1.280000e+02 : f32
    %141 = vector.broadcast %cst_80 : f32 to vector<64x1xf32>
    %142 = arith.divf %140, %141 : vector<64x1xf32>
    %143 = arith.mulf %137, %137 : vector<64x1xf32>
    %144 = arith.subf %142, %143 : vector<64x1xf32>
    %cst_81 = arith.constant 0.000000e+00 : f32
    %145 = vector.broadcast %cst_81 : f32 to vector<64x1xf32>
    %146 = arith.maximumf %144, %145 : vector<64x1xf32>
    %147 = vector.broadcast %137 : vector<64x1xf32> to vector<64x128xf32>
    %148 = arith.subf %131, %147 : vector<64x128xf32>
    %cst_82 = arith.constant 9.99999974E-6 : f32
    %149 = vector.broadcast %cst_82 : f32 to vector<64x1xf32>
    %150 = arith.addf %146, %149 : vector<64x1xf32>
    %151 = math.rsqrt %150 : vector<64x1xf32>
    %152 = vector.broadcast %151 : vector<64x1xf32> to vector<64x128xf32>
    %153 = arith.mulf %148, %152 : vector<64x128xf32>
    %154 = vector.broadcast %132 : vector<1x128xf32> to vector<64x128xf32>
    %155 = arith.mulf %153, %154 : vector<64x128xf32>
    %156 = vector.broadcast %133 : vector<1x128xf32> to vector<64x128xf32>
    %157 = arith.addf %155, %156 : vector<64x128xf32>
    %158 = arith.truncf %157 : vector<64x128xf32> to vector<64x128xbf16>
    %c0_83 = arith.constant 0 : index
    %c0_84 = arith.constant 0 : index
    %159 = vector.load %arg12[%c0_83, %c0_84] : memref<128x256xbf16, #tpu.memory_space<vmem>>, vector<128x256xbf16>
    %cst_85 = arith.constant dense<0.000000e+00> : vector<64x256xf32>
    %160 = tpu.matmul %158, %159, %cst_85 {dimension_numbers = #tpu.dot_dimension_numbers<[1], [0], [0], [1], [0, 0, 1, 1], [], []>} : vector<64x128xbf16>, vector<128x256xbf16>, vector<64x256xf32> -> vector<64x256xf32>
    %c0_86 = arith.constant 0 : index
    %c0_87 = arith.constant 0 : index
    %161 = vector.load %arg13[%c0_86, %c0_87] : memref<1x256xf32, #tpu.memory_space<vmem>>, vector<1x256xf32>
    %162 = vector.broadcast %161 : vector<1x256xf32> to vector<64x256xf32>
    %163 = arith.addf %160, %162 : vector<64x256xf32>
    %164 = arith.mulf %163, %163 : vector<64x256xf32>
    %165 = arith.mulf %163, %164 : vector<64x256xf32>
    %cst_88 = arith.constant 4.471500e-02 : f32
    %166 = vector.broadcast %cst_88 : f32 to vector<64x256xf32>
    %167 = arith.mulf %166, %165 : vector<64x256xf32>
    %168 = arith.addf %163, %167 : vector<64x256xf32>
    %cst_89 = arith.constant 0.797884583 : f32
    %169 = vector.broadcast %cst_89 : f32 to vector<64x256xf32>
    %170 = arith.mulf %169, %168 : vector<64x256xf32>
    %171 = math.tanh %170 : vector<64x256xf32>
    %cst_90 = arith.constant 1.000000e+00 : f32
    %172 = vector.broadcast %cst_90 : f32 to vector<64x256xf32>
    %173 = arith.addf %172, %171 : vector<64x256xf32>
    %cst_91 = arith.constant 5.000000e-01 : f32
    %174 = vector.broadcast %cst_91 : f32 to vector<64x256xf32>
    %175 = arith.mulf %174, %173 : vector<64x256xf32>
    %176 = arith.mulf %163, %175 : vector<64x256xf32>
    %c0_92 = arith.constant 0 : index
    %c0_93 = arith.constant 0 : index
    %177 = vector.load %arg14[%c0_92, %c0_93] : memref<128x256xbf16, #tpu.memory_space<vmem>>, vector<128x256xbf16>
    %cst_94 = arith.constant dense<0.000000e+00> : vector<64x256xf32>
    %178 = tpu.matmul %158, %177, %cst_94 {dimension_numbers = #tpu.dot_dimension_numbers<[1], [0], [0], [1], [0, 0, 1, 1], [], []>} : vector<64x128xbf16>, vector<128x256xbf16>, vector<64x256xf32> -> vector<64x256xf32>
    %c0_95 = arith.constant 0 : index
    %c0_96 = arith.constant 0 : index
    %179 = vector.load %arg15[%c0_95, %c0_96] : memref<1x256xf32, #tpu.memory_space<vmem>>, vector<1x256xf32>
    %180 = vector.broadcast %179 : vector<1x256xf32> to vector<64x256xf32>
    %181 = arith.addf %178, %180 : vector<64x256xf32>
    %182 = arith.mulf %176, %181 : vector<64x256xf32>
    %183 = arith.truncf %182 : vector<64x256xf32> to vector<64x256xbf16>
    %c0_97 = arith.constant 0 : index
    %c0_98 = arith.constant 0 : index
    %184 = vector.load %arg16[%c0_97, %c0_98] : memref<256x128xbf16, #tpu.memory_space<vmem>>, vector<256x128xbf16>
    %cst_99 = arith.constant dense<0.000000e+00> : vector<64x128xf32>
    %185 = tpu.matmul %183, %184, %cst_99 {dimension_numbers = #tpu.dot_dimension_numbers<[1], [0], [0], [1], [0, 0, 1, 1], [], []>} : vector<64x256xbf16>, vector<256x128xbf16>, vector<64x128xf32> -> vector<64x128xf32>
    %c0_100 = arith.constant 0 : index
    %c0_101 = arith.constant 0 : index
    %186 = vector.load %arg17[%c0_100, %c0_101] : memref<1x128xf32, #tpu.memory_space<vmem>>, vector<1x128xf32>
    %187 = vector.broadcast %186 : vector<1x128xf32> to vector<64x128xf32>
    %188 = arith.addf %185, %187 : vector<64x128xf32>
    %189 = arith.addf %157, %188 : vector<64x128xf32>
    %c0_102 = arith.constant 0 : index
    %c0_103 = arith.constant 0 : index
    %c0_104 = arith.constant 0 : index
    %190 = vector.load %arg18[%c0_102, %c0_103, %c0_104] : memref<1x64x128xf32, #tpu.memory_space<vmem>>, vector<1x64x128xf32>
    %191 = vector.shape_cast %190 : vector<1x64x128xf32> to vector<64x128xf32>
    %192 = vector.shape_cast %189 : vector<64x128xf32> to vector<1x64x128xf32>
    tpu.vector_store %arg18[%c0_102, %c0_103, %c0_104], %192 {strides = array<i32>} : memref<1x64x128xf32, #tpu.memory_space<vmem>>, vector<1x64x128xf32>,
    return
  }
  func.func @transform_0(%arg0: i32, %arg1: i32) -> (i32, i32, i32) {
    %c0_i32 = arith.constant 0 : i32
    %c0_i32_0 = arith.constant 0 : i32
    return %arg0, %arg1, %c0_i32 : i32, i32, i32
  }
  func.func @transform_1(%arg0: i32, %arg1: i32) -> (i32, i32, i32) {
    %c0_i32 = arith.constant 0 : i32
    %c0_i32_0 = arith.constant 0 : i32
    %c0_i32_1 = arith.constant 0 : i32
    return %arg0, %c0_i32, %c0_i32_0 : i32, i32, i32
  }
  func.func @transform_2(%arg0: i32, %arg1: i32) -> (i32, i32, i32) {
    %c0_i32 = arith.constant 0 : i32
    %c0_i32_0 = arith.constant 0 : i32
    %c0_i32_1 = arith.constant 0 : i32
    return %arg0, %c0_i32, %c0_i32_0 : i32, i32, i32
  }
  func.func @transform_3(%arg0: i32, %arg1: i32) -> (i32, i32, i32) {
    %c0_i32 = arith.constant 0 : i32
    %c0_i32_0 = arith.constant 0 : i32
    %c0_i32_1 = arith.constant 0 : i32
    return %c0_i32, %arg1, %c0_i32_0 : i32, i32, i32
  }
  func.func @transform_4(%arg0: i32, %arg1: i32) -> (i32, i32) {
    %c0_i32 = arith.constant 0 : i32
    %c0_i32_0 = arith.constant 0 : i32
    %c0_i32_1 = arith.constant 0 : i32
    return %c0_i32, %c0_i32_0 : i32, i32
  }
  func.func @transform_5(%arg0: i32, %arg1: i32) -> (i32, i32) {
    %c0_i32 = arith.constant 0 : i32
    %c0_i32_0 = arith.constant 0 : i32
    %c0_i32_1 = arith.constant 0 : i32
    return %c0_i32, %c0_i32_0 : i32, i32
  }
  func.func @transform_6(%arg0: i32, %arg1: i32) -> (i32, i32) {
    %c0_i32 = arith.constant 0 : i32
    %c0_i32_0 = arith.constant 0 : i32
    %c0_i32_1 = arith.constant 0 : i32
    return %c0_i32, %c0_i32_0 : i32, i32
  }
  func.func @transform_7(%arg0: i32, %arg1: i32) -> (i32, i32) {
    %c0_i32 = arith.constant 0 : i32
    %c0_i32_0 = arith.constant 0 : i32
    %c0_i32_1 = arith.constant 0 : i32
    return %c0_i32, %c0_i32_0 : i32, i32
  }
  func.func @transform_8(%arg0: i32, %arg1: i32) -> (i32, i32) {
    %c0_i32 = arith.constant 0 : i32
    %c0_i32_0 = arith.constant 0 : i32
    %c0_i32_1 = arith.constant 0 : i32
    return %c0_i32, %c0_i32_0 : i32, i32
  }
  func.func @transform_9(%arg0: i32, %arg1: i32) -> (i32, i32) {
    %c0_i32 = arith.constant 0 : i32
    %c0_i32_0 = arith.constant 0 : i32
    %c0_i32_1 = arith.constant 0 : i32
    return %c0_i32, %c0_i32_0 : i32, i32
  }
  func.func @transform_10(%arg0: i32, %arg1: i32) -> (i32, i32) {
    %c0_i32 = arith.constant 0 : i32
    %c0_i32_0 = arith.constant 0 : i32
    %c0_i32_1 = arith.constant 0 : i32
    return %c0_i32, %c0_i32_0 : i32, i32
  }
  func.func @transform_11(%arg0: i32, %arg1: i32) -> (i32, i32) {
    %c0_i32 = arith.constant 0 : i32
    %c0_i32_0 = arith.constant 0 : i32
    %c0_i32_1 = arith.constant 0 : i32
    return %c0_i32, %c0_i32_0 : i32, i32
  }
  func.func @transform_12(%arg0: i32, %arg1: i32) -> (i32, i32) {
    %c0_i32 = arith.constant 0 : i32
    %c0_i32_0 = arith.constant 0 : i32
    %c0_i32_1 = arith.constant 0 : i32
    return %c0_i32, %c0_i32_0 : i32, i32
  }
  func.func @transform_13(%arg0: i32, %arg1: i32) -> (i32, i32) {
    %c0_i32 = arith.constant 0 : i32
    %c0_i32_0 = arith.constant 0 : i32
    %c0_i32_1 = arith.constant 0 : i32
    return %c0_i32, %c0_i32_0 : i32, i32
  }
  func.func @transform_14(%arg0: i32, %arg1: i32) -> (i32, i32) {
    %c0_i32 = arith.constant 0 : i32
    %c0_i32_0 = arith.constant 0 : i32
    %c0_i32_1 = arith.constant 0 : i32
    return %c0_i32, %c0_i32_0 : i32, i32
  }
  func.func @transform_15(%arg0: i32, %arg1: i32) -> (i32, i32) {
    %c0_i32 = arith.constant 0 : i32
    %c0_i32_0 = arith.constant 0 : i32
    %c0_i32_1 = arith.constant 0 : i32
    return %c0_i32, %c0_i32_0 : i32, i32
  }
  func.func @transform_16(%arg0: i32, %arg1: i32) -> (i32, i32, i32) {
    %c0_i32 = arith.constant 0 : i32
    %c0_i32_0 = arith.constant 0 : i32
    return %arg0, %arg1, %c0_i32 : i32, i32, i32
  }
}

</mosaic_0001>

<llo_original>
// kernel: tpu_custom_call.1
$region0: #{tpu_custom_call.1}
  #allocation0 [shape = 'u32[]', space=smem, size = 0x4, offset = 0x4, fixed_abs, tag = 'smem constant byte address 0x4 - core index']
  #allocation1 [shape = 'u32[144,128]{1,0:T(1,128)}', space=vmem, size = 0x12000, scoped, tag = 'internal scratch']
  #allocation2 [shape = 'bf16[64,128]{1,0:T(16,128)(2,1)}', space=vmem, size = 0x4000, scoped, tag = 'scratch operand']
  #allocation19 [shape = 's32[]', space=sflag, size = 0x4, offset = 0, fixed_abs, tag = 'sflag constant byte address 0x0 - dummy sync flag']
  %s0 = inlined_call_operand.hbm [shape: f32[2,128,128], index: 0, kind: input, shape index: {}]
  %s1 = inlined_call_operand.hbm [shape: bf16[2,128,128], index: 1, kind: input, shape index: {}]
  %s2 = inlined_call_operand.hbm [shape: bf16[2,128,128], index: 2, kind: input, shape index: {}]
  %s3 = inlined_call_operand.hbm [shape: bf16[4,128,128], index: 3, kind: input, shape index: {}]
  %s4 = inlined_call_operand.vmem [shape: f32[1,128], index: 4, kind: input, shape index: {}]
  %s5 = inlined_call_operand.vmem [shape: f32[1,128], index: 5, kind: input, shape index: {}]
  %s6 = inlined_call_operand.vmem [shape: f32[1,128], index: 6, kind: input, shape index: {}]
  %s7 = inlined_call_operand.vmem [shape: f32[1,128], index: 7, kind: input, shape index: {}]
  %s8 = inlined_call_operand.hbm [shape: bf16[128,128], index: 8, kind: input, shape index: {}]
  %s9 = inlined_call_operand.hbm [shape: bf16[128,128], index: 9, kind: input, shape index: {}]
  %s10 = inlined_call_operand.hbm [shape: bf16[128,256], index: 10, kind: input, shape index: {}]
  %s11 = inlined_call_operand.vmem [shape: f32[1,256], index: 11, kind: input, shape index: {}]
  %s12 = inlined_call_operand.hbm [shape: bf16[128,256], index: 12, kind: input, shape index: {}]
  %s13 = inlined_call_operand.vmem [shape: f32[1,256], index: 13, kind: input, shape index: {}]
  %s14 = inlined_call_operand.hbm [shape: bf16[256,128], index: 14, kind: input, shape index: {}]
  %s15 = inlined_call_operand.vmem [shape: f32[1,128], index: 15, kind: input, shape index: {}]
  %s16 = inlined_call_operand.hbm [shape: f32[2,128,128], index: 16, kind: output, shape index: {}]
  %s17 = sld [smem:[#allocation0]]
  $region133: #{tpu_custom_call.1} parent=0
    _
  %s19 = ssub.s32 1, %s17
  %s20 = scalar_select 0, %s19, %s17
  $region1: #{tpu_custom_call.1} parent=0
    #allocation3 [shape = 'u8[65536]{0}', space=vmem, size = 0x10000, scoped, tag = 'input window, operand 0']
    #allocation4 [shape = 's32[2]{0}', space=sflag, size = 0x8, scoped, tag = 'scoped memory for tpu_custom_call.1']
    #allocation5 [shape = 's32[2]{0}', space=sflag, size = 0x8, scoped, tag = 'scoped memory for tpu_custom_call.1']
    #allocation6 [shape = 'u8[32768]{0}', space=vmem, size = 0x8000, scoped, tag = 'input window, operand 1, single buffered']
    #allocation7 [shape = 's32[1]{0}', space=sflag, size = 0x4, scoped, tag = 'scoped memory for tpu_custom_call.1']
    #allocation8 [shape = 'u8[32768]{0}', space=vmem, size = 0x8000, scoped, tag = 'input window, operand 2, single buffered']
    #allocation9 [shape = 'u8[131072]{0}', space=vmem, size = 0x20000, scoped, tag = 'input window, operand 3']
    #allocation10 [shape = 's32[2]{0}', space=sflag, size = 0x8, scoped, tag = 'scoped memory for tpu_custom_call.1']
    #allocation11 [shape = 'u8[32768]{0}', space=vmem, size = 0x8000, scoped, tag = 'input window, operand 8, single buffered']
    #allocation12 [shape = 'u8[32768]{0}', space=vmem, size = 0x8000, scoped, tag = 'input window, operand 9, single buffered']
    #allocation13 [shape = 's32[1]{0}', space=sflag, size = 0x4, scoped, tag = 'scoped memory for tpu_custom_call.1']
    #allocation14 [shape = 'u8[65536]{0}', space=vmem, size = 0x10000, scoped, tag = 'input window, operand 10, single buffered']
    #allocation15 [shape = 'u8[65536]{0}', space=vmem, size = 0x10000, scoped, tag = 'input window, operand 12, single buffered']
    #allocation16 [shape = 's32[1]{0}', space=sflag, size = 0x4, scoped, tag = 'scoped memory for tpu_custom_call.1']
    #allocation17 [shape = 'u8[65536]{0}', space=vmem, size = 0x10000, scoped, tag = 'input window, operand 14, single buffered']
    #allocation18 [shape = 'u8[65536]{0}', space=vmem, size = 0x10000, scoped, tag = 'output window, operand 0']
    %21 = vsyncpa [#allocation4], 0
    %s22 = scalar_lea.sflag [#allocation4], 1
    %23 = vsyncpa %s22, 0
    %24 = vsyncpa [#allocation7], 0
    %25 = vsyncpa [#allocation10], 0
    %s26 = scalar_lea.sflag [#allocation10], 1
    %27 = vsyncpa %s26, 0
    %28 = vsyncpa [#allocation13], 0
    %29 = vsyncpa [#allocation16], 0
    %30 = vsyncpa [#allocation5], 0
    %s31 = scalar_lea.sflag [#allocation5], 1
    %32 = vsyncpa %s31, 0
    loop: start=0, step=1, limit=6
    $region2: #{tpu_custom_call.1} parent=1 // loop_pre_header
      _
    $region3: #{tpu_custom_call.1} parent=1 // loop_header
      %s34 = sphi 0, %s38
      %p35 = scmp.ge.s32.totalorder %s34, 6
      %s41 = sphi 0, %s53
      %s42 = sphi 0, %s49
      %s43 = sphi 0, %s41
      %s44 = sphi 0, %s42
      %s45 = sphi 0, %s43
      %s46 = sphi 0, %s44
      %s58 = sphi 0, %s60
      %s61 = sphi 0, %s58
      %s62 = sphi 0, %s61
      %s78 = sphi 0, %s62
      %s84 = sphi 0, %s86
      %s87 = sphi 0, %s84
      %s88 = sphi 0, %s87
      %s104 = sphi 0, %s88
      %s110 = sphi 0, %s112
      %s113 = sphi 0, %s110
      %s114 = sphi 0, %s113
      %s130 = sphi 0, %s114
      %s136 = sphi 0, %s138
      %s139 = sphi 0, %s136
      %s140 = sphi 0, %s139
      %s156 = sphi 0, %s140
      %s160 = sphi 0, %s160
      %s162 = sphi 0, %s160
      %s163 = sphi 0, %s162
      %s177 = sphi 0, %s163
      %s181 = sphi 0, %s181
      %s183 = sphi 0, %s181
      %s184 = sphi 0, %s183
      %s198 = sphi 0, %s184
      %s202 = sphi 0, %s202
      %s204 = sphi 0, %s202
      %s205 = sphi 0, %s204
      %s219 = sphi 0, %s205
      %s223 = sphi 0, %s223
      %s225 = sphi 0, %s223
      %s226 = sphi 0, %s225
      %s240 = sphi 0, %s226
      %s244 = sphi 0, %s244
      %s246 = sphi 0, %s244
      %s247 = sphi 0, %s246
      %s261 = sphi 0, %s247
      %s265 = sphi 0, %s265
      %s267 = sphi 0, %s265
      %s268 = sphi 0, %s267
      %s282 = sphi 0, %s268
      %s286 = sphi 0, %s286
      %s288 = sphi 0, %s286
      %s289 = sphi 0, %s288
      %s303 = sphi 0, %s289
      %s307 = sphi 0, %s307
      %s309 = sphi 0, %s307
      %s310 = sphi 0, %s309
      %s324 = sphi 0, %s310
      %s328 = sphi 0, %s328
      %s330 = sphi 0, %s328
      %s331 = sphi 0, %s330
      %s345 = sphi 0, %s331
      %s349 = sphi 0, %s349
      %s351 = sphi 0, %s349
      %s352 = sphi 0, %s351
      %s366 = sphi 0, %s352
      %s370 = sphi 0, %s370
      %s372 = sphi 0, %s370
      %s373 = sphi 0, %s372
      %s387 = sphi 0, %s373
      %s391 = sphi 0, %s391
      %s393 = sphi 0, %s391
      %s394 = sphi 0, %s393
      %s408 = sphi 0, %s394
      %s416 = sphi 0, %s418
      %s419 = sphi 0, %s416
      %s420 = sphi 0, %s419
      %s436 = sphi 0, %s420
    $region4: #{tpu_custom_call.1} parent=1 // loop_header_branch
      %37 = sbr.rel (%p35) target = $region8
    $region5: #{tpu_custom_call.1} parent=1 // loop_body
      %s39 = ssub.s32 %s34, 1
      %s40 = ssub.s32 %s34, 2
      %s47 = sadd.s32 1, %s42
      %p48 = scmp.ge.s32.totalorder %s47, 2
      %s49 = scalar_select %p48, 0, %s47
      %s50 = sadd.s32 1, %s41
      %s51 = scalar_select %p48, %s50, %s41
      %p52 = scmp.ge.s32.totalorder %s51, 2
      %s53 = scalar_select %p52, 0, %s51
      %s54 = ssub.s32 %s41, %s53
      %s55 = ssub.s32 %s42, %s49
      %s56 = sor.u32 %s54, %s55
      %p57 = scmp.eq.s32.totalorder %s56, 0
      %s59 = sadd.s32 %s58, 1
      %s60 = scalar_select %p57, %s58, %s59
      %p63 = pneg %p57
      %p64 = scmp.eq.s32.totalorder %s34, 3
      %p65 = por %p63, %p64
      %p66 = scmp.ne.s32.totalorder %s58, %s61
      %p67 = scmp.eq.s32.totalorder %s34, 0
      %p68 = por %p66, %p67
      %p69 = scmp.ne.s32.totalorder %s58, %s61
      %p70 = scmp.eq.s32.totalorder %s39, 3
      %p71 = por %p69, %p70
      %p72 = scmp.ne.s32.totalorder %s61, %s62
      %p73 = scmp.eq.s32.totalorder %s39, 0
      %p74 = por %p72, %p73
      %p75 = scmp.ne.s32.totalorder %s61, %s62
      %p76 = scmp.eq.s32.totalorder %s40, 3
      %p77 = por %p75, %p76
      %p79 = scmp.ne.s32.totalorder %s62, %s78
      %p80 = scmp.eq.s32.totalorder %s40, 0
      %p81 = por %p79, %p80
      %s82 = ssub.s32 %s41, %s53
      %p83 = scmp.eq.s32.totalorder %s82, 0
      %s85 = sadd.s32 %s84, 1
      %s86 = scalar_select %p83, %s84, %s85
      %p89 = pneg %p83
      %p90 = scmp.eq.s32.totalorder %s34, 3
      %p91 = por %p89, %p90
      %p92 = scmp.ne.s32.totalorder %s84, %s87
      %p93 = scmp.eq.s32.totalorder %s34, 0
      %p94 = por %p92, %p93
      %p95 = scmp.ne.s32.totalorder %s84, %s87
      %p96 = scmp.eq.s32.totalorder %s39, 3
      %p97 = por %p95, %p96
      %p98 = scmp.ne.s32.totalorder %s87, %s88
      %p99 = scmp.eq.s32.totalorder %s39, 0
      %p100 = por %p98, %p99
      %p101 = scmp.ne.s32.totalorder %s87, %s88
      %p102 = scmp.eq.s32.totalorder %s40, 3
      %p103 = por %p101, %p102
      %p105 = scmp.ne.s32.totalorder %s88, %s104
      %p106 = scmp.eq.s32.totalorder %s40, 0
      %p107 = por %p105, %p106
      %s108 = ssub.s32 %s41, %s53
      %p109 = scmp.eq.s32.totalorder %s108, 0
      %s111 = sadd.s32 %s110, 1
      %s112 = scalar_select %p109, %s110, %s111
      %p115 = pneg %p109
      %p116 = scmp.eq.s32.totalorder %s34, 3
      %p117 = por %p115, %p116
      %p118 = scmp.ne.s32.totalorder %s110, %s113
      %p119 = scmp.eq.s32.totalorder %s34, 0
      %p120 = por %p118, %p119
      %p121 = scmp.ne.s32.totalorder %s110, %s113
      %p122 = scmp.eq.s32.totalorder %s39, 3
      %p123 = por %p121, %p122
      %p124 = scmp.ne.s32.totalorder %s113, %s114
      %p125 = scmp.eq.s32.totalorder %s39, 0
      %p126 = por %p124, %p125
      %p127 = scmp.ne.s32.totalorder %s113, %s114
      %p128 = scmp.eq.s32.totalorder %s40, 3
      %p129 = por %p127, %p128
      %p131 = scmp.ne.s32.totalorder %s114, %s130
      %p132 = scmp.eq.s32.totalorder %s40, 0
      %p133 = por %p131, %p132
      %s134 = ssub.s32 %s42, %s49
      %p135 = scmp.eq.s32.totalorder %s134, 0
      %s137 = sadd.s32 %s136, 1
      %s138 = scalar_select %p135, %s136, %s137
      %p141 = pneg %p135
      %p142 = scmp.eq.s32.totalorder %s34, 3
      %p143 = por %p141, %p142
      %p144 = scmp.ne.s32.totalorder %s136, %s139
      %p145 = scmp.eq.s32.totalorder %s34, 0
      %p146 = por %p144, %p145
      %p147 = scmp.ne.s32.totalorder %s136, %s139
      %p148 = scmp.eq.s32.totalorder %s39, 3
      %p149 = por %p147, %p148
      %p150 = scmp.ne.s32.totalorder %s139, %s140
      %p151 = scmp.eq.s32.totalorder %s39, 0
      %p152 = por %p150, %p151
      %p153 = scmp.ne.s32.totalorder %s139, %s140
      %p154 = scmp.eq.s32.totalorder %s40, 3
      %p155 = por %p153, %p154
      %p157 = scmp.ne.s32.totalorder %s140, %s156
      %p158 = scmp.eq.s32.totalorder %s40, 0
      %p159 = por %p157, %p158
      %s161 = sadd.s32 %s160, 1
      %p164 = scmp.eq.s32.totalorder %s34, 3
      %p165 = scmp.ne.s32.totalorder %s160, %s162
      %p166 = scmp.eq.s32.totalorder %s34, 0
      %p167 = por %p165, %p166
      %p168 = scmp.ne.s32.totalorder %s160, %s162
      %p169 = scmp.eq.s32.totalorder %s39, 3
      %p170 = por %p168, %p169
      %p171 = scmp.ne.s32.totalorder %s162, %s163
      %p172 = scmp.eq.s32.totalorder %s39, 0
      %p173 = por %p171, %p172
      %p174 = scmp.ne.s32.totalorder %s162, %s163
      %p175 = scmp.eq.s32.totalorder %s40, 3
      %p176 = por %p174, %p175
      %p178 = scmp.ne.s32.totalorder %s163, %s177
      %p179 = scmp.eq.s32.totalorder %s40, 0
      %p180 = por %p178, %p179
      %s182 = sadd.s32 %s181, 1
      %p185 = scmp.eq.s32.totalorder %s34, 3
      %p186 = scmp.ne.s32.totalorder %s181, %s183
      %p187 = scmp.eq.s32.totalorder %s34, 0
      %p188 = por %p186, %p187
      %p189 = scmp.ne.s32.totalorder %s181, %s183
      %p190 = scmp.eq.s32.totalorder %s39, 3
      %p191 = por %p189, %p190
      %p192 = scmp.ne.s32.totalorder %s183, %s184
      %p193 = scmp.eq.s32.totalorder %s39, 0
      %p194 = por %p192, %p193
      %p195 = scmp.ne.s32.totalorder %s183, %s184
      %p196 = scmp.eq.s32.totalorder %s40, 3
      %p197 = por %p195, %p196
      %p199 = scmp.ne.s32.totalorder %s184, %s198
      %p200 = scmp.eq.s32.totalorder %s40, 0
      %p201 = por %p199, %p200
      %s203 = sadd.s32 %s202, 1
      %p206 = scmp.eq.s32.totalorder %s34, 3
      %p207 = scmp.ne.s32.totalorder %s202, %s204
      %p208 = scmp.eq.s32.totalorder %s34, 0
      %p209 = por %p207, %p208
      %p210 = scmp.ne.s32.totalorder %s202, %s204
      %p211 = scmp.eq.s32.totalorder %s39, 3
      %p212 = por %p210, %p211
      %p213 = scmp.ne.s32.totalorder %s204, %s205
      %p214 = scmp.eq.s32.totalorder %s39, 0
      %p215 = por %p213, %p214
      %p216 = scmp.ne.s32.totalorder %s204, %s205
      %p217 = scmp.eq.s32.totalorder %s40, 3
      %p218 = por %p216, %p217
      %p220 = scmp.ne.s32.totalorder %s205, %s219
      %p221 = scmp.eq.s32.totalorder %s40, 0
      %p222 = por %p220, %p221
      %s224 = sadd.s32 %s223, 1
      %p227 = scmp.eq.s32.totalorder %s34, 3
      %p228 = scmp.ne.s32.totalorder %s223, %s225
      %p229 = scmp.eq.s32.totalorder %s34, 0
      %p230 = por %p228, %p229
      %p231 = scmp.ne.s32.totalorder %s223, %s225
      %p232 = scmp.eq.s32.totalorder %s39, 3
      %p233 = por %p231, %p232
      %p234 = scmp.ne.s32.totalorder %s225, %s226
      %p235 = scmp.eq.s32.totalorder %s39, 0
      %p236 = por %p234, %p235
      %p237 = scmp.ne.s32.totalorder %s225, %s226
      %p238 = scmp.eq.s32.totalorder %s40, 3
      %p239 = por %p237, %p238
      %p241 = scmp.ne.s32.totalorder %s226, %s240
      %p242 = scmp.eq.s32.totalorder %s40, 0
      %p243 = por %p241, %p242
      %s245 = sadd.s32 %s244, 1
      %p248 = scmp.eq.s32.totalorder %s34, 3
      %p249 = scmp.ne.s32.totalorder %s244, %s246
      %p250 = scmp.eq.s32.totalorder %s34, 0
      %p251 = por %p249, %p250
      %p252 = scmp.ne.s32.totalorder %s244, %s246
      %p253 = scmp.eq.s32.totalorder %s39, 3
      %p254 = por %p252, %p253
      %p255 = scmp.ne.s32.totalorder %s246, %s247
      %p256 = scmp.eq.s32.totalorder %s39, 0
      %p257 = por %p255, %p256
      %p258 = scmp.ne.s32.totalorder %s246, %s247
      %p259 = scmp.eq.s32.totalorder %s40, 3
      %p260 = por %p258, %p259
      %p262 = scmp.ne.s32.totalorder %s247, %s261
      %p263 = scmp.eq.s32.totalorder %s40, 0
      %p264 = por %p262, %p263
      %s266 = sadd.s32 %s265, 1
      %p269 = scmp.eq.s32.totalorder %s34, 3
      %p270 = scmp.ne.s32.totalorder %s265, %s267
      %p271 = scmp.eq.s32.totalorder %s34, 0
      %p272 = por %p270, %p271
      %p273 = scmp.ne.s32.totalorder %s265, %s267
      %p274 = scmp.eq.s32.totalorder %s39, 3
      %p275 = por %p273, %p274
      %p276 = scmp.ne.s32.totalorder %s267, %s268
      %p277 = scmp.eq.s32.totalorder %s39, 0
      %p278 = por %p276, %p277
      %p279 = scmp.ne.s32.totalorder %s267, %s268
      %p280 = scmp.eq.s32.totalorder %s40, 3
      %p281 = por %p279, %p280
      %p283 = scmp.ne.s32.totalorder %s268, %s282
      %p284 = scmp.eq.s32.totalorder %s40, 0
      %p285 = por %p283, %p284
      %s287 = sadd.s32 %s286, 1
      %p290 = scmp.eq.s32.totalorder %s34, 3
      %p291 = scmp.ne.s32.totalorder %s286, %s288
      %p292 = scmp.eq.s32.totalorder %s34, 0
      %p293 = por %p291, %p292
      %p294 = scmp.ne.s32.totalorder %s286, %s288
      %p295 = scmp.eq.s32.totalorder %s39, 3
      %p296 = por %p294, %p295
      %p297 = scmp.ne.s32.totalorder %s288, %s289
      %p298 = scmp.eq.s32.totalorder %s39, 0
      %p299 = por %p297, %p298
      %p300 = scmp.ne.s32.totalorder %s288, %s289
      %p301 = scmp.eq.s32.totalorder %s40, 3
      %p302 = por %p300, %p301
      %p304 = scmp.ne.s32.totalorder %s289, %s303
      %p305 = scmp.eq.s32.totalorder %s40, 0
      %p306 = por %p304, %p305
      %s308 = sadd.s32 %s307, 1
      %p311 = scmp.eq.s32.totalorder %s34, 3
      %p312 = scmp.ne.s32.totalorder %s307, %s309
      %p313 = scmp.eq.s32.totalorder %s34, 0
      %p314 = por %p312, %p313
      %p315 = scmp.ne.s32.totalorder %s307, %s309
      %p316 = scmp.eq.s32.totalorder %s39, 3
      %p317 = por %p315, %p316
      %p318 = scmp.ne.s32.totalorder %s309, %s310
      %p319 = scmp.eq.s32.totalorder %s39, 0
      %p320 = por %p318, %p319
      %p321 = scmp.ne.s32.totalorder %s309, %s310
      %p322 = scmp.eq.s32.totalorder %s40, 3
      %p323 = por %p321, %p322
      %p325 = scmp.ne.s32.totalorder %s310, %s324
      %p326 = scmp.eq.s32.totalorder %s40, 0
      %p327 = por %p325, %p326
      %s329 = sadd.s32 %s328, 1
      %p332 = scmp.eq.s32.totalorder %s34, 3
      %p333 = scmp.ne.s32.totalorder %s328, %s330
      %p334 = scmp.eq.s32.totalorder %s34, 0
      %p335 = por %p333, %p334
      %p336 = scmp.ne.s32.totalorder %s328, %s330
      %p337 = scmp.eq.s32.totalorder %s39, 3
      %p338 = por %p336, %p337
      %p339 = scmp.ne.s32.totalorder %s330, %s331
      %p340 = scmp.eq.s32.totalorder %s39, 0
      %p341 = por %p339, %p340
      %p342 = scmp.ne.s32.totalorder %s330, %s331
      %p343 = scmp.eq.s32.totalorder %s40, 3
      %p344 = por %p342, %p343
      %p346 = scmp.ne.s32.totalorder %s331, %s345
      %p347 = scmp.eq.s32.totalorder %s40, 0
      %p348 = por %p346, %p347
      %s350 = sadd.s32 %s349, 1
      %p353 = scmp.eq.s32.totalorder %s34, 3
      %p354 = scmp.ne.s32.totalorder %s349, %s351
      %p355 = scmp.eq.s32.totalorder %s34, 0
      %p356 = por %p354, %p355
      %p357 = scmp.ne.s32.totalorder %s349, %s351
      %p358 = scmp.eq.s32.totalorder %s39, 3
      %p359 = por %p357, %p358
      %p360 = scmp.ne.s32.totalorder %s351, %s352
      %p361 = scmp.eq.s32.totalorder %s39, 0
      %p362 = por %p360, %p361
      %p363 = scmp.ne.s32.totalorder %s351, %s352
      %p364 = scmp.eq.s32.totalorder %s40, 3
      %p365 = por %p363, %p364
      %p367 = scmp.ne.s32.totalorder %s352, %s366
      %p368 = scmp.eq.s32.totalorder %s40, 0
      %p369 = por %p367, %p368
      %s371 = sadd.s32 %s370, 1
      %p374 = scmp.eq.s32.totalorder %s34, 3
      %p375 = scmp.ne.s32.totalorder %s370, %s372
      %p376 = scmp.eq.s32.totalorder %s34, 0
      %p377 = por %p375, %p376
      %p378 = scmp.ne.s32.totalorder %s370, %s372
      %p379 = scmp.eq.s32.totalorder %s39, 3
      %p380 = por %p378, %p379
      %p381 = scmp.ne.s32.totalorder %s372, %s373
      %p382 = scmp.eq.s32.totalorder %s39, 0
      %p383 = por %p381, %p382
      %p384 = scmp.ne.s32.totalorder %s372, %s373
      %p385 = scmp.eq.s32.totalorder %s40, 3
      %p386 = por %p384, %p385
      %p388 = scmp.ne.s32.totalorder %s373, %s387
      %p389 = scmp.eq.s32.totalorder %s40, 0
      %p390 = por %p388, %p389
      %s392 = sadd.s32 %s391, 1
      %p395 = scmp.eq.s32.totalorder %s34, 3
      %p396 = scmp.ne.s32.totalorder %s391, %s393
      %p397 = scmp.eq.s32.totalorder %s34, 0
      %p398 = por %p396, %p397
      %p399 = scmp.ne.s32.totalorder %s391, %s393
      %p400 = scmp.eq.s32.totalorder %s39, 3
      %p401 = por %p399, %p400
      %p402 = scmp.ne.s32.totalorder %s393, %s394
      %p403 = scmp.eq.s32.totalorder %s39, 0
      %p404 = por %p402, %p403
      %p405 = scmp.ne.s32.totalorder %s393, %s394
      %p406 = scmp.eq.s32.totalorder %s40, 3
      %p407 = por %p405, %p406
      %p409 = scmp.ne.s32.totalorder %s394, %s408
      %p410 = scmp.eq.s32.totalorder %s40, 0
      %p411 = por %p409, %p410
      %s412 = ssub.s32 %s41, %s53
      %s413 = ssub.s32 %s42, %s49
      %s414 = sor.u32 %s412, %s413
      %p415 = scmp.eq.s32.totalorder %s414, 0
      %s417 = sadd.s32 %s416, 1
      %s418 = scalar_select %p415, %s416, %s417
      %p421 = pneg %p415
      %p422 = scmp.eq.s32.totalorder %s34, 3
      %p423 = por %p421, %p422
      %p424 = scmp.ne.s32.totalorder %s416, %s419
      %p425 = scmp.eq.s32.totalorder %s34, 0
      %p426 = por %p424, %p425
      %p427 = scmp.ne.s32.totalorder %s416, %s419
      %p428 = scmp.eq.s32.totalorder %s39, 3
      %p429 = por %p427, %p428
      %p430 = scmp.ne.s32.totalorder %s419, %s420
      %p431 = scmp.eq.s32.totalorder %s39, 0
      %p432 = por %p430, %p431
      %p433 = scmp.ne.s32.totalorder %s419, %s420
      %p434 = scmp.eq.s32.totalorder %s40, 3
      %p435 = por %p433, %p434
      %p437 = scmp.ne.s32.totalorder %s420, %s436
      %p438 = scmp.eq.s32.totalorder %s40, 0
      %p439 = por %p437, %p438
      %p440 = scmp.le.s32.totalorder 1, %s34
      %p441 = scmp.lt.s32.totalorder %s34, 5
      %p442 = pnand %p440, %p441
      %p443 = pneg %p442
      // Predicated region
      $region9: #{tpu_custom_call.1} parent=5 // pred_check
        _
      $region10: #{tpu_custom_call.1} parent=5 // pred_check_branch
        %445 = sbr.rel (%p442) target = $region12
      $region11: #{tpu_custom_call.1} parent=5 // pred_region
        %s446 = ssub.s32 %s34, 1
        // Predicated region
        $region13: #{tpu_custom_call.1} parent=11 // pred_check
          %p447 = pneg %p100
        $region14: #{tpu_custom_call.1} parent=11 // pred_check_branch
          %449 = sbr.rel (%p447) target = $region16
        $region15: #{tpu_custom_call.1} parent=11 // pred_region
          %s451 = ssub.s32 1024, 1024
          %452 = vsyncadd [#allocation7], %s451
          %s453 = smul.addr %s43, 16
          %s454 = smul.addr %s453, 64
          %s455 = scalar_lea.hbm %s1, %s454
          %s456 = sshll.u32 [#allocation6], 4
          %s457 = int_to_ptr.vmem [resolvable:$true] %s456
          %462 = dma.hbm_to_vmem [thread:$0]  %s455, 1024, %s457, [#allocation7], 64, 64, 4
        $region16: #{tpu_custom_call.1} parent=11 // pred_fallthru
          _
        // Predicated region
        $region17: #{tpu_custom_call.1} parent=11 // pred_check
          %p463 = pneg %p126
        $region18: #{tpu_custom_call.1} parent=11 // pred_check_branch
          %465 = sbr.rel (%p463) target = $region20
        $region19: #{tpu_custom_call.1} parent=11 // pred_region
          %s467 = ssub.s32 1024, 1024
          %468 = vsyncadd [#allocation7], %s467
          %s469 = smul.addr %s43, 16
          %s470 = smul.addr %s469, 64
          %s471 = scalar_lea.hbm %s2, %s470
          %s472 = sshll.u32 [#allocation8], 4
          %s473 = int_to_ptr.vmem [resolvable:$true] %s472
          %478 = dma.hbm_to_vmem [thread:$0]  %s471, 1024, %s473, [#allocation7], 64, 64, 4
        $region20: #{tpu_custom_call.1} parent=11 // pred_fallthru
          _
        // Predicated region
        $region21: #{tpu_custom_call.1} parent=11 // pred_check
          %p479 = pneg %p173
        $region22: #{tpu_custom_call.1} parent=11 // pred_check_branch
          %481 = sbr.rel (%p479) target = $region24
        $region23: #{tpu_custom_call.1} parent=11 // pred_region
          _
        $region24: #{tpu_custom_call.1} parent=11 // pred_fallthru
          _
        // Predicated region
        $region25: #{tpu_custom_call.1} parent=11 // pred_check
          %p482 = pneg %p194
        $region26: #{tpu_custom_call.1} parent=11 // pred_check_branch
          %484 = sbr.rel (%p482) target = $region28
        $region27: #{tpu_custom_call.1} parent=11 // pred_region
          _
        $region28: #{tpu_custom_call.1} parent=11 // pred_fallthru
          _
        // Predicated region
        $region29: #{tpu_custom_call.1} parent=11 // pred_check
          %p485 = pneg %p215
        $region30: #{tpu_custom_call.1} parent=11 // pred_check_branch
          %487 = sbr.rel (%p485) target = $region32
        $region31: #{tpu_custom_call.1} parent=11 // pred_region
          _
        $region32: #{tpu_custom_call.1} parent=11 // pred_fallthru
          _
        // Predicated region
        $region33: #{tpu_custom_call.1} parent=11 // pred_check
          %p488 = pneg %p236
        $region34: #{tpu_custom_call.1} parent=11 // pred_check_branch
          %490 = sbr.rel (%p488) target = $region36
        $region35: #{tpu_custom_call.1} parent=11 // pred_region
          _
        $region36: #{tpu_custom_call.1} parent=11 // pred_fallthru
          _
        // Predicated region
        $region37: #{tpu_custom_call.1} parent=11 // pred_check
          %p491 = pneg %p257
        $region38: #{tpu_custom_call.1} parent=11 // pred_check_branch
          %493 = sbr.rel (%p491) target = $region40
        $region39: #{tpu_custom_call.1} parent=11 // pred_region
          %s495 = ssub.s32 1024, 1024
          %496 = vsyncadd [#allocation10], %s495
          %s497 = sshll.u32 [#allocation11], 4
          %s498 = int_to_ptr.vmem [resolvable:$true] %s497
          %503 = dma.hbm_to_vmem [thread:$0]  %s8, 1024, %s498, [#allocation10], 64, 64, 4
        $region40: #{tpu_custom_call.1} parent=11 // pred_fallthru
          _
        // Predicated region
        $region41: #{tpu_custom_call.1} parent=11 // pred_check
          %p504 = pneg %p278
        $region42: #{tpu_custom_call.1} parent=11 // pred_check_branch
          %506 = sbr.rel (%p504) target = $region44
        $region43: #{tpu_custom_call.1} parent=11 // pred_region
          %s508 = ssub.s32 1024, 1024
          %509 = vsyncadd [#allocation13], %s508
          %s510 = sshll.u32 [#allocation12], 4
          %s511 = int_to_ptr.vmem [resolvable:$true] %s510
          %516 = dma.hbm_to_vmem [thread:$0]  %s9, 1024, %s511, [#allocation13], 64, 64, 4
        $region44: #{tpu_custom_call.1} parent=11 // pred_fallthru
          _
        // Predicated region
        $region45: #{tpu_custom_call.1} parent=11 // pred_check
          %p517 = pneg %p299
        $region46: #{tpu_custom_call.1} parent=11 // pred_check_branch
          %519 = sbr.rel (%p517) target = $region48
        $region47: #{tpu_custom_call.1} parent=11 // pred_region
          %s521 = ssub.s32 2048, 2048
          %522 = vsyncadd [#allocation13], %s521
          %s523 = sshll.u32 [#allocation14], 4
          %s524 = int_to_ptr.vmem [resolvable:$true] %s523
          %529 = dma.hbm_to_vmem [thread:$0]  %s10, 2048, %s524, [#allocation13], 128, 128, 8
        $region48: #{tpu_custom_call.1} parent=11 // pred_fallthru
          _
        // Predicated region
        $region49: #{tpu_custom_call.1} parent=11 // pred_check
          %p530 = pneg %p320
        $region50: #{tpu_custom_call.1} parent=11 // pred_check_branch
          %532 = sbr.rel (%p530) target = $region52
        $region51: #{tpu_custom_call.1} parent=11 // pred_region
          _
        $region52: #{tpu_custom_call.1} parent=11 // pred_fallthru
          _
        // Predicated region
        $region53: #{tpu_custom_call.1} parent=11 // pred_check
          %p533 = pneg %p341
        $region54: #{tpu_custom_call.1} parent=11 // pred_check_branch
          %535 = sbr.rel (%p533) target = $region56
        $region55: #{tpu_custom_call.1} parent=11 // pred_region
          %s537 = ssub.s32 2048, 2048
          %538 = vsyncadd [#allocation16], %s537
          %s539 = sshll.u32 [#allocation15], 4
          %s540 = int_to_ptr.vmem [resolvable:$true] %s539
          %545 = dma.hbm_to_vmem [thread:$0]  %s12, 2048, %s540, [#allocation16], 128, 128, 8
        $region56: #{tpu_custom_call.1} parent=11 // pred_fallthru
          _
        // Predicated region
        $region57: #{tpu_custom_call.1} parent=11 // pred_check
          %p546 = pneg %p362
        $region58: #{tpu_custom_call.1} parent=11 // pred_check_branch
          %548 = sbr.rel (%p546) target = $region60
        $region59: #{tpu_custom_call.1} parent=11 // pred_region
          _
        $region60: #{tpu_custom_call.1} parent=11 // pred_fallthru
          _
        // Predicated region
        $region61: #{tpu_custom_call.1} parent=11 // pred_check
          %p549 = pneg %p383
        $region62: #{tpu_custom_call.1} parent=11 // pred_check_branch
          %551 = sbr.rel (%p549) target = $region64
        $region63: #{tpu_custom_call.1} parent=11 // pred_region
          %s553 = ssub.s32 2048, 2048
          %554 = vsyncadd [#allocation16], %s553
          %s555 = sshll.u32 [#allocation17], 4
          %s556 = int_to_ptr.vmem [resolvable:$true] %s555
          %561 = dma.hbm_to_vmem [thread:$0]  %s14, 2048, %s556, [#allocation16], 64, 64, 4
        $region64: #{tpu_custom_call.1} parent=11 // pred_fallthru
          _
        // Predicated region
        $region65: #{tpu_custom_call.1} parent=11 // pred_check
          %p562 = pneg %p404
        $region66: #{tpu_custom_call.1} parent=11 // pred_check_branch
          %564 = sbr.rel (%p562) target = $region68
        $region67: #{tpu_custom_call.1} parent=11 // pred_region
          _
        $region68: #{tpu_custom_call.1} parent=11 // pred_fallthru
          _
      $region12: #{tpu_custom_call.1} parent=5 // pred_fallthru
        _
      %p565 = scmp.lt.s32.totalorder %s34, 4
      // Predicated region
      $region69: #{tpu_custom_call.1} parent=5 // pred_check
        %p566 = pneg %p565
      $region70: #{tpu_custom_call.1} parent=5 // pred_check_branch
        %568 = sbr.rel (%p566) target = $region72
      $region71: #{tpu_custom_call.1} parent=5 // pred_region
        // Predicated region
        $region73: #{tpu_custom_call.1} parent=71 // pred_check
          %p569 = pneg %p68
        $region74: #{tpu_custom_call.1} parent=71 // pred_check_branch
          %571 = sbr.rel (%p569) target = $region76
        $region75: #{tpu_custom_call.1} parent=71 // pred_region
          %s572 = sand.u32 %s58, 1
          %s573 = scalar_lea.sflag [#allocation4], %s572
          %s574 = sand.u32 %s58, 1
          %s575 = smul.addr %s574, 64
          %s576 = scalar_lea.vmem [#allocation3], %s575
          %s577 = smul.u32 8, %s42
          %s579 = ssub.s32 1024, 1024
          %580 = vsyncadd %s573, %s579
          %s581 = smul.addr %s41, 16
          %s582 = sadd.s32 %s577, %s581
          %s583 = smul.addr %s582, 128
          %s584 = scalar_lea.hbm %s0, %s583
          %s585 = sshll.u32 %s576, 4
          %s586 = int_to_ptr.vmem [resolvable:$true] %s585
          %591 = dma.hbm_to_vmem [thread:$0]  %s584, 1024, %s586, %s573, 128, 128, 8
        $region76: #{tpu_custom_call.1} parent=71 // pred_fallthru
          _
        // Predicated region
        $region77: #{tpu_custom_call.1} parent=71 // pred_check
          %p592 = pneg %p146
        $region78: #{tpu_custom_call.1} parent=71 // pred_check_branch
          %594 = sbr.rel (%p592) target = $region80
        $region79: #{tpu_custom_call.1} parent=71 // pred_region
          #allocation20 [shape = 'u32[6]{0}', space=smem, size = 0x18, scoped, tag = 'DMA stride descriptor']
          %s595 = sand.u32 %s34, 1
          %s596 = scalar_lea.sflag [#allocation10], %s595
          %s597 = sand.u32 %s136, 1
          %s598 = smul.addr %s597, 128
          %s599 = scalar_lea.vmem [#allocation9], %s598
          %s600 = smul.u32 8, %s42
          %s602 = ssub.s32 2048, 2048
          %603 = vsyncadd %s596, %s602
          %s604 = smul.addr %s600, 64
          %s605 = scalar_lea.hbm %s3, %s604
          %s607 = sshll.u32 1, 14
          %s608 = sxor.u32 4294967295, %s607
          %s610 = sld [smem:[#allocation0]]
          %s611 = sadd.s32 2, %s610
          %s613 = sshll.u32 7, 26
          %s614 = sxor.u32 4294967295, %s613
          %s615 = sand.u32 0, %s614
          %s616 = sshll.u32 %s611, 26
          %s617 = sor.u32 %s615, %s616
          %s618 = sshll.u32 %s599, 4
          %s619 = int_to_ptr.vmem [resolvable:$true] %s618
          %625 = sst [smem:[#allocation20]] 1024
          %s626 = scalar_lea.smem [#allocation20], 1
          %627 = sst [smem:[%s626]] 512
          %s628 = scalar_lea.smem [#allocation20], 2
          %629 = sst [smem:[%s628]] 8
          %s630 = scalar_lea.smem [#allocation20], 3
          %631 = sst [smem:[%s630]] 64
          %s632 = scalar_lea.smem [#allocation20], 4
          %633 = sst [smem:[%s632]] 64
          %s634 = scalar_lea.smem [#allocation20], 5
          %635 = sst [smem:[%s634]] 4
          %637 = dma.general %s605, 2048, %s619, %s596, [#allocation19], [#allocation20], %s617, 0
        $region80: #{tpu_custom_call.1} parent=71 // pred_fallthru
          _
      $region72: #{tpu_custom_call.1} parent=5 // pred_fallthru
        _
      %p638 = scmp.le.s32.totalorder 1, %s34
      %p639 = scmp.lt.s32.totalorder %s34, 5
      %p640 = pnand %p638, %p639
      %p641 = pneg %p640
      // Predicated region
      $region81: #{tpu_custom_call.1} parent=5 // pred_check
        _
      $region82: #{tpu_custom_call.1} parent=5 // pred_check_branch
        %643 = sbr.rel (%p640) target = $region84
      $region83: #{tpu_custom_call.1} parent=5 // pred_region
        %s644 = ssub.s32 %s34, 1
        %s645 = sand.u32 %s61, 1
        %s646 = scalar_lea.sflag [#allocation4], %s645
        %s647 = sand.u32 %s61, 1
        %s648 = smul.addr %s647, 64
        %s649 = scalar_lea.vmem [#allocation3], %s648
        // Predicated region
        $region85: #{tpu_custom_call.1} parent=83 // pred_check
          %p650 = pneg %p74
        $region86: #{tpu_custom_call.1} parent=83 // pred_check_branch
          %652 = sbr.rel (%p650) target = $region88
        $region87: #{tpu_custom_call.1} parent=83 // pred_region
          %653 = dma.done %s646, 1024
        $region88: #{tpu_custom_call.1} parent=83 // pred_fallthru
          _
        // Predicated region
        $region89: #{tpu_custom_call.1} parent=83 // pred_check
          %p654 = pneg %p100
        $region90: #{tpu_custom_call.1} parent=83 // pred_check_branch
          %656 = sbr.rel (%p654) target = $region92
        $region91: #{tpu_custom_call.1} parent=83 // pred_region
          %657 = dma.done [#allocation7], 1024
        $region92: #{tpu_custom_call.1} parent=83 // pred_fallthru
          _
        // Predicated region
        $region93: #{tpu_custom_call.1} parent=83 // pred_check
          %p658 = pneg %p126
        $region94: #{tpu_custom_call.1} parent=83 // pred_check_branch
          %660 = sbr.rel (%p658) target = $region96
        $region95: #{tpu_custom_call.1} parent=83 // pred_region
          %661 = dma.done [#allocation7], 1024
        $region96: #{tpu_custom_call.1} parent=83 // pred_fallthru
          _
        %s662 = sand.u32 %s39, 1
        %s663 = scalar_lea.sflag [#allocation10], %s662
        %s664 = sand.u32 %s139, 1
        %s665 = smul.addr %s664, 128
        %s666 = scalar_lea.vmem [#allocation9], %s665
        // Predicated region
        $region97: #{tpu_custom_call.1} parent=83 // pred_check
          %p667 = pneg %p152
        $region98: #{tpu_custom_call.1} parent=83 // pred_check_branch
          %669 = sbr.rel (%p667) target = $region100
        $region99: #{tpu_custom_call.1} parent=83 // pred_region
          %670 = dma.done %s663, 2048
        $region100: #{tpu_custom_call.1} parent=83 // pred_fallthru
          _
        // Predicated region
        $region101: #{tpu_custom_call.1} parent=83 // pred_check
          %p671 = pneg %p257
        $region102: #{tpu_custom_call.1} parent=83 // pred_check_branch
          %673 = sbr.rel (%p671) target = $region104
        $region103: #{tpu_custom_call.1} parent=83 // pred_region
          %674 = dma.done [#allocation10], 1024
        $region104: #{tpu_custom_call.1} parent=83 // pred_fallthru
          _
        // Predicated region
        $region105: #{tpu_custom_call.1} parent=83 // pred_check
          %p675 = pneg %p278
        $region106: #{tpu_custom_call.1} parent=83 // pred_check_branch
          %677 = sbr.rel (%p675) target = $region108
        $region107: #{tpu_custom_call.1} parent=83 // pred_region
          %678 = dma.done [#allocation13], 1024
        $region108: #{tpu_custom_call.1} parent=83 // pred_fallthru
          _
        // Predicated region
        $region109: #{tpu_custom_call.1} parent=83 // pred_check
          %p679 = pneg %p299
        $region110: #{tpu_custom_call.1} parent=83 // pred_check_branch
          %681 = sbr.rel (%p679) target = $region112
        $region111: #{tpu_custom_call.1} parent=83 // pred_region
          %682 = dma.done [#allocation13], 2048
        $region112: #{tpu_custom_call.1} parent=83 // pred_fallthru
          _
        // Predicated region
        $region113: #{tpu_custom_call.1} parent=83 // pred_check
          %p683 = pneg %p341
        $region114: #{tpu_custom_call.1} parent=83 // pred_check_branch
          %685 = sbr.rel (%p683) target = $region116
        $region115: #{tpu_custom_call.1} parent=83 // pred_region
          %686 = dma.done [#allocation16], 2048
        $region116: #{tpu_custom_call.1} parent=83 // pred_fallthru
          _
        // Predicated region
        $region117: #{tpu_custom_call.1} parent=83 // pred_check
          %p687 = pneg %p383
        $region118: #{tpu_custom_call.1} parent=83 // pred_check_branch
          %689 = sbr.rel (%p687) target = $region120
        $region119: #{tpu_custom_call.1} parent=83 // pred_region
          %690 = dma.done [#allocation16], 2048
        $region120: #{tpu_custom_call.1} parent=83 // pred_fallthru
          _
        %s691 = sand.u32 %s61, 1
        %s692 = scalar_lea.sflag [#allocation4], %s691
        %s693 = sand.u32 %s61, 1
        %s694 = smul.addr %s693, 64
        %s695 = scalar_lea.vmem [#allocation3], %s694
        %p696 = pneg %p74
        %p697 = pneg %p71
        %p698 = pneg %p100
        %p699 = pneg %p97
        %p700 = pneg %p126
        %p701 = pneg %p123
        %s702 = sand.u32 %s39, 1
        %s703 = scalar_lea.sflag [#allocation10], %s702
        %s704 = sand.u32 %s139, 1
        %s705 = smul.addr %s704, 128
        %s706 = scalar_lea.vmem [#allocation9], %s705
        %p707 = pneg %p152
        %p708 = pneg %p149
        %p709 = pneg %p173
        %p710 = pneg %p170
        %p711 = pneg %p194
        %p712 = pneg %p191
        %p713 = pneg %p215
        %p714 = pneg %p212
        %p715 = pneg %p236
        %p716 = pneg %p233
        %p717 = pneg %p257
        %p718 = pneg %p254
        %p719 = pneg %p278
        %p720 = pneg %p275
        %p721 = pneg %p299
        %p722 = pneg %p296
        %p723 = pneg %p320
        %p724 = pneg %p317
        %p725 = pneg %p341
        %p726 = pneg %p338
        %p727 = pneg %p362
        %p728 = pneg %p359
        %p729 = pneg %p383
        %p730 = pneg %p380
        %p731 = pneg %p404
        %p732 = pneg %p401
        %p733 = pneg %p432
        %p734 = pneg %p429
        %s735 = sand.u32 %s419, 1
        %s736 = scalar_lea.sflag [#allocation5], %s735
        %s737 = sand.u32 %s419, 1
        %s738 = smul.addr %s737, 64
        %s739 = scalar_lea.vmem [#allocation18], %s738
        %s740 = smul.u32 8, %s44
        %s741 = smul.u32 8, %s44
        %s742 = smul.u32 8, %s44
        %v744 = vld [vmem:[%s649] sm:$0xff]
        %v745 = vld [vmem:[%s649 + $0x8] sm:$0xff]
        %v746 = vld [vmem:[%s649 + $0x10] sm:$0xff]
        %v747 = vld [vmem:[%s649 + $0x18] sm:$0xff]
        %v748 = vld [vmem:[%s649 + $0x20] sm:$0xff]
        %v749 = vld [vmem:[%s649 + $0x28] sm:$0xff]
        %v750 = vld [vmem:[%s649 + $0x30] sm:$0xff]
        %v751 = vld [vmem:[%s649 + $0x38] sm:$0xff]
        %v752 = vld [vmem:[%s4] sm:$0x1]
        %v753 = vld [vmem:[%s5] sm:$0x1]
        %754 = vadd.xlane.f32.xlu0 %v744
        %v755 = vpop.xlane.xlu0 %754
        %756 = vadd.xlane.f32.xlu0 %v745
        %v757 = vpop.xlane.xlu0 %756
        %758 = vadd.xlane.f32.xlu0 %v746
        %v759 = vpop.xlane.xlu0 %758
        %760 = vadd.xlane.f32.xlu0 %v747
        %v761 = vpop.xlane.xlu0 %760
        %762 = vadd.xlane.f32.xlu0 %v748
        %v763 = vpop.xlane.xlu0 %762
        %764 = vadd.xlane.f32.xlu0 %v749
        %v765 = vpop.xlane.xlu0 %764
        %766 = vadd.xlane.f32.xlu0 %v750
        %v767 = vpop.xlane.xlu0 %766
        %768 = vadd.xlane.f32.xlu0 %v751
        %v769 = vpop.xlane.xlu0 %768
        %v770 = vrcp.pop 128.0
        %v771 = vmul.f32 %v755, %v770
        %v772 = vmul.f32 %v757, %v770
        %v773 = vmul.f32 %v759, %v770
        %v774 = vmul.f32 %v761, %v770
        %v775 = vmul.f32 %v763, %v770
        %v776 = vmul.f32 %v765, %v770
        %v777 = vmul.f32 %v767, %v770
        %v778 = vmul.f32 %v769, %v770
        %v779 = vmul.f32 %v744, %v744
        %v780 = vmul.f32 %v745, %v745
        %v781 = vmul.f32 %v746, %v746
        %v782 = vmul.f32 %v747, %v747
        %v783 = vmul.f32 %v748, %v748
        %v784 = vmul.f32 %v749, %v749
        %v785 = vmul.f32 %v750, %v750
        %v786 = vmul.f32 %v751, %v751
        %787 = vadd.xlane.f32.xlu0 %v779
        %v788 = vpop.xlane.xlu0 %787
        %789 = vadd.xlane.f32.xlu0 %v780
        %v790 = vpop.xlane.xlu0 %789
        %791 = vadd.xlane.f32.xlu0 %v781
        %v792 = vpop.xlane.xlu0 %791
        %793 = vadd.xlane.f32.xlu0 %v782
        %v794 = vpop.xlane.xlu0 %793
        %795 = vadd.xlane.f32.xlu0 %v783
        %v796 = vpop.xlane.xlu0 %795
        %797 = vadd.xlane.f32.xlu0 %v784
        %v798 = vpop.xlane.xlu0 %797
        %799 = vadd.xlane.f32.xlu0 %v785
        %v800 = vpop.xlane.xlu0 %799
        %801 = vadd.xlane.f32.xlu0 %v786
        %v802 = vpop.xlane.xlu0 %801
        %v803 = vmul.f32 %v788, %v770
        %v804 = vmul.f32 %v790, %v770
        %v805 = vmul.f32 %v792, %v770
        %v806 = vmul.f32 %v794, %v770
        %v807 = vmul.f32 %v796, %v770
        %v808 = vmul.f32 %v798, %v770
        %v809 = vmul.f32 %v800, %v770
        %v810 = vmul.f32 %v802, %v770
        %v811 = vmul.f32 %v771, %v771
        %v812 = vmul.f32 %v772, %v772
        %v813 = vmul.f32 %v773, %v773
        %v814 = vmul.f32 %v774, %v774
        %v815 = vmul.f32 %v775, %v775
        %v816 = vmul.f32 %v776, %v776
        %v817 = vmul.f32 %v777, %v777
        %v818 = vmul.f32 %v778, %v778
        %v819 = vsub.f32 %v803, %v811
        %v820 = vsub.f32 %v804, %v812
        %v821 = vsub.f32 %v805, %v813
        %v822 = vsub.f32 %v806, %v814
        %v823 = vsub.f32 %v807, %v815
        %v824 = vsub.f32 %v808, %v816
        %v825 = vsub.f32 %v809, %v817
        %v826 = vsub.f32 %v810, %v818
        %v827 = vmax.f32 %v819, 0.0
        %v828 = vmax.f32 %v820, 0.0
        %v829 = vmax.f32 %v821, 0.0
        %v830 = vmax.f32 %v822, 0.0
        %v831 = vmax.f32 %v823, 0.0
        %v832 = vmax.f32 %v824, 0.0
        %v833 = vmax.f32 %v825, 0.0
        %v834 = vmax.f32 %v826, 0.0
        %v835 = vsub.f32 %v744, %v771
        %v836 = vsub.f32 %v745, %v772
        %v837 = vsub.f32 %v746, %v773
        %v838 = vsub.f32 %v747, %v774
        %v839 = vsub.f32 %v748, %v775
        %v840 = vsub.f32 %v749, %v776
        %v841 = vsub.f32 %v750, %v777
        %v842 = vsub.f32 %v751, %v778
        %v843 = vadd.f32 %v827, 1e-05
        %v844 = vadd.f32 %v828, 1e-05
        %v845 = vadd.f32 %v829, 1e-05
        %v846 = vadd.f32 %v830, 1e-05
        %v847 = vadd.f32 %v831, 1e-05
        %v848 = vadd.f32 %v832, 1e-05
        %v849 = vadd.f32 %v833, 1e-05
        %v850 = vadd.f32 %v834, 1e-05
        %v851 = vrsqrt.pop %v843
        %v852 = vrsqrt.pop %v844
        %v853 = vrsqrt.pop %v845
        %v854 = vrsqrt.pop %v846
        %v855 = vrsqrt.pop %v847
        %v856 = vrsqrt.pop %v848
        %v857 = vrsqrt.pop %v849
        %v858 = vrsqrt.pop %v850
        %v859 = vmul.f32 %v835, %v851
        %v860 = vmul.f32 %v836, %v852
        %v861 = vmul.f32 %v837, %v853
        %v862 = vmul.f32 %v838, %v854
        %v863 = vmul.f32 %v839, %v855
        %v864 = vmul.f32 %v840, %v856
        %v865 = vmul.f32 %v841, %v857
        %v866 = vmul.f32 %v842, %v858
        %v868 = vlaneseq
        %v869 = vshrl.u32 %v868, 7
        %v870 = vsub.s32 0, %v869
        %v871 = vrot.slane %v752, %v870
        %v873 = vmul.f32 %v859, %v871
        %v874 = vmul.f32 %v860, %v871
        %v875 = vmul.f32 %v861, %v871
        %v876 = vmul.f32 %v862, %v871
        %v877 = vmul.f32 %v863, %v871
        %v878 = vmul.f32 %v864, %v871
        %v879 = vmul.f32 %v865, %v871
        %v880 = vmul.f32 %v866, %v871
        %v882 = vlaneseq
        %v883 = vshrl.u32 %v882, 7
        %v884 = vsub.s32 0, %v883
        %v885 = vrot.slane %v753, %v884
        %v887 = vadd.f32 %v873, %v885
        %v888 = vadd.f32 %v874, %v885
        %v889 = vadd.f32 %v875, %v885
        %v890 = vadd.f32 %v876, %v885
        %v891 = vadd.f32 %v877, %v885
        %v892 = vadd.f32 %v878, %v885
        %v893 = vadd.f32 %v879, %v885
        %v894 = vadd.f32 %v880, %v885
        %v895 = vpack.c.bf16 %v888, %v887
        %v896 = vpack.c.bf16 %v890, %v889
        %v897 = vpack.c.bf16 %v892, %v891
        %v898 = vpack.c.bf16 %v894, %v893
        %v899 = vld [vmem:[#allocation11] sm:$0xf]
        %v900 = vld [vmem:[#allocation11 + $0x4] sm:$0xf]
        %v901 = vld [vmem:[#allocation11 + $0x8] sm:$0xf]
        %v902 = vld [vmem:[#allocation11 + $0xc] sm:$0xf]
        %v903 = vld [vmem:[#allocation11 + $0x10] sm:$0xf]
        %v904 = vld [vmem:[#allocation11 + $0x14] sm:$0xf]
        %v905 = vld [vmem:[#allocation11 + $0x18] sm:$0xf]
        %v906 = vld [vmem:[#allocation11 + $0x1c] sm:$0xf]
        %v907 = vld [vmem:[#allocation11 + $0x20] sm:$0xf]
        %v908 = vld [vmem:[#allocation11 + $0x24] sm:$0xf]
        %v909 = vld [vmem:[#allocation11 + $0x28] sm:$0xf]
        %v910 = vld [vmem:[#allocation11 + $0x2c] sm:$0xf]
        %v911 = vld [vmem:[#allocation11 + $0x30] sm:$0xf]
        %v912 = vld [vmem:[#allocation11 + $0x34] sm:$0xf]
        %v913 = vld [vmem:[#allocation11 + $0x38] sm:$0xf]
        %v914 = vld [vmem:[#allocation11 + $0x3c] sm:$0xf]
        %v931 = vunpack.c.l.b16 %v899
        %v932 = vunpack.c.l.b16 %v900
        %v933 = vunpack.c.l.b16 %v901
        %v934 = vunpack.c.l.b16 %v902
        %v935 = vunpack.c.l.b16 %v903
        %v936 = vunpack.c.l.b16 %v904
        %v937 = vunpack.c.l.b16 %v905
        %v938 = vunpack.c.l.b16 %v906
        %v939 = vunpack.c.l.b16 %v907
        %v940 = vunpack.c.l.b16 %v908
        %v941 = vunpack.c.l.b16 %v909
        %v942 = vunpack.c.l.b16 %v910
        %v943 = vunpack.c.l.b16 %v911
        %v944 = vunpack.c.l.b16 %v912
        %v945 = vunpack.c.l.b16 %v913
        %v946 = vunpack.c.l.b16 %v914
        %v947 = vpack.c.b16 %v932, %v931
        %v948 = vpack.c.b16 %v934, %v933
        %v949 = vpack.c.b16 %v936, %v935
        %v950 = vpack.c.b16 %v938, %v937
        %v951 = vpack.c.b16 %v940, %v939
        %v952 = vpack.c.b16 %v942, %v941
        %v953 = vpack.c.b16 %v944, %v943
        %v954 = vpack.c.b16 %v946, %v945
        %963 = vmatprep.subr.bf16.mxu0 0
        %964 = vmatpush1.bf16.msra.mxu0 %v947
        %965 = vmatprep.subr.bf16.mxu0 0
        %966 = vmatpush1.bf16.msra.mxu0 %v948
        %967 = vmatprep.subr.bf16.mxu0 0
        %968 = vmatpush1.bf16.msra.mxu0 %v949
        %969 = vmatprep.subr.bf16.mxu0 0
        %970 = vmatpush1.bf16.msra.mxu0 %v950
        %971 = vmatprep.subr.bf16.mxu0 0
        %972 = vmatpush1.bf16.msra.mxu0 %v951
        %973 = vmatprep.subr.bf16.mxu0 0
        %974 = vmatpush1.bf16.msra.mxu0 %v952
        %975 = vmatprep.subr.bf16.mxu0 0
        %976 = vmatpush1.bf16.msra.mxu0 %v953
        %977 = vmatprep.subr.bf16.mxu0 0
        %978 = vmatpush1.bf16.msra.mxu0 %v954
        %979 = vmatprep.subr.bf16.mxu0 0
        %980 = vmatpush1.bf16.msra.mxu0 0
        %981 = vmatprep.subr.bf16.mxu0 0
        %982 = vmatpush1.bf16.msra.mxu0 0
        %983 = vmatprep.subr.bf16.mxu0 0
        %984 = vmatpush1.bf16.msra.mxu0 0
        %985 = vmatprep.subr.bf16.mxu0 0
        %986 = vmatpush1.bf16.msra.mxu0 0
        %987 = vmatprep.subr.bf16.mxu0 0
        %988 = vmatpush1.bf16.msra.mxu0 0
        %989 = vmatprep.subr.bf16.mxu0 0
        %990 = vmatpush1.bf16.msra.mxu0 0
        %991 = vmatprep.subr.bf16.mxu0 0
        %992 = vmatpush1.bf16.msra.mxu0 0
        %993 = vmatprep.subr.bf16.mxu0 0
        %994 = vmatpush1.bf16.msra.mxu0 0
        %995 = vmatprep.mubr.bf16.mxu0 0
        %996 = vmatmul.mubr.bf16.gmra.mrb[0].mxu0 %v895
        %v997 = vpop.f32.mrb[0].mxu0
        %v998 = vadd.f32 0.0, %v997
        %v999 = vpop.f32.mrb[0].mxu0
        %v1000 = vpop.f32.mrb[0].mxu0
        %v1001 = vadd.f32 0.0, %v1000
        %v1002 = vpop.f32.mrb[0].mxu0
        %1003 = vmatprep.mubr.bf16.mxu0 0
        %1004 = vmatmul.mubr.bf16.gmra.mrb[0].mxu0 %v896
        %v1005 = vpop.f32.mrb[0].mxu0
        %v1006 = vadd.f32 0.0, %v1005
        %v1007 = vpop.f32.mrb[0].mxu0
        %v1008 = vpop.f32.mrb[0].mxu0
        %v1009 = vadd.f32 0.0, %v1008
        %v1010 = vpop.f32.mrb[0].mxu0
        %1011 = vmatprep.mubr.bf16.mxu0 0
        %1012 = vmatmul.mubr.bf16.gmra.mrb[0].mxu0 %v897
        %v1013 = vpop.f32.mrb[0].mxu0
        %v1014 = vadd.f32 0.0, %v1013
        %v1015 = vpop.f32.mrb[0].mxu0
        %v1016 = vpop.f32.mrb[0].mxu0
        %v1017 = vadd.f32 0.0, %v1016
        %v1018 = vpop.f32.mrb[0].mxu0
        %1019 = vmatprep.mubr.bf16.mxu0 0
        %1020 = vmatmul.mubr.bf16.gmra.mrb[0].mxu0 %v898
        %v1021 = vpop.f32.mrb[0].mxu0
        %v1022 = vadd.f32 0.0, %v1021
        %v1023 = vpop.f32.mrb[0].mxu0
        %v1024 = vpop.f32.mrb[0].mxu0
        %v1025 = vadd.f32 0.0, %v1024
        %v1026 = vpop.f32.mrb[0].mxu0
        %1027 = vdwg.mxu0
        %v1028 = vpack.c.bf16 %v1001, %v998
        %v1029 = vpack.c.bf16 %v1009, %v1006
        %v1030 = vpack.c.bf16 %v1017, %v1014
        %v1031 = vpack.c.bf16 %v1025, %v1022
        %v1032 = vld [vmem:[#allocation6] sm:$0xf]
        %v1033 = vld [vmem:[#allocation6 + $0x4] sm:$0xf]
        %v1034 = vld [vmem:[#allocation6 + $0x8] sm:$0xf]
        %v1035 = vld [vmem:[#allocation6 + $0xc] sm:$0xf]
        %v1036 = vld [vmem:[#allocation6 + $0x10] sm:$0xf]
        %v1037 = vld [vmem:[#allocation6 + $0x14] sm:$0xf]
        %v1038 = vld [vmem:[#allocation6 + $0x18] sm:$0xf]
        %v1039 = vld [vmem:[#allocation6 + $0x1c] sm:$0xf]
        %v1040 = vld [vmem:[#allocation6 + $0x20] sm:$0xf]
        %v1041 = vld [vmem:[#allocation6 + $0x24] sm:$0xf]
        %v1042 = vld [vmem:[#allocation6 + $0x28] sm:$0xf]
        %v1043 = vld [vmem:[#allocation6 + $0x2c] sm:$0xf]
        %v1044 = vld [vmem:[#allocation6 + $0x30] sm:$0xf]
        %v1045 = vld [vmem:[#allocation6 + $0x34] sm:$0xf]
        %v1046 = vld [vmem:[#allocation6 + $0x38] sm:$0xf]
        %v1047 = vld [vmem:[#allocation6 + $0x3c] sm:$0xf]
        %v1048 = vld [vmem:[#allocation8] sm:$0xf]
        %v1049 = vld [vmem:[#allocation8 + $0x4] sm:$0xf]
        %v1050 = vld [vmem:[#allocation8 + $0x8] sm:$0xf]
        %v1051 = vld [vmem:[#allocation8 + $0xc] sm:$0xf]
        %v1052 = vld [vmem:[#allocation8 + $0x10] sm:$0xf]
        %v1053 = vld [vmem:[#allocation8 + $0x14] sm:$0xf]
        %v1054 = vld [vmem:[#allocation8 + $0x18] sm:$0xf]
        %v1055 = vld [vmem:[#allocation8 + $0x1c] sm:$0xf]
        %v1056 = vld [vmem:[#allocation8 + $0x20] sm:$0xf]
        %v1057 = vld [vmem:[#allocation8 + $0x24] sm:$0xf]
        %v1058 = vld [vmem:[#allocation8 + $0x28] sm:$0xf]
        %v1059 = vld [vmem:[#allocation8 + $0x2c] sm:$0xf]
        %v1060 = vld [vmem:[#allocation8 + $0x30] sm:$0xf]
        %v1061 = vld [vmem:[#allocation8 + $0x34] sm:$0xf]
        %v1062 = vld [vmem:[#allocation8 + $0x38] sm:$0xf]
        %v1063 = vld [vmem:[#allocation8 + $0x3c] sm:$0xf]
        %v1064 = vld [vmem:[%s666] sm:$0xf]
        %v1065 = vld [vmem:[%s666 + $0x4] sm:$0xf]
        %v1066 = vld [vmem:[%s666 + $0x8] sm:$0xf]
        %v1067 = vld [vmem:[%s666 + $0xc] sm:$0xf]
        %v1068 = vld [vmem:[%s666 + $0x10] sm:$0xf]
        %v1069 = vld [vmem:[%s666 + $0x14] sm:$0xf]
        %v1070 = vld [vmem:[%s666 + $0x18] sm:$0xf]
        %v1071 = vld [vmem:[%s666 + $0x1c] sm:$0xf]
        %v1072 = vunpack.c.l.bf16 %v1064
        %v1073 = vunpack.c.l.bf16 %v1065
        %v1074 = vunpack.c.l.bf16 %v1066
        %v1075 = vunpack.c.l.bf16 %v1067
        %v1076 = vunpack.c.l.bf16 %v1068
        %v1077 = vunpack.c.l.bf16 %v1069
        %v1078 = vunpack.c.l.bf16 %v1070
        %v1079 = vunpack.c.l.bf16 %v1071
        %v1096 = vunpack.c.l.b16 %v1032
        %v1097 = vunpack.c.l.b16 %v1033
        %v1098 = vunpack.c.l.b16 %v1034
        %v1099 = vunpack.c.l.b16 %v1035
        %v1100 = vunpack.c.l.b16 %v1036
        %v1101 = vunpack.c.l.b16 %v1037
        %v1102 = vunpack.c.l.b16 %v1038
        %v1103 = vunpack.c.l.b16 %v1039
        %v1104 = vunpack.c.l.b16 %v1040
        %v1105 = vunpack.c.l.b16 %v1041
        %v1106 = vunpack.c.l.b16 %v1042
        %v1107 = vunpack.c.l.b16 %v1043
        %v1108 = vunpack.c.l.b16 %v1044
        %v1109 = vunpack.c.l.b16 %v1045
        %v1110 = vunpack.c.l.b16 %v1046
        %v1111 = vunpack.c.l.b16 %v1047
        %v1112 = vpack.c.b16 %v1097, %v1096
        %v1113 = vpack.c.b16 %v1099, %v1098
        %v1114 = vpack.c.b16 %v1101, %v1100
        %v1115 = vpack.c.b16 %v1103, %v1102
        %v1116 = vpack.c.b16 %v1105, %v1104
        %v1117 = vpack.c.b16 %v1107, %v1106
        %v1118 = vpack.c.b16 %v1109, %v1108
        %v1119 = vpack.c.b16 %v1111, %v1110
        %vm1120 = vcmask 261120
        %v1122 = vsel %vm1120, %v1028, 0
        %v1125 = vsel %vm1120, %v1029, 0
        %v1128 = vsel %vm1120, %v1030, 0
        %v1131 = vsel %vm1120, %v1031, 0
        %v1134 = vsel %vm1120, %v1112, 0
        %v1137 = vsel %vm1120, %v1113, 0
        %v1140 = vsel %vm1120, %v1114, 0
        %v1143 = vsel %vm1120, %v1115, 0
        %v1146 = vsel %vm1120, %v1116, 0
        %v1149 = vsel %vm1120, %v1117, 0
        %v1152 = vsel %vm1120, %v1118, 0
        %v1155 = vsel %vm1120, %v1119, 0
        %1157 = vmatprep.subr.bf16.mxu0 0
        %1158 = vmatpush1.bf16.xpose.msra.mxu0 %v1134
        %1159 = vmatprep.subr.bf16.mxu0 0
        %1160 = vmatpush1.bf16.xpose.msra.mxu0 %v1137
        %1161 = vmatprep.subr.bf16.mxu0 0
        %1162 = vmatpush1.bf16.xpose.msra.mxu0 %v1140
        %1163 = vmatprep.subr.bf16.mxu0 0
        %1164 = vmatpush1.bf16.xpose.msra.mxu0 %v1143
        %1165 = vmatprep.subr.bf16.mxu0 0
        %1166 = vmatpush1.bf16.xpose.msra.mxu0 %v1146
        %1167 = vmatprep.subr.bf16.mxu0 0
        %1168 = vmatpush1.bf16.xpose.msra.mxu0 %v1149
        %1169 = vmatprep.subr.bf16.mxu0 0
        %1170 = vmatpush1.bf16.xpose.msra.mxu0 %v1152
        %1171 = vmatprep.subr.bf16.mxu0 0
        %1172 = vmatpush1.bf16.xpose.msra.mxu0 %v1155
        %1173 = vmatprep.subr.bf16.mxu0 0
        %1174 = vmatpush1.bf16.xpose.msra.mxu0 0
        %1175 = vmatprep.subr.bf16.mxu0 0
        %1176 = vmatpush1.bf16.xpose.msra.mxu0 0
        %1177 = vmatprep.subr.bf16.mxu0 0
        %1178 = vmatpush1.bf16.xpose.msra.mxu0 0
        %1179 = vmatprep.subr.bf16.mxu0 0
        %1180 = vmatpush1.bf16.xpose.msra.mxu0 0
        %1181 = vmatprep.subr.bf16.mxu0 0
        %1182 = vmatpush1.bf16.xpose.msra.mxu0 0
        %1183 = vmatprep.subr.bf16.mxu0 0
        %1184 = vmatpush1.bf16.xpose.msra.mxu0 0
        %1185 = vmatprep.subr.bf16.mxu0 0
        %1186 = vmatpush1.bf16.xpose.msra.mxu0 0
        %1187 = vmatprep.subr.bf16.mxu0 0
        %1188 = vmatpush1.bf16.xpose.msra.mxu0 0
        %1189 = vmatprep.mubr.bf16.mxu0 0
        %1190 = vmatmul.mubr.bf16.gmra.mrb[0].mxu0 %v1122
        %v1191 = vpop.f32.mrb[0].mxu0
        %v1192 = vadd.f32 %v1072, %v1191
        %v1193 = vpop.f32.mrb[0].mxu0
        %v1194 = vpop.f32.mrb[0].mxu0
        %v1195 = vadd.f32 %v1073, %v1194
        %v1196 = vpop.f32.mrb[0].mxu0
        %1197 = vmatprep.mubr.bf16.mxu0 0
        %1198 = vmatmul.mubr.bf16.gmra.mrb[0].mxu0 %v1125
        %v1199 = vpop.f32.mrb[0].mxu0
        %v1200 = vadd.f32 %v1074, %v1199
        %v1201 = vpop.f32.mrb[0].mxu0
        %v1202 = vpop.f32.mrb[0].mxu0
        %v1203 = vadd.f32 %v1075, %v1202
        %v1204 = vpop.f32.mrb[0].mxu0
        %1205 = vmatprep.mubr.bf16.mxu0 0
        %1206 = vmatmul.mubr.bf16.gmra.mrb[0].mxu0 %v1128
        %v1207 = vpop.f32.mrb[0].mxu0
        %v1208 = vadd.f32 %v1076, %v1207
        %v1209 = vpop.f32.mrb[0].mxu0
        %v1210 = vpop.f32.mrb[0].mxu0
        %v1211 = vadd.f32 %v1077, %v1210
        %v1212 = vpop.f32.mrb[0].mxu0
        %1213 = vmatprep.mubr.bf16.mxu0 0
        %1214 = vmatmul.mubr.bf16.gmra.mrb[0].mxu0 %v1131
        %v1215 = vpop.f32.mrb[0].mxu0
        %v1216 = vadd.f32 %v1078, %v1215
        %v1217 = vpop.f32.mrb[0].mxu0
        %v1218 = vpop.f32.mrb[0].mxu0
        %v1219 = vadd.f32 %v1079, %v1218
        %v1220 = vpop.f32.mrb[0].mxu0
        %1221 = vdwg.mxu0
        %1222 = vmax.xlane.f32.xlu0 %v1192
        %v1223 = vpop.xlane.xlu0 %1222
        %1224 = vmax.xlane.f32.xlu0 %v1195
        %v1225 = vpop.xlane.xlu0 %1224
        %1226 = vmax.xlane.f32.xlu0 %v1200
        %v1227 = vpop.xlane.xlu0 %1226
        %1228 = vmax.xlane.f32.xlu0 %v1203
        %v1229 = vpop.xlane.xlu0 %1228
        %1230 = vmax.xlane.f32.xlu0 %v1208
        %v1231 = vpop.xlane.xlu0 %1230
        %1232 = vmax.xlane.f32.xlu0 %v1211
        %v1233 = vpop.xlane.xlu0 %1232
        %1234 = vmax.xlane.f32.xlu0 %v1216
        %v1235 = vpop.xlane.xlu0 %1234
        %1236 = vmax.xlane.f32.xlu0 %v1219
        %v1237 = vpop.xlane.xlu0 %1236
        %v1238 = vsub.f32 %v1192, %v1223
        %v1239 = vsub.f32 %v1195, %v1225
        %v1240 = vsub.f32 %v1200, %v1227
        %v1241 = vsub.f32 %v1203, %v1229
        %v1242 = vsub.f32 %v1208, %v1231
        %v1243 = vsub.f32 %v1211, %v1233
        %v1244 = vsub.f32 %v1216, %v1235
        %v1245 = vsub.f32 %v1219, %v1237
        %v1246 = vmul.f32 %v1238, 1.442695
        %v1247 = vpow.pop %v1246
        %v1248 = vmul.f32 %v1239, 1.442695
        %v1249 = vpow.pop %v1248
        %v1250 = vmul.f32 %v1240, 1.442695
        %v1251 = vpow.pop %v1250
        %v1252 = vmul.f32 %v1241, 1.442695
        %v1253 = vpow.pop %v1252
        %v1254 = vmul.f32 %v1242, 1.442695
        %v1255 = vpow.pop %v1254
        %v1256 = vmul.f32 %v1243, 1.442695
        %v1257 = vpow.pop %v1256
        %v1258 = vmul.f32 %v1244, 1.442695
        %v1259 = vpow.pop %v1258
        %v1260 = vmul.f32 %v1245, 1.442695
        %v1261 = vpow.pop %v1260
        %1262 = vadd.xlane.f32.xlu0 %v1247
        %v1263 = vpop.xlane.xlu0 %1262
        %1264 = vadd.xlane.f32.xlu0 %v1249
        %v1265 = vpop.xlane.xlu0 %1264
        %1266 = vadd.xlane.f32.xlu0 %v1251
        %v1267 = vpop.xlane.xlu0 %1266
        %1268 = vadd.xlane.f32.xlu0 %v1253
        %v1269 = vpop.xlane.xlu0 %1268
        %1270 = vadd.xlane.f32.xlu0 %v1255
        %v1271 = vpop.xlane.xlu0 %1270
        %1272 = vadd.xlane.f32.xlu0 %v1257
        %v1273 = vpop.xlane.xlu0 %1272
        %1274 = vadd.xlane.f32.xlu0 %v1259
        %v1275 = vpop.xlane.xlu0 %1274
        %1276 = vadd.xlane.f32.xlu0 %v1261
        %v1277 = vpop.xlane.xlu0 %1276
        %v1278 = vrcp.pop %v1263
        %v1279 = vrcp.pop %v1265
        %v1280 = vrcp.pop %v1267
        %v1281 = vrcp.pop %v1269
        %v1282 = vrcp.pop %v1271
        %v1283 = vrcp.pop %v1273
        %v1284 = vrcp.pop %v1275
        %v1285 = vrcp.pop %v1277
        %v1286 = vmul.f32 %v1247, %v1278
        %v1287 = vmul.f32 %v1249, %v1279
        %v1288 = vmul.f32 %v1251, %v1280
        %v1289 = vmul.f32 %v1253, %v1281
        %v1290 = vmul.f32 %v1255, %v1282
        %v1291 = vmul.f32 %v1257, %v1283
        %v1292 = vmul.f32 %v1259, %v1284
        %v1293 = vmul.f32 %v1261, %v1285
        %v1294 = vpack.c.bf16 %v1287, %v1286
        %v1295 = vpack.c.bf16 %v1289, %v1288
        %v1296 = vpack.c.bf16 %v1291, %v1290
        %v1297 = vpack.c.bf16 %v1293, %v1292
        %v1314 = vunpack.c.l.b16 %v1048
        %v1315 = vunpack.c.l.b16 %v1049
        %v1316 = vunpack.c.l.b16 %v1050
        %v1317 = vunpack.c.l.b16 %v1051
        %v1318 = vunpack.c.l.b16 %v1052
        %v1319 = vunpack.c.l.b16 %v1053
        %v1320 = vunpack.c.l.b16 %v1054
        %v1321 = vunpack.c.l.b16 %v1055
        %v1322 = vunpack.c.l.b16 %v1056
        %v1323 = vunpack.c.l.b16 %v1057
        %v1324 = vunpack.c.l.b16 %v1058
        %v1325 = vunpack.c.l.b16 %v1059
        %v1326 = vunpack.c.l.b16 %v1060
        %v1327 = vunpack.c.l.b16 %v1061
        %v1328 = vunpack.c.l.b16 %v1062
        %v1329 = vunpack.c.l.b16 %v1063
        %v1330 = vpack.c.b16 %v1315, %v1314
        %v1331 = vpack.c.b16 %v1317, %v1316
        %v1332 = vpack.c.b16 %v1319, %v1318
        %v1333 = vpack.c.b16 %v1321, %v1320
        %v1334 = vpack.c.b16 %v1323, %v1322
        %v1335 = vpack.c.b16 %v1325, %v1324
        %v1336 = vpack.c.b16 %v1327, %v1326
        %v1337 = vpack.c.b16 %v1329, %v1328
        %1346 = vmatprep.subr.bf16.mxu0 0
        %1347 = vmatpush1.bf16.msra.mxu0 %v1330
        %1348 = vmatprep.subr.bf16.mxu0 0
        %1349 = vmatpush1.bf16.msra.mxu0 %v1331
        %1350 = vmatprep.subr.bf16.mxu0 0
        %1351 = vmatpush1.bf16.msra.mxu0 %v1332
        %1352 = vmatprep.subr.bf16.mxu0 0
        %1353 = vmatpush1.bf16.msra.mxu0 %v1333
        %1354 = vmatprep.subr.bf16.mxu0 0
        %1355 = vmatpush1.bf16.msra.mxu0 %v1334
        %1356 = vmatprep.subr.bf16.mxu0 0
        %1357 = vmatpush1.bf16.msra.mxu0 %v1335
        %1358 = vmatprep.subr.bf16.mxu0 0
        %1359 = vmatpush1.bf16.msra.mxu0 %v1336
        %1360 = vmatprep.subr.bf16.mxu0 0
        %1361 = vmatpush1.bf16.msra.mxu0 %v1337
        %1362 = vmatprep.subr.bf16.mxu0 0
        %1363 = vmatpush1.bf16.msra.mxu0 0
        %1364 = vmatprep.subr.bf16.mxu0 0
        %1365 = vmatpush1.bf16.msra.mxu0 0
        %1366 = vmatprep.subr.bf16.mxu0 0
        %1367 = vmatpush1.bf16.msra.mxu0 0
        %1368 = vmatprep.subr.bf16.mxu0 0
        %1369 = vmatpush1.bf16.msra.mxu0 0
        %1370 = vmatprep.subr.bf16.mxu0 0
        %1371 = vmatpush1.bf16.msra.mxu0 0
        %1372 = vmatprep.subr.bf16.mxu0 0
        %1373 = vmatpush1.bf16.msra.mxu0 0
        %1374 = vmatprep.subr.bf16.mxu0 0
        %1375 = vmatpush1.bf16.msra.mxu0 0
        %1376 = vmatprep.subr.bf16.mxu0 0
        %1377 = vmatpush1.bf16.msra.mxu0 0
        %1378 = vmatprep.mubr.bf16.mxu0 0
        %1379 = vmatmul.mubr.bf16.gmra.mrb[0].mxu0 %v1294
        %v1380 = vpop.f32.mrb[0].mxu0
        %v1381 = vadd.f32 0.0, %v1380
        %v1382 = vpop.f32.mrb[0].mxu0
        %v1383 = vpop.f32.mrb[0].mxu0
        %v1384 = vadd.f32 0.0, %v1383
        %v1385 = vpop.f32.mrb[0].mxu0
        %1386 = vmatprep.mubr.bf16.mxu0 0
        %1387 = vmatmul.mubr.bf16.gmra.mrb[0].mxu0 %v1295
        %v1388 = vpop.f32.mrb[0].mxu0
        %v1389 = vadd.f32 0.0, %v1388
        %v1390 = vpop.f32.mrb[0].mxu0
        %v1391 = vpop.f32.mrb[0].mxu0
        %v1392 = vadd.f32 0.0, %v1391
        %v1393 = vpop.f32.mrb[0].mxu0
        %1394 = vmatprep.mubr.bf16.mxu0 0
        %1395 = vmatmul.mubr.bf16.gmra.mrb[0].mxu0 %v1296
        %v1396 = vpop.f32.mrb[0].mxu0
        %v1397 = vadd.f32 0.0, %v1396
        %v1398 = vpop.f32.mrb[0].mxu0
        %v1399 = vpop.f32.mrb[0].mxu0
        %v1400 = vadd.f32 0.0, %v1399
        %v1401 = vpop.f32.mrb[0].mxu0
        %1402 = vmatprep.mubr.bf16.mxu0 0
        %1403 = vmatmul.mubr.bf16.gmra.mrb[0].mxu0 %v1297
        %v1404 = vpop.f32.mrb[0].mxu0
        %v1405 = vadd.f32 0.0, %v1404
        %v1406 = vpop.f32.mrb[0].mxu0
        %v1407 = vpop.f32.mrb[0].mxu0
        %v1408 = vadd.f32 0.0, %v1407
        %v1409 = vpop.f32.mrb[0].mxu0
        %1410 = vdwg.mxu0
        %v1411 = vpack.c.bf16 %v1384, %v1381
        %v1412 = vpack.c.bf16 %v1392, %v1389
        %v1413 = vpack.c.bf16 %v1400, %v1397
        %v1414 = vpack.c.bf16 %v1408, %v1405
        %1415 = vst.msk [vmem:[#allocation2] sm:$0xff] %vm1120, %v1411
        %1416 = vst.msk [vmem:[#allocation2 + $0x8] sm:$0xff] %vm1120, %v1412
        %1417 = vst.msk [vmem:[#allocation2 + $0x10] sm:$0xff] %vm1120, %v1413
        %1418 = vst.msk [vmem:[#allocation2 + $0x18] sm:$0xff] %vm1120, %v1414
        %v1419 = vld [vmem:[#allocation6] sm:$0xf]
        %v1420 = vld [vmem:[#allocation6 + $0x4] sm:$0xf]
        %v1421 = vld [vmem:[#allocation6 + $0x8] sm:$0xf]
        %v1422 = vld [vmem:[#allocation6 + $0xc] sm:$0xf]
        %v1423 = vld [vmem:[#allocation6 + $0x10] sm:$0xf]
        %v1424 = vld [vmem:[#allocation6 + $0x14] sm:$0xf]
        %v1425 = vld [vmem:[#allocation6 + $0x18] sm:$0xf]
        %v1426 = vld [vmem:[#allocation6 + $0x1c] sm:$0xf]
        %v1427 = vld [vmem:[#allocation6 + $0x20] sm:$0xf]
        %v1428 = vld [vmem:[#allocation6 + $0x24] sm:$0xf]
        %v1429 = vld [vmem:[#allocation6 + $0x28] sm:$0xf]
        %v1430 = vld [vmem:[#allocation6 + $0x2c] sm:$0xf]
        %v1431 = vld [vmem:[#allocation6 + $0x30] sm:$0xf]
        %v1432 = vld [vmem:[#allocation6 + $0x34] sm:$0xf]
        %v1433 = vld [vmem:[#allocation6 + $0x38] sm:$0xf]
        %v1434 = vld [vmem:[#allocation6 + $0x3c] sm:$0xf]
        %v1435 = vld [vmem:[#allocation8] sm:$0xf]
        %v1436 = vld [vmem:[#allocation8 + $0x4] sm:$0xf]
        %v1437 = vld [vmem:[#allocation8 + $0x8] sm:$0xf]
        %v1438 = vld [vmem:[#allocation8 + $0xc] sm:$0xf]
        %v1439 = vld [vmem:[#allocation8 + $0x10] sm:$0xf]
        %v1440 = vld [vmem:[#allocation8 + $0x14] sm:$0xf]
        %v1441 = vld [vmem:[#allocation8 + $0x18] sm:$0xf]
        %v1442 = vld [vmem:[#allocation8 + $0x1c] sm:$0xf]
        %v1443 = vld [vmem:[#allocation8 + $0x20] sm:$0xf]
        %v1444 = vld [vmem:[#allocation8 + $0x24] sm:$0xf]
        %v1445 = vld [vmem:[#allocation8 + $0x28] sm:$0xf]
        %v1446 = vld [vmem:[#allocation8 + $0x2c] sm:$0xf]
        %v1447 = vld [vmem:[#allocation8 + $0x30] sm:$0xf]
        %v1448 = vld [vmem:[#allocation8 + $0x34] sm:$0xf]
        %v1449 = vld [vmem:[#allocation8 + $0x38] sm:$0xf]
        %v1450 = vld [vmem:[#allocation8 + $0x3c] sm:$0xf]
        %s1451 = scalar_lea.vmem %s666, 32 [#allocation9]
        %v1452 = vld [vmem:[%s1451] sm:$0xf]
        %v1453 = vld [vmem:[%s1451 + $0x4] sm:$0xf]
        %v1454 = vld [vmem:[%s1451 + $0x8] sm:$0xf]
        %v1455 = vld [vmem:[%s1451 + $0xc] sm:$0xf]
        %v1456 = vld [vmem:[%s1451 + $0x10] sm:$0xf]
        %v1457 = vld [vmem:[%s1451 + $0x14] sm:$0xf]
        %v1458 = vld [vmem:[%s1451 + $0x18] sm:$0xf]
        %v1459 = vld [vmem:[%s1451 + $0x1c] sm:$0xf]
        %v1460 = vunpack.c.l.bf16 %v1452
        %v1461 = vunpack.c.l.bf16 %v1453
        %v1462 = vunpack.c.l.bf16 %v1454
        %v1463 = vunpack.c.l.bf16 %v1455
        %v1464 = vunpack.c.l.bf16 %v1456
        %v1465 = vunpack.c.l.bf16 %v1457
        %v1466 = vunpack.c.l.bf16 %v1458
        %v1467 = vunpack.c.l.bf16 %v1459
        %1472 = vrot.lane.b32.xlu0 %v1028, 96
        %v1473 = vpop.permute.xlu0 %1472
        %1474 = vrot.lane.b32.xlu0 %v1029, 96
        %v1475 = vpop.permute.xlu0 %1474
        %1476 = vrot.lane.b32.xlu0 %v1030, 96
        %v1477 = vpop.permute.xlu0 %1476
        %1478 = vrot.lane.b32.xlu0 %v1031, 96
        %v1479 = vpop.permute.xlu0 %1478
        %v1496 = vunpack.c.l.b16 %v1419
        %v1497 = vunpack.c.l.b16 %v1420
        %v1498 = vunpack.c.l.b16 %v1421
        %v1499 = vunpack.c.l.b16 %v1422
        %v1500 = vunpack.c.l.b16 %v1423
        %v1501 = vunpack.c.l.b16 %v1424
        %v1502 = vunpack.c.l.b16 %v1425
        %v1503 = vunpack.c.l.b16 %v1426
        %v1504 = vunpack.c.l.b16 %v1427
        %v1505 = vunpack.c.l.b16 %v1428
        %v1506 = vunpack.c.l.b16 %v1429
        %v1507 = vunpack.c.l.b16 %v1430
        %v1508 = vunpack.c.l.b16 %v1431
        %v1509 = vunpack.c.l.b16 %v1432
        %v1510 = vunpack.c.l.b16 %v1433
        %v1511 = vunpack.c.l.b16 %v1434
        %v1512 = vpack.c.b16 %v1497, %v1496
        %v1513 = vpack.c.b16 %v1499, %v1498
        %v1514 = vpack.c.b16 %v1501, %v1500
        %v1515 = vpack.c.b16 %v1503, %v1502
        %v1516 = vpack.c.b16 %v1505, %v1504
        %v1517 = vpack.c.b16 %v1507, %v1506
        %v1518 = vpack.c.b16 %v1509, %v1508
        %v1519 = vpack.c.b16 %v1511, %v1510
        %1520 = vrot.lane.b32.xlu0 %v1512, 96
        %v1521 = vpop.permute.xlu0 %1520
        %1522 = vrot.lane.b32.xlu0 %v1513, 96
        %v1523 = vpop.permute.xlu0 %1522
        %1524 = vrot.lane.b32.xlu0 %v1514, 96
        %v1525 = vpop.permute.xlu0 %1524
        %1526 = vrot.lane.b32.xlu0 %v1515, 96
        %v1527 = vpop.permute.xlu0 %1526
        %1528 = vrot.lane.b32.xlu0 %v1516, 96
        %v1529 = vpop.permute.xlu0 %1528
        %1530 = vrot.lane.b32.xlu0 %v1517, 96
        %v1531 = vpop.permute.xlu0 %1530
        %1532 = vrot.lane.b32.xlu0 %v1518, 96
        %v1533 = vpop.permute.xlu0 %1532
        %1534 = vrot.lane.b32.xlu0 %v1519, 96
        %v1535 = vpop.permute.xlu0 %1534
        %v1537 = vsel %vm1120, %v1473, 0
        %v1540 = vsel %vm1120, %v1475, 0
        %v1543 = vsel %vm1120, %v1477, 0
        %v1546 = vsel %vm1120, %v1479, 0
        %v1549 = vsel %vm1120, %v1521, 0
        %v1552 = vsel %vm1120, %v1523, 0
        %v1555 = vsel %vm1120, %v1525, 0
        %v1558 = vsel %vm1120, %v1527, 0
        %v1561 = vsel %vm1120, %v1529, 0
        %v1564 = vsel %vm1120, %v1531, 0
        %v1567 = vsel %vm1120, %v1533, 0
        %v1570 = vsel %vm1120, %v1535, 0
        %1572 = vmatprep.subr.bf16.mxu0 0
        %1573 = vmatpush1.bf16.xpose.msra.mxu0 %v1549
        %1574 = vmatprep.subr.bf16.mxu0 0
        %1575 = vmatpush1.bf16.xpose.msra.mxu0 %v1552
        %1576 = vmatprep.subr.bf16.mxu0 0
        %1577 = vmatpush1.bf16.xpose.msra.mxu0 %v1555
        %1578 = vmatprep.subr.bf16.mxu0 0
        %1579 = vmatpush1.bf16.xpose.msra.mxu0 %v1558
        %1580 = vmatprep.subr.bf16.mxu0 0
        %1581 = vmatpush1.bf16.xpose.msra.mxu0 %v1561
        %1582 = vmatprep.subr.bf16.mxu0 0
        %1583 = vmatpush1.bf16.xpose.msra.mxu0 %v1564
        %1584 = vmatprep.subr.bf16.mxu0 0
        %1585 = vmatpush1.bf16.xpose.msra.mxu0 %v1567
        %1586 = vmatprep.subr.bf16.mxu0 0
        %1587 = vmatpush1.bf16.xpose.msra.mxu0 %v1570
        %1588 = vmatprep.subr.bf16.mxu0 0
        %1589 = vmatpush1.bf16.xpose.msra.mxu0 0
        %1590 = vmatprep.subr.bf16.mxu0 0
        %1591 = vmatpush1.bf16.xpose.msra.mxu0 0
        %1592 = vmatprep.subr.bf16.mxu0 0
        %1593 = vmatpush1.bf16.xpose.msra.mxu0 0
        %1594 = vmatprep.subr.bf16.mxu0 0
        %1595 = vmatpush1.bf16.xpose.msra.mxu0 0
        %1596 = vmatprep.subr.bf16.mxu0 0
        %1597 = vmatpush1.bf16.xpose.msra.mxu0 0
        %1598 = vmatprep.subr.bf16.mxu0 0
        %1599 = vmatpush1.bf16.xpose.msra.mxu0 0
        %1600 = vmatprep.subr.bf16.mxu0 0
        %1601 = vmatpush1.bf16.xpose.msra.mxu0 0
        %1602 = vmatprep.subr.bf16.mxu0 0
        %1603 = vmatpush1.bf16.xpose.msra.mxu0 0
        %1604 = vmatprep.mubr.bf16.mxu0 0
        %1605 = vmatmul.mubr.bf16.gmra.mrb[0].mxu0 %v1537
        %v1606 = vpop.f32.mrb[0].mxu0
        %v1607 = vadd.f32 %v1460, %v1606
        %v1608 = vpop.f32.mrb[0].mxu0
        %v1609 = vpop.f32.mrb[0].mxu0
        %v1610 = vadd.f32 %v1461, %v1609
        %v1611 = vpop.f32.mrb[0].mxu0
        %1612 = vmatprep.mubr.bf16.mxu0 0
        %1613 = vmatmul.mubr.bf16.gmra.mrb[0].mxu0 %v1540
        %v1614 = vpop.f32.mrb[0].mxu0
        %v1615 = vadd.f32 %v1462, %v1614
        %v1616 = vpop.f32.mrb[0].mxu0
        %v1617 = vpop.f32.mrb[0].mxu0
        %v1618 = vadd.f32 %v1463, %v1617
        %v1619 = vpop.f32.mrb[0].mxu0
        %1620 = vmatprep.mubr.bf16.mxu0 0
        %1621 = vmatmul.mubr.bf16.gmra.mrb[0].mxu0 %v1543
        %v1622 = vpop.f32.mrb[0].mxu0
        %v1623 = vadd.f32 %v1464, %v1622
        %v1624 = vpop.f32.mrb[0].mxu0
        %v1625 = vpop.f32.mrb[0].mxu0
        %v1626 = vadd.f32 %v1465, %v1625
        %v1627 = vpop.f32.mrb[0].mxu0
        %1628 = vmatprep.mubr.bf16.mxu0 0
        %1629 = vmatmul.mubr.bf16.gmra.mrb[0].mxu0 %v1546
        %v1630 = vpop.f32.mrb[0].mxu0
        %v1631 = vadd.f32 %v1466, %v1630
        %v1632 = vpop.f32.mrb[0].mxu0
        %v1633 = vpop.f32.mrb[0].mxu0
        %v1634 = vadd.f32 %v1467, %v1633
        %v1635 = vpop.f32.mrb[0].mxu0
        %1636 = vdwg.mxu0
        %1637 = vmax.xlane.f32.xlu0 %v1607
        %v1638 = vpop.xlane.xlu0 %1637
        %1639 = vmax.xlane.f32.xlu0 %v1610
        %v1640 = vpop.xlane.xlu0 %1639
        %1641 = vmax.xlane.f32.xlu0 %v1615
        %v1642 = vpop.xlane.xlu0 %1641
        %1643 = vmax.xlane.f32.xlu0 %v1618
        %v1644 = vpop.xlane.xlu0 %1643
        %1645 = vmax.xlane.f32.xlu0 %v1623
        %v1646 = vpop.xlane.xlu0 %1645
        %1647 = vmax.xlane.f32.xlu0 %v1626
        %v1648 = vpop.xlane.xlu0 %1647
        %1649 = vmax.xlane.f32.xlu0 %v1631
        %v1650 = vpop.xlane.xlu0 %1649
        %1651 = vmax.xlane.f32.xlu0 %v1634
        %v1652 = vpop.xlane.xlu0 %1651
        %v1653 = vsub.f32 %v1607, %v1638
        %v1654 = vsub.f32 %v1610, %v1640
        %v1655 = vsub.f32 %v1615, %v1642
        %v1656 = vsub.f32 %v1618, %v1644
        %v1657 = vsub.f32 %v1623, %v1646
        %v1658 = vsub.f32 %v1626, %v1648
        %v1659 = vsub.f32 %v1631, %v1650
        %v1660 = vsub.f32 %v1634, %v1652
        %v1661 = vmul.f32 %v1653, 1.442695
        %v1662 = vpow.pop %v1661
        %v1663 = vmul.f32 %v1654, 1.442695
        %v1664 = vpow.pop %v1663
        %v1665 = vmul.f32 %v1655, 1.442695
        %v1666 = vpow.pop %v1665
        %v1667 = vmul.f32 %v1656, 1.442695
        %v1668 = vpow.pop %v1667
        %v1669 = vmul.f32 %v1657, 1.442695
        %v1670 = vpow.pop %v1669
        %v1671 = vmul.f32 %v1658, 1.442695
        %v1672 = vpow.pop %v1671
        %v1673 = vmul.f32 %v1659, 1.442695
        %v1674 = vpow.pop %v1673
        %v1675 = vmul.f32 %v1660, 1.442695
        %v1676 = vpow.pop %v1675
        %1677 = vadd.xlane.f32.xlu0 %v1662
        %v1678 = vpop.xlane.xlu0 %1677
        %1679 = vadd.xlane.f32.xlu0 %v1664
        %v1680 = vpop.xlane.xlu0 %1679
        %1681 = vadd.xlane.f32.xlu0 %v1666
        %v1682 = vpop.xlane.xlu0 %1681
        %1683 = vadd.xlane.f32.xlu0 %v1668
        %v1684 = vpop.xlane.xlu0 %1683
        %1685 = vadd.xlane.f32.xlu0 %v1670
        %v1686 = vpop.xlane.xlu0 %1685
        %1687 = vadd.xlane.f32.xlu0 %v1672
        %v1688 = vpop.xlane.xlu0 %1687
        %1689 = vadd.xlane.f32.xlu0 %v1674
        %v1690 = vpop.xlane.xlu0 %1689
        %1691 = vadd.xlane.f32.xlu0 %v1676
        %v1692 = vpop.xlane.xlu0 %1691
        %v1693 = vrcp.pop %v1678
        %v1694 = vrcp.pop %v1680
        %v1695 = vrcp.pop %v1682
        %v1696 = vrcp.pop %v1684
        %v1697 = vrcp.pop %v1686
        %v1698 = vrcp.pop %v1688
        %v1699 = vrcp.pop %v1690
        %v1700 = vrcp.pop %v1692
        %v1701 = vmul.f32 %v1662, %v1693
        %v1702 = vmul.f32 %v1664, %v1694
        %v1703 = vmul.f32 %v1666, %v1695
        %v1704 = vmul.f32 %v1668, %v1696
        %v1705 = vmul.f32 %v1670, %v1697
        %v1706 = vmul.f32 %v1672, %v1698
        %v1707 = vmul.f32 %v1674, %v1699
        %v1708 = vmul.f32 %v1676, %v1700
        %v1709 = vpack.c.bf16 %v1702, %v1701
        %v1710 = vpack.c.bf16 %v1704, %v1703
        %v1711 = vpack.c.bf16 %v1706, %v1705
        %v1712 = vpack.c.bf16 %v1708, %v1707
        %v1729 = vunpack.c.l.b16 %v1435
        %v1730 = vunpack.c.l.b16 %v1436
        %v1731 = vunpack.c.l.b16 %v1437
        %v1732 = vunpack.c.l.b16 %v1438
        %v1733 = vunpack.c.l.b16 %v1439
        %v1734 = vunpack.c.l.b16 %v1440
        %v1735 = vunpack.c.l.b16 %v1441
        %v1736 = vunpack.c.l.b16 %v1442
        %v1737 = vunpack.c.l.b16 %v1443
        %v1738 = vunpack.c.l.b16 %v1444
        %v1739 = vunpack.c.l.b16 %v1445
        %v1740 = vunpack.c.l.b16 %v1446
        %v1741 = vunpack.c.l.b16 %v1447
        %v1742 = vunpack.c.l.b16 %v1448
        %v1743 = vunpack.c.l.b16 %v1449
        %v1744 = vunpack.c.l.b16 %v1450
        %v1745 = vpack.c.b16 %v1730, %v1729
        %v1746 = vpack.c.b16 %v1732, %v1731
        %v1747 = vpack.c.b16 %v1734, %v1733
        %v1748 = vpack.c.b16 %v1736, %v1735
        %v1749 = vpack.c.b16 %v1738, %v1737
        %v1750 = vpack.c.b16 %v1740, %v1739
        %v1751 = vpack.c.b16 %v1742, %v1741
        %v1752 = vpack.c.b16 %v1744, %v1743
        %1753 = vrot.lane.b32.xlu0 %v1745, 96
        %v1754 = vpop.permute.xlu0 %1753
        %1755 = vrot.lane.b32.xlu0 %v1746, 96
        %v1756 = vpop.permute.xlu0 %1755
        %1757 = vrot.lane.b32.xlu0 %v1747, 96
        %v1758 = vpop.permute.xlu0 %1757
        %1759 = vrot.lane.b32.xlu0 %v1748, 96
        %v1760 = vpop.permute.xlu0 %1759
        %1761 = vrot.lane.b32.xlu0 %v1749, 96
        %v1762 = vpop.permute.xlu0 %1761
        %1763 = vrot.lane.b32.xlu0 %v1750, 96
        %v1764 = vpop.permute.xlu0 %1763
        %1765 = vrot.lane.b32.xlu0 %v1751, 96
        %v1766 = vpop.permute.xlu0 %1765
        %1767 = vrot.lane.b32.xlu0 %v1752, 96
        %v1768 = vpop.permute.xlu0 %1767
        %1777 = vmatprep.subr.bf16.mxu0 0
        %1778 = vmatpush1.bf16.msra.mxu0 %v1754
        %1779 = vmatprep.subr.bf16.mxu0 0
        %1780 = vmatpush1.bf16.msra.mxu0 %v1756
        %1781 = vmatprep.subr.bf16.mxu0 0
        %1782 = vmatpush1.bf16.msra.mxu0 %v1758
        %1783 = vmatprep.subr.bf16.mxu0 0
        %1784 = vmatpush1.bf16.msra.mxu0 %v1760
        %1785 = vmatprep.subr.bf16.mxu0 0
        %1786 = vmatpush1.bf16.msra.mxu0 %v1762
        %1787 = vmatprep.subr.bf16.mxu0 0
        %1788 = vmatpush1.bf16.msra.mxu0 %v1764
        %1789 = vmatprep.subr.bf16.mxu0 0
        %1790 = vmatpush1.bf16.msra.mxu0 %v1766
        %1791 = vmatprep.subr.bf16.mxu0 0
        %1792 = vmatpush1.bf16.msra.mxu0 %v1768
        %1793 = vmatprep.subr.bf16.mxu0 0
        %1794 = vmatpush1.bf16.msra.mxu0 0
        %1795 = vmatprep.subr.bf16.mxu0 0
        %1796 = vmatpush1.bf16.msra.mxu0 0
        %1797 = vmatprep.subr.bf16.mxu0 0
        %1798 = vmatpush1.bf16.msra.mxu0 0
        %1799 = vmatprep.subr.bf16.mxu0 0
        %1800 = vmatpush1.bf16.msra.mxu0 0
        %1801 = vmatprep.subr.bf16.mxu0 0
        %1802 = vmatpush1.bf16.msra.mxu0 0
        %1803 = vmatprep.subr.bf16.mxu0 0
        %1804 = vmatpush1.bf16.msra.mxu0 0
        %1805 = vmatprep.subr.bf16.mxu0 0
        %1806 = vmatpush1.bf16.msra.mxu0 0
        %1807 = vmatprep.subr.bf16.mxu0 0
        %1808 = vmatpush1.bf16.msra.mxu0 0
        %1809 = vmatprep.mubr.bf16.mxu0 0
        %1810 = vmatmul.mubr.bf16.gmra.mrb[0].mxu0 %v1709
        %v1811 = vpop.f32.mrb[0].mxu0
        %v1812 = vadd.f32 0.0, %v1811
        %v1813 = vpop.f32.mrb[0].mxu0
        %v1814 = vpop.f32.mrb[0].mxu0
        %v1815 = vadd.f32 0.0, %v1814
        %v1816 = vpop.f32.mrb[0].mxu0
        %1817 = vmatprep.mubr.bf16.mxu0 0
        %1818 = vmatmul.mubr.bf16.gmra.mrb[0].mxu0 %v1710
        %v1819 = vpop.f32.mrb[0].mxu0
        %v1820 = vadd.f32 0.0, %v1819
        %v1821 = vpop.f32.mrb[0].mxu0
        %v1822 = vpop.f32.mrb[0].mxu0
        %v1823 = vadd.f32 0.0, %v1822
        %v1824 = vpop.f32.mrb[0].mxu0
        %1825 = vmatprep.mubr.bf16.mxu0 0
        %1826 = vmatmul.mubr.bf16.gmra.mrb[0].mxu0 %v1711
        %v1827 = vpop.f32.mrb[0].mxu0
        %v1828 = vadd.f32 0.0, %v1827
        %v1829 = vpop.f32.mrb[0].mxu0
        %v1830 = vpop.f32.mrb[0].mxu0
        %v1831 = vadd.f32 0.0, %v1830
        %v1832 = vpop.f32.mrb[0].mxu0
        %1833 = vmatprep.mubr.bf16.mxu0 0
        %1834 = vmatmul.mubr.bf16.gmra.mrb[0].mxu0 %v1712
        %v1835 = vpop.f32.mrb[0].mxu0
        %v1836 = vadd.f32 0.0, %v1835
        %v1837 = vpop.f32.mrb[0].mxu0
        %v1838 = vpop.f32.mrb[0].mxu0
        %v1839 = vadd.f32 0.0, %v1838
        %v1840 = vpop.f32.mrb[0].mxu0
        %1841 = vdwg.mxu0
        %v1842 = vpack.c.bf16 %v1815, %v1812
        %v1843 = vpack.c.bf16 %v1823, %v1820
        %v1844 = vpack.c.bf16 %v1831, %v1828
        %v1845 = vpack.c.bf16 %v1839, %v1836
        %1850 = vrot.lane.b32.xlu0 %v1842, 32
        %v1851 = vpop.permute.xlu0 %1850
        %1852 = vrot.lane.b32.xlu0 %v1843, 32
        %v1853 = vpop.permute.xlu0 %1852
        %1854 = vrot.lane.b32.xlu0 %v1844, 32
        %v1855 = vpop.permute.xlu0 %1854
        %1856 = vrot.lane.b32.xlu0 %v1845, 32
        %v1857 = vpop.permute.xlu0 %1856
        %vm1862 = vcmask 523520
        %1863 = vst.msk [vmem:[#allocation2] sm:$0xff] %vm1862, %v1851
        %1864 = vst.msk [vmem:[#allocation2 + $0x8] sm:$0xff] %vm1862, %v1853
        %1865 = vst.msk [vmem:[#allocation2 + $0x10] sm:$0xff] %vm1862, %v1855
        %1866 = vst.msk [vmem:[#allocation2 + $0x18] sm:$0xff] %vm1862, %v1857
        %v1867 = vld [vmem:[#allocation6] sm:$0xf]
        %v1868 = vld [vmem:[#allocation6 + $0x4] sm:$0xf]
        %v1869 = vld [vmem:[#allocation6 + $0x8] sm:$0xf]
        %v1870 = vld [vmem:[#allocation6 + $0xc] sm:$0xf]
        %v1871 = vld [vmem:[#allocation6 + $0x10] sm:$0xf]
        %v1872 = vld [vmem:[#allocation6 + $0x14] sm:$0xf]
        %v1873 = vld [vmem:[#allocation6 + $0x18] sm:$0xf]
        %v1874 = vld [vmem:[#allocation6 + $0x1c] sm:$0xf]
        %v1875 = vld [vmem:[#allocation6 + $0x20] sm:$0xf]
        %v1876 = vld [vmem:[#allocation6 + $0x24] sm:$0xf]
        %v1877 = vld [vmem:[#allocation6 + $0x28] sm:$0xf]
        %v1878 = vld [vmem:[#allocation6 + $0x2c] sm:$0xf]
        %v1879 = vld [vmem:[#allocation6 + $0x30] sm:$0xf]
        %v1880 = vld [vmem:[#allocation6 + $0x34] sm:$0xf]
        %v1881 = vld [vmem:[#allocation6 + $0x38] sm:$0xf]
        %v1882 = vld [vmem:[#allocation6 + $0x3c] sm:$0xf]
        %v1883 = vld [vmem:[#allocation8] sm:$0xf]
        %v1884 = vld [vmem:[#allocation8 + $0x4] sm:$0xf]
        %v1885 = vld [vmem:[#allocation8 + $0x8] sm:$0xf]
        %v1886 = vld [vmem:[#allocation8 + $0xc] sm:$0xf]
        %v1887 = vld [vmem:[#allocation8 + $0x10] sm:$0xf]
        %v1888 = vld [vmem:[#allocation8 + $0x14] sm:$0xf]
        %v1889 = vld [vmem:[#allocation8 + $0x18] sm:$0xf]
        %v1890 = vld [vmem:[#allocation8 + $0x1c] sm:$0xf]
        %v1891 = vld [vmem:[#allocation8 + $0x20] sm:$0xf]
        %v1892 = vld [vmem:[#allocation8 + $0x24] sm:$0xf]
        %v1893 = vld [vmem:[#allocation8 + $0x28] sm:$0xf]
        %v1894 = vld [vmem:[#allocation8 + $0x2c] sm:$0xf]
        %v1895 = vld [vmem:[#allocation8 + $0x30] sm:$0xf]
        %v1896 = vld [vmem:[#allocation8 + $0x34] sm:$0xf]
        %v1897 = vld [vmem:[#allocation8 + $0x38] sm:$0xf]
        %v1898 = vld [vmem:[#allocation8 + $0x3c] sm:$0xf]
        %s1899 = scalar_lea.vmem %s666, 64 [#allocation9]
        %v1900 = vld [vmem:[%s1899] sm:$0xf]
        %v1901 = vld [vmem:[%s1899 + $0x4] sm:$0xf]
        %v1902 = vld [vmem:[%s1899 + $0x8] sm:$0xf]
        %v1903 = vld [vmem:[%s1899 + $0xc] sm:$0xf]
        %v1904 = vld [vmem:[%s1899 + $0x10] sm:$0xf]
        %v1905 = vld [vmem:[%s1899 + $0x14] sm:$0xf]
        %v1906 = vld [vmem:[%s1899 + $0x18] sm:$0xf]
        %v1907 = vld [vmem:[%s1899 + $0x1c] sm:$0xf]
        %v1908 = vunpack.c.l.bf16 %v1900
        %v1909 = vunpack.c.l.bf16 %v1901
        %v1910 = vunpack.c.l.bf16 %v1902
        %v1911 = vunpack.c.l.bf16 %v1903
        %v1912 = vunpack.c.l.bf16 %v1904
        %v1913 = vunpack.c.l.bf16 %v1905
        %v1914 = vunpack.c.l.bf16 %v1906
        %v1915 = vunpack.c.l.bf16 %v1907
        %1916 = vrot.lane.b32.xlu0 %v1028, 64
        %v1917 = vpop.permute.xlu0 %1916
        %1918 = vrot.lane.b32.xlu0 %v1029, 64
        %v1919 = vpop.permute.xlu0 %1918
        %1920 = vrot.lane.b32.xlu0 %v1030, 64
        %v1921 = vpop.permute.xlu0 %1920
        %1922 = vrot.lane.b32.xlu0 %v1031, 64
        %v1923 = vpop.permute.xlu0 %1922
        %v1940 = vunpack.c.l.b16 %v1867
        %v1941 = vunpack.c.l.b16 %v1868
        %v1942 = vunpack.c.l.b16 %v1869
        %v1943 = vunpack.c.l.b16 %v1870
        %v1944 = vunpack.c.l.b16 %v1871
        %v1945 = vunpack.c.l.b16 %v1872
        %v1946 = vunpack.c.l.b16 %v1873
        %v1947 = vunpack.c.l.b16 %v1874
        %v1948 = vunpack.c.l.b16 %v1875
        %v1949 = vunpack.c.l.b16 %v1876
        %v1950 = vunpack.c.l.b16 %v1877
        %v1951 = vunpack.c.l.b16 %v1878
        %v1952 = vunpack.c.l.b16 %v1879
        %v1953 = vunpack.c.l.b16 %v1880
        %v1954 = vunpack.c.l.b16 %v1881
        %v1955 = vunpack.c.l.b16 %v1882
        %v1956 = vpack.c.b16 %v1941, %v1940
        %v1957 = vpack.c.b16 %v1943, %v1942
        %v1958 = vpack.c.b16 %v1945, %v1944
        %v1959 = vpack.c.b16 %v1947, %v1946
        %v1960 = vpack.c.b16 %v1949, %v1948
        %v1961 = vpack.c.b16 %v1951, %v1950
        %v1962 = vpack.c.b16 %v1953, %v1952
        %v1963 = vpack.c.b16 %v1955, %v1954
        %1964 = vrot.lane.b32.xlu0 %v1956, 64
        %v1965 = vpop.permute.xlu0 %1964
        %1966 = vrot.lane.b32.xlu0 %v1957, 64
        %v1967 = vpop.permute.xlu0 %1966
        %1968 = vrot.lane.b32.xlu0 %v1958, 64
        %v1969 = vpop.permute.xlu0 %1968
        %1970 = vrot.lane.b32.xlu0 %v1959, 64
        %v1971 = vpop.permute.xlu0 %1970
        %1972 = vrot.lane.b32.xlu0 %v1960, 64
        %v1973 = vpop.permute.xlu0 %1972
        %1974 = vrot.lane.b32.xlu0 %v1961, 64
        %v1975 = vpop.permute.xlu0 %1974
        %1976 = vrot.lane.b32.xlu0 %v1962, 64
        %v1977 = vpop.permute.xlu0 %1976
        %1978 = vrot.lane.b32.xlu0 %v1963, 64
        %v1979 = vpop.permute.xlu0 %1978
        %v1981 = vsel %vm1120, %v1917, 0
        %v1984 = vsel %vm1120, %v1919, 0
        %v1987 = vsel %vm1120, %v1921, 0
        %v1990 = vsel %vm1120, %v1923, 0
        %v1993 = vsel %vm1120, %v1965, 0
        %v1996 = vsel %vm1120, %v1967, 0
        %v1999 = vsel %vm1120, %v1969, 0
        %v2002 = vsel %vm1120, %v1971, 0
        %v2005 = vsel %vm1120, %v1973, 0
        %v2008 = vsel %vm1120, %v1975, 0
        %v2011 = vsel %vm1120, %v1977, 0
        %v2014 = vsel %vm1120, %v1979, 0
        %2016 = vmatprep.subr.bf16.mxu0 0
        %2017 = vmatpush1.bf16.xpose.msra.mxu0 %v1993
        %2018 = vmatprep.subr.bf16.mxu0 0
        %2019 = vmatpush1.bf16.xpose.msra.mxu0 %v1996
        %2020 = vmatprep.subr.bf16.mxu0 0
        %2021 = vmatpush1.bf16.xpose.msra.mxu0 %v1999
        %2022 = vmatprep.subr.bf16.mxu0 0
        %2023 = vmatpush1.bf16.xpose.msra.mxu0 %v2002
        %2024 = vmatprep.subr.bf16.mxu0 0
        %2025 = vmatpush1.bf16.xpose.msra.mxu0 %v2005
        %2026 = vmatprep.subr.bf16.mxu0 0
        %2027 = vmatpush1.bf16.xpose.msra.mxu0 %v2008
        %2028 = vmatprep.subr.bf16.mxu0 0
        %2029 = vmatpush1.bf16.xpose.msra.mxu0 %v2011
        %2030 = vmatprep.subr.bf16.mxu0 0
        %2031 = vmatpush1.bf16.xpose.msra.mxu0 %v2014
        %2032 = vmatprep.subr.bf16.mxu0 0
        %2033 = vmatpush1.bf16.xpose.msra.mxu0 0
        %2034 = vmatprep.subr.bf16.mxu0 0
        %2035 = vmatpush1.bf16.xpose.msra.mxu0 0
        %2036 = vmatprep.subr.bf16.mxu0 0
        %2037 = vmatpush1.bf16.xpose.msra.mxu0 0
        %2038 = vmatprep.subr.bf16.mxu0 0
        %2039 = vmatpush1.bf16.xpose.msra.mxu0 0
        %2040 = vmatprep.subr.bf16.mxu0 0
        %2041 = vmatpush1.bf16.xpose.msra.mxu0 0
        %2042 = vmatprep.subr.bf16.mxu0 0
        %2043 = vmatpush1.bf16.xpose.msra.mxu0 0
        %2044 = vmatprep.subr.bf16.mxu0 0
        %2045 = vmatpush1.bf16.xpose.msra.mxu0 0
        %2046 = vmatprep.subr.bf16.mxu0 0
        %2047 = vmatpush1.bf16.xpose.msra.mxu0 0
        %2048 = vmatprep.mubr.bf16.mxu0 0
        %2049 = vmatmul.mubr.bf16.gmra.mrb[0].mxu0 %v1981
        %v2050 = vpop.f32.mrb[0].mxu0
        %v2051 = vadd.f32 %v1908, %v2050
        %v2052 = vpop.f32.mrb[0].mxu0
        %v2053 = vpop.f32.mrb[0].mxu0
        %v2054 = vadd.f32 %v1909, %v2053
        %v2055 = vpop.f32.mrb[0].mxu0
        %2056 = vmatprep.mubr.bf16.mxu0 0
        %2057 = vmatmul.mubr.bf16.gmra.mrb[0].mxu0 %v1984
        %v2058 = vpop.f32.mrb[0].mxu0
        %v2059 = vadd.f32 %v1910, %v2058
        %v2060 = vpop.f32.mrb[0].mxu0
        %v2061 = vpop.f32.mrb[0].mxu0
        %v2062 = vadd.f32 %v1911, %v2061
        %v2063 = vpop.f32.mrb[0].mxu0
        %2064 = vmatprep.mubr.bf16.mxu0 0
        %2065 = vmatmul.mubr.bf16.gmra.mrb[0].mxu0 %v1987
        %v2066 = vpop.f32.mrb[0].mxu0
        %v2067 = vadd.f32 %v1912, %v2066
        %v2068 = vpop.f32.mrb[0].mxu0
        %v2069 = vpop.f32.mrb[0].mxu0
        %v2070 = vadd.f32 %v1913, %v2069
        %v2071 = vpop.f32.mrb[0].mxu0
        %2072 = vmatprep.mubr.bf16.mxu0 0
        %2073 = vmatmul.mubr.bf16.gmra.mrb[0].mxu0 %v1990
        %v2074 = vpop.f32.mrb[0].mxu0
        %v2075 = vadd.f32 %v1914, %v2074
        %v2076 = vpop.f32.mrb[0].mxu0
        %v2077 = vpop.f32.mrb[0].mxu0
        %v2078 = vadd.f32 %v1915, %v2077
        %v2079 = vpop.f32.mrb[0].mxu0
        %2080 = vdwg.mxu0
        %2081 = vmax.xlane.f32.xlu0 %v2051
        %v2082 = vpop.xlane.xlu0 %2081
        %2083 = vmax.xlane.f32.xlu0 %v2054
        %v2084 = vpop.xlane.xlu0 %2083
        %2085 = vmax.xlane.f32.xlu0 %v2059
        %v2086 = vpop.xlane.xlu0 %2085
        %2087 = vmax.xlane.f32.xlu0 %v2062
        %v2088 = vpop.xlane.xlu0 %2087
        %2089 = vmax.xlane.f32.xlu0 %v2067
        %v2090 = vpop.xlane.xlu0 %2089
        %2091 = vmax.xlane.f32.xlu0 %v2070
        %v2092 = vpop.xlane.xlu0 %2091
        %2093 = vmax.xlane.f32.xlu0 %v2075
        %v2094 = vpop.xlane.xlu0 %2093
        %2095 = vmax.xlane.f32.xlu0 %v2078
        %v2096 = vpop.xlane.xlu0 %2095
        %v2097 = vsub.f32 %v2051, %v2082
        %v2098 = vsub.f32 %v2054, %v2084
        %v2099 = vsub.f32 %v2059, %v2086
        %v2100 = vsub.f32 %v2062, %v2088
        %v2101 = vsub.f32 %v2067, %v2090
        %v2102 = vsub.f32 %v2070, %v2092
        %v2103 = vsub.f32 %v2075, %v2094
        %v2104 = vsub.f32 %v2078, %v2096
        %v2105 = vmul.f32 %v2097, 1.442695
        %v2106 = vpow.pop %v2105
        %v2107 = vmul.f32 %v2098, 1.442695
        %v2108 = vpow.pop %v2107
        %v2109 = vmul.f32 %v2099, 1.442695
        %v2110 = vpow.pop %v2109
        %v2111 = vmul.f32 %v2100, 1.442695
        %v2112 = vpow.pop %v2111
        %v2113 = vmul.f32 %v2101, 1.442695
        %v2114 = vpow.pop %v2113
        %v2115 = vmul.f32 %v2102, 1.442695
        %v2116 = vpow.pop %v2115
        %v2117 = vmul.f32 %v2103, 1.442695
        %v2118 = vpow.pop %v2117
        %v2119 = vmul.f32 %v2104, 1.442695
        %v2120 = vpow.pop %v2119
        %2121 = vadd.xlane.f32.xlu0 %v2106
        %v2122 = vpop.xlane.xlu0 %2121
        %2123 = vadd.xlane.f32.xlu0 %v2108
        %v2124 = vpop.xlane.xlu0 %2123
        %2125 = vadd.xlane.f32.xlu0 %v2110
        %v2126 = vpop.xlane.xlu0 %2125
        %2127 = vadd.xlane.f32.xlu0 %v2112
        %v2128 = vpop.xlane.xlu0 %2127
        %2129 = vadd.xlane.f32.xlu0 %v2114
        %v2130 = vpop.xlane.xlu0 %2129
        %2131 = vadd.xlane.f32.xlu0 %v2116
        %v2132 = vpop.xlane.xlu0 %2131
        %2133 = vadd.xlane.f32.xlu0 %v2118
        %v2134 = vpop.xlane.xlu0 %2133
        %2135 = vadd.xlane.f32.xlu0 %v2120
        %v2136 = vpop.xlane.xlu0 %2135
        %v2137 = vrcp.pop %v2122
        %v2138 = vrcp.pop %v2124
        %v2139 = vrcp.pop %v2126
        %v2140 = vrcp.pop %v2128
        %v2141 = vrcp.pop %v2130
        %v2142 = vrcp.pop %v2132
        %v2143 = vrcp.pop %v2134
        %v2144 = vrcp.pop %v2136
        %v2145 = vmul.f32 %v2106, %v2137
        %v2146 = vmul.f32 %v2108, %v2138
        %v2147 = vmul.f32 %v2110, %v2139
        %v2148 = vmul.f32 %v2112, %v2140
        %v2149 = vmul.f32 %v2114, %v2141
        %v2150 = vmul.f32 %v2116, %v2142
        %v2151 = vmul.f32 %v2118, %v2143
        %v2152 = vmul.f32 %v2120, %v2144
        %v2153 = vpack.c.bf16 %v2146, %v2145
        %v2154 = vpack.c.bf16 %v2148, %v2147
        %v2155 = vpack.c.bf16 %v2150, %v2149
        %v2156 = vpack.c.bf16 %v2152, %v2151
        %v2173 = vunpack.c.l.b16 %v1883
        %v2174 = vunpack.c.l.b16 %v1884
        %v2175 = vunpack.c.l.b16 %v1885
        %v2176 = vunpack.c.l.b16 %v1886
        %v2177 = vunpack.c.l.b16 %v1887
        %v2178 = vunpack.c.l.b16 %v1888
        %v2179 = vunpack.c.l.b16 %v1889
        %v2180 = vunpack.c.l.b16 %v1890
        %v2181 = vunpack.c.l.b16 %v1891
        %v2182 = vunpack.c.l.b16 %v1892
        %v2183 = vunpack.c.l.b16 %v1893
        %v2184 = vunpack.c.l.b16 %v1894
        %v2185 = vunpack.c.l.b16 %v1895
        %v2186 = vunpack.c.l.b16 %v1896
        %v2187 = vunpack.c.l.b16 %v1897
        %v2188 = vunpack.c.l.b16 %v1898
        %v2189 = vpack.c.b16 %v2174, %v2173
        %v2190 = vpack.c.b16 %v2176, %v2175
        %v2191 = vpack.c.b16 %v2178, %v2177
        %v2192 = vpack.c.b16 %v2180, %v2179
        %v2193 = vpack.c.b16 %v2182, %v2181
        %v2194 = vpack.c.b16 %v2184, %v2183
        %v2195 = vpack.c.b16 %v2186, %v2185
        %v2196 = vpack.c.b16 %v2188, %v2187
        %2197 = vrot.lane.b32.xlu0 %v2189, 64
        %v2198 = vpop.permute.xlu0 %2197
        %2199 = vrot.lane.b32.xlu0 %v2190, 64
        %v2200 = vpop.permute.xlu0 %2199
        %2201 = vrot.lane.b32.xlu0 %v2191, 64
        %v2202 = vpop.permute.xlu0 %2201
        %2203 = vrot.lane.b32.xlu0 %v2192, 64
        %v2204 = vpop.permute.xlu0 %2203
        %2205 = vrot.lane.b32.xlu0 %v2193, 64
        %v2206 = vpop.permute.xlu0 %2205
        %2207 = vrot.lane.b32.xlu0 %v2194, 64
        %v2208 = vpop.permute.xlu0 %2207
        %2209 = vrot.lane.b32.xlu0 %v2195, 64
        %v2210 = vpop.permute.xlu0 %2209
        %2211 = vrot.lane.b32.xlu0 %v2196, 64
        %v2212 = vpop.permute.xlu0 %2211
        %2221 = vmatprep.subr.bf16.mxu0 0
        %2222 = vmatpush1.bf16.msra.mxu0 %v2198
        %2223 = vmatprep.subr.bf16.mxu0 0
        %2224 = vmatpush1.bf16.msra.mxu0 %v2200
        %2225 = vmatprep.subr.bf16.mxu0 0
        %2226 = vmatpush1.bf16.msra.mxu0 %v2202
        %2227 = vmatprep.subr.bf16.mxu0 0
        %2228 = vmatpush1.bf16.msra.mxu0 %v2204
        %2229 = vmatprep.subr.bf16.mxu0 0
        %2230 = vmatpush1.bf16.msra.mxu0 %v2206
        %2231 = vmatprep.subr.bf16.mxu0 0
        %2232 = vmatpush1.bf16.msra.mxu0 %v2208
        %2233 = vmatprep.subr.bf16.mxu0 0
        %2234 = vmatpush1.bf16.msra.mxu0 %v2210
        %2235 = vmatprep.subr.bf16.mxu0 0
        %2236 = vmatpush1.bf16.msra.mxu0 %v2212
        %2237 = vmatprep.subr.bf16.mxu0 0
        %2238 = vmatpush1.bf16.msra.mxu0 0
        %2239 = vmatprep.subr.bf16.mxu0 0
        %2240 = vmatpush1.bf16.msra.mxu0 0
        %2241 = vmatprep.subr.bf16.mxu0 0
        %2242 = vmatpush1.bf16.msra.mxu0 0
        %2243 = vmatprep.subr.bf16.mxu0 0
        %2244 = vmatpush1.bf16.msra.mxu0 0
        %2245 = vmatprep.subr.bf16.mxu0 0
        %2246 = vmatpush1.bf16.msra.mxu0 0
        %2247 = vmatprep.subr.bf16.mxu0 0
        %2248 = vmatpush1.bf16.msra.mxu0 0
        %2249 = vmatprep.subr.bf16.mxu0 0
        %2250 = vmatpush1.bf16.msra.mxu0 0
        %2251 = vmatprep.subr.bf16.mxu0 0
        %2252 = vmatpush1.bf16.msra.mxu0 0
        %2253 = vmatprep.mubr.bf16.mxu0 0
        %2254 = vmatmul.mubr.bf16.gmra.mrb[0].mxu0 %v2153
        %v2255 = vpop.f32.mrb[0].mxu0
        %v2256 = vadd.f32 0.0, %v2255
        %v2257 = vpop.f32.mrb[0].mxu0
        %v2258 = vpop.f32.mrb[0].mxu0
        %v2259 = vadd.f32 0.0, %v2258
        %v2260 = vpop.f32.mrb[0].mxu0
        %2261 = vmatprep.mubr.bf16.mxu0 0
        %2262 = vmatmul.mubr.bf16.gmra.mrb[0].mxu0 %v2154
        %v2263 = vpop.f32.mrb[0].mxu0
        %v2264 = vadd.f32 0.0, %v2263
        %v2265 = vpop.f32.mrb[0].mxu0
        %v2266 = vpop.f32.mrb[0].mxu0
        %v2267 = vadd.f32 0.0, %v2266
        %v2268 = vpop.f32.mrb[0].mxu0
        %2269 = vmatprep.mubr.bf16.mxu0 0
        %2270 = vmatmul.mubr.bf16.gmra.mrb[0].mxu0 %v2155
        %v2271 = vpop.f32.mrb[0].mxu0
        %v2272 = vadd.f32 0.0, %v2271
        %v2273 = vpop.f32.mrb[0].mxu0
        %v2274 = vpop.f32.mrb[0].mxu0
        %v2275 = vadd.f32 0.0, %v2274
        %v2276 = vpop.f32.mrb[0].mxu0
        %2277 = vmatprep.mubr.bf16.mxu0 0
        %2278 = vmatmul.mubr.bf16.gmra.mrb[0].mxu0 %v2156
        %v2279 = vpop.f32.mrb[0].mxu0
        %v2280 = vadd.f32 0.0, %v2279
        %v2281 = vpop.f32.mrb[0].mxu0
        %v2282 = vpop.f32.mrb[0].mxu0
        %v2283 = vadd.f32 0.0, %v2282
        %v2284 = vpop.f32.mrb[0].mxu0
        %2285 = vdwg.mxu0
        %v2286 = vpack.c.bf16 %v2259, %v2256
        %v2287 = vpack.c.bf16 %v2267, %v2264
        %v2288 = vpack.c.bf16 %v2275, %v2272
        %v2289 = vpack.c.bf16 %v2283, %v2280
        %2294 = vrot.lane.b32.xlu0 %v2286, 64
        %v2295 = vpop.permute.xlu0 %2294
        %2296 = vrot.lane.b32.xlu0 %v2287, 64
        %v2297 = vpop.permute.xlu0 %2296
        %2298 = vrot.lane.b32.xlu0 %v2288, 64
        %v2299 = vpop.permute.xlu0 %2298
        %2300 = vrot.lane.b32.xlu0 %v2289, 64
        %v2301 = vpop.permute.xlu0 %2300
        %vm2306 = vcmask 785920
        %2307 = vst.msk [vmem:[#allocation2] sm:$0xff] %vm2306, %v2295
        %2308 = vst.msk [vmem:[#allocation2 + $0x8] sm:$0xff] %vm2306, %v2297
        %2309 = vst.msk [vmem:[#allocation2 + $0x10] sm:$0xff] %vm2306, %v2299
        %2310 = vst.msk [vmem:[#allocation2 + $0x18] sm:$0xff] %vm2306, %v2301
        %v2311 = vld [vmem:[#allocation6] sm:$0xf]
        %v2312 = vld [vmem:[#allocation6 + $0x4] sm:$0xf]
        %v2313 = vld [vmem:[#allocation6 + $0x8] sm:$0xf]
        %v2314 = vld [vmem:[#allocation6 + $0xc] sm:$0xf]
        %v2315 = vld [vmem:[#allocation6 + $0x10] sm:$0xf]
        %v2316 = vld [vmem:[#allocation6 + $0x14] sm:$0xf]
        %v2317 = vld [vmem:[#allocation6 + $0x18] sm:$0xf]
        %v2318 = vld [vmem:[#allocation6 + $0x1c] sm:$0xf]
        %v2319 = vld [vmem:[#allocation6 + $0x20] sm:$0xf]
        %v2320 = vld [vmem:[#allocation6 + $0x24] sm:$0xf]
        %v2321 = vld [vmem:[#allocation6 + $0x28] sm:$0xf]
        %v2322 = vld [vmem:[#allocation6 + $0x2c] sm:$0xf]
        %v2323 = vld [vmem:[#allocation6 + $0x30] sm:$0xf]
        %v2324 = vld [vmem:[#allocation6 + $0x34] sm:$0xf]
        %v2325 = vld [vmem:[#allocation6 + $0x38] sm:$0xf]
        %v2326 = vld [vmem:[#allocation6 + $0x3c] sm:$0xf]
        %v2327 = vld [vmem:[#allocation8] sm:$0xf]
        %v2328 = vld [vmem:[#allocation8 + $0x4] sm:$0xf]
        %v2329 = vld [vmem:[#allocation8 + $0x8] sm:$0xf]
        %v2330 = vld [vmem:[#allocation8 + $0xc] sm:$0xf]
        %v2331 = vld [vmem:[#allocation8 + $0x10] sm:$0xf]
        %v2332 = vld [vmem:[#allocation8 + $0x14] sm:$0xf]
        %v2333 = vld [vmem:[#allocation8 + $0x18] sm:$0xf]
        %v2334 = vld [vmem:[#allocation8 + $0x1c] sm:$0xf]
        %v2335 = vld [vmem:[#allocation8 + $0x20] sm:$0xf]
        %v2336 = vld [vmem:[#allocation8 + $0x24] sm:$0xf]
        %v2337 = vld [vmem:[#allocation8 + $0x28] sm:$0xf]
        %v2338 = vld [vmem:[#allocation8 + $0x2c] sm:$0xf]
        %v2339 = vld [vmem:[#allocation8 + $0x30] sm:$0xf]
        %v2340 = vld [vmem:[#allocation8 + $0x34] sm:$0xf]
        %v2341 = vld [vmem:[#allocation8 + $0x38] sm:$0xf]
        %v2342 = vld [vmem:[#allocation8 + $0x3c] sm:$0xf]
        %s2343 = scalar_lea.vmem %s666, 96 [#allocation9]
        %v2344 = vld [vmem:[%s2343] sm:$0xf]
        %v2345 = vld [vmem:[%s2343 + $0x4] sm:$0xf]
        %v2346 = vld [vmem:[%s2343 + $0x8] sm:$0xf]
        %v2347 = vld [vmem:[%s2343 + $0xc] sm:$0xf]
        %v2348 = vld [vmem:[%s2343 + $0x10] sm:$0xf]
        %v2349 = vld [vmem:[%s2343 + $0x14] sm:$0xf]
        %v2350 = vld [vmem:[%s2343 + $0x18] sm:$0xf]
        %v2351 = vld [vmem:[%s2343 + $0x1c] sm:$0xf]
        %v2352 = vunpack.c.l.bf16 %v2344
        %v2353 = vunpack.c.l.bf16 %v2345
        %v2354 = vunpack.c.l.bf16 %v2346
        %v2355 = vunpack.c.l.bf16 %v2347
        %v2356 = vunpack.c.l.bf16 %v2348
        %v2357 = vunpack.c.l.bf16 %v2349
        %v2358 = vunpack.c.l.bf16 %v2350
        %v2359 = vunpack.c.l.bf16 %v2351
        %2360 = vrot.lane.b32.xlu0 %v1028, 32
        %v2361 = vpop.permute.xlu0 %2360
        %2362 = vrot.lane.b32.xlu0 %v1029, 32
        %v2363 = vpop.permute.xlu0 %2362
        %2364 = vrot.lane.b32.xlu0 %v1030, 32
        %v2365 = vpop.permute.xlu0 %2364
        %2366 = vrot.lane.b32.xlu0 %v1031, 32
        %v2367 = vpop.permute.xlu0 %2366
        %v2384 = vunpack.c.l.b16 %v2311
        %v2385 = vunpack.c.l.b16 %v2312
        %v2386 = vunpack.c.l.b16 %v2313
        %v2387 = vunpack.c.l.b16 %v2314
        %v2388 = vunpack.c.l.b16 %v2315
        %v2389 = vunpack.c.l.b16 %v2316
        %v2390 = vunpack.c.l.b16 %v2317
        %v2391 = vunpack.c.l.b16 %v2318
        %v2392 = vunpack.c.l.b16 %v2319
        %v2393 = vunpack.c.l.b16 %v2320
        %v2394 = vunpack.c.l.b16 %v2321
        %v2395 = vunpack.c.l.b16 %v2322
        %v2396 = vunpack.c.l.b16 %v2323
        %v2397 = vunpack.c.l.b16 %v2324
        %v2398 = vunpack.c.l.b16 %v2325
        %v2399 = vunpack.c.l.b16 %v2326
        %v2400 = vpack.c.b16 %v2385, %v2384
        %v2401 = vpack.c.b16 %v2387, %v2386
        %v2402 = vpack.c.b16 %v2389, %v2388
        %v2403 = vpack.c.b16 %v2391, %v2390
        %v2404 = vpack.c.b16 %v2393, %v2392
        %v2405 = vpack.c.b16 %v2395, %v2394
        %v2406 = vpack.c.b16 %v2397, %v2396
        %v2407 = vpack.c.b16 %v2399, %v2398
        %2408 = vrot.lane.b32.xlu0 %v2400, 32
        %v2409 = vpop.permute.xlu0 %2408
        %2410 = vrot.lane.b32.xlu0 %v2401, 32
        %v2411 = vpop.permute.xlu0 %2410
        %2412 = vrot.lane.b32.xlu0 %v2402, 32
        %v2413 = vpop.permute.xlu0 %2412
        %2414 = vrot.lane.b32.xlu0 %v2403, 32
        %v2415 = vpop.permute.xlu0 %2414
        %2416 = vrot.lane.b32.xlu0 %v2404, 32
        %v2417 = vpop.permute.xlu0 %2416
        %2418 = vrot.lane.b32.xlu0 %v2405, 32
        %v2419 = vpop.permute.xlu0 %2418
        %2420 = vrot.lane.b32.xlu0 %v2406, 32
        %v2421 = vpop.permute.xlu0 %2420
        %2422 = vrot.lane.b32.xlu0 %v2407, 32
        %v2423 = vpop.permute.xlu0 %2422
        %v2425 = vsel %vm1120, %v2361, 0
        %v2428 = vsel %vm1120, %v2363, 0
        %v2431 = vsel %vm1120, %v2365, 0
        %v2434 = vsel %vm1120, %v2367, 0
        %v2437 = vsel %vm1120, %v2409, 0
        %v2440 = vsel %vm1120, %v2411, 0
        %v2443 = vsel %vm1120, %v2413, 0
        %v2446 = vsel %vm1120, %v2415, 0
        %v2449 = vsel %vm1120, %v2417, 0
        %v2452 = vsel %vm1120, %v2419, 0
        %v2455 = vsel %vm1120, %v2421, 0
        %v2458 = vsel %vm1120, %v2423, 0
        %2460 = vmatprep.subr.bf16.mxu0 0
        %2461 = vmatpush1.bf16.xpose.msra.mxu0 %v2437
        %2462 = vmatprep.subr.bf16.mxu0 0
        %2463 = vmatpush1.bf16.xpose.msra.mxu0 %v2440
        %2464 = vmatprep.subr.bf16.mxu0 0
        %2465 = vmatpush1.bf16.xpose.msra.mxu0 %v2443
        %2466 = vmatprep.subr.bf16.mxu0 0
        %2467 = vmatpush1.bf16.xpose.msra.mxu0 %v2446
        %2468 = vmatprep.subr.bf16.mxu0 0
        %2469 = vmatpush1.bf16.xpose.msra.mxu0 %v2449
        %2470 = vmatprep.subr.bf16.mxu0 0
        %2471 = vmatpush1.bf16.xpose.msra.mxu0 %v2452
        %2472 = vmatprep.subr.bf16.mxu0 0
        %2473 = vmatpush1.bf16.xpose.msra.mxu0 %v2455
        %2474 = vmatprep.subr.bf16.mxu0 0
        %2475 = vmatpush1.bf16.xpose.msra.mxu0 %v2458
        %2476 = vmatprep.subr.bf16.mxu0 0
        %2477 = vmatpush1.bf16.xpose.msra.mxu0 0
        %2478 = vmatprep.subr.bf16.mxu0 0
        %2479 = vmatpush1.bf16.xpose.msra.mxu0 0
        %2480 = vmatprep.subr.bf16.mxu0 0
        %2481 = vmatpush1.bf16.xpose.msra.mxu0 0
        %2482 = vmatprep.subr.bf16.mxu0 0
        %2483 = vmatpush1.bf16.xpose.msra.mxu0 0
        %2484 = vmatprep.subr.bf16.mxu0 0
        %2485 = vmatpush1.bf16.xpose.msra.mxu0 0
        %2486 = vmatprep.subr.bf16.mxu0 0
        %2487 = vmatpush1.bf16.xpose.msra.mxu0 0
        %2488 = vmatprep.subr.bf16.mxu0 0
        %2489 = vmatpush1.bf16.xpose.msra.mxu0 0
        %2490 = vmatprep.subr.bf16.mxu0 0
        %2491 = vmatpush1.bf16.xpose.msra.mxu0 0
        %2492 = vmatprep.mubr.bf16.mxu0 0
        %2493 = vmatmul.mubr.bf16.gmra.mrb[0].mxu0 %v2425
        %v2494 = vpop.f32.mrb[0].mxu0
        %v2495 = vadd.f32 %v2352, %v2494
        %v2496 = vpop.f32.mrb[0].mxu0
        %v2497 = vpop.f32.mrb[0].mxu0
        %v2498 = vadd.f32 %v2353, %v2497
        %v2499 = vpop.f32.mrb[0].mxu0
        %2500 = vmatprep.mubr.bf16.mxu0 0
        %2501 = vmatmul.mubr.bf16.gmra.mrb[0].mxu0 %v2428
        %v2502 = vpop.f32.mrb[0].mxu0
        %v2503 = vadd.f32 %v2354, %v2502
        %v2504 = vpop.f32.mrb[0].mxu0
        %v2505 = vpop.f32.mrb[0].mxu0
        %v2506 = vadd.f32 %v2355, %v2505
        %v2507 = vpop.f32.mrb[0].mxu0
        %2508 = vmatprep.mubr.bf16.mxu0 0
        %2509 = vmatmul.mubr.bf16.gmra.mrb[0].mxu0 %v2431
        %v2510 = vpop.f32.mrb[0].mxu0
        %v2511 = vadd.f32 %v2356, %v2510
        %v2512 = vpop.f32.mrb[0].mxu0
        %v2513 = vpop.f32.mrb[0].mxu0
        %v2514 = vadd.f32 %v2357, %v2513
        %v2515 = vpop.f32.mrb[0].mxu0
        %2516 = vmatprep.mubr.bf16.mxu0 0
        %2517 = vmatmul.mubr.bf16.gmra.mrb[0].mxu0 %v2434
        %v2518 = vpop.f32.mrb[0].mxu0
        %v2519 = vadd.f32 %v2358, %v2518
        %v2520 = vpop.f32.mrb[0].mxu0
        %v2521 = vpop.f32.mrb[0].mxu0
        %v2522 = vadd.f32 %v2359, %v2521
        %v2523 = vpop.f32.mrb[0].mxu0
        %2524 = vdwg.mxu0
        %2525 = vmax.xlane.f32.xlu0 %v2495
        %v2526 = vpop.xlane.xlu0 %2525
        %2527 = vmax.xlane.f32.xlu0 %v2498
        %v2528 = vpop.xlane.xlu0 %2527
        %2529 = vmax.xlane.f32.xlu0 %v2503
        %v2530 = vpop.xlane.xlu0 %2529
        %2531 = vmax.xlane.f32.xlu0 %v2506
        %v2532 = vpop.xlane.xlu0 %2531
        %2533 = vmax.xlane.f32.xlu0 %v2511
        %v2534 = vpop.xlane.xlu0 %2533
        %2535 = vmax.xlane.f32.xlu0 %v2514
        %v2536 = vpop.xlane.xlu0 %2535
        %2537 = vmax.xlane.f32.xlu0 %v2519
        %v2538 = vpop.xlane.xlu0 %2537
        %2539 = vmax.xlane.f32.xlu0 %v2522
        %v2540 = vpop.xlane.xlu0 %2539
        %v2541 = vsub.f32 %v2495, %v2526
        %v2542 = vsub.f32 %v2498, %v2528
        %v2543 = vsub.f32 %v2503, %v2530
        %v2544 = vsub.f32 %v2506, %v2532
        %v2545 = vsub.f32 %v2511, %v2534
        %v2546 = vsub.f32 %v2514, %v2536
        %v2547 = vsub.f32 %v2519, %v2538
        %v2548 = vsub.f32 %v2522, %v2540
        %v2549 = vmul.f32 %v2541, 1.442695
        %v2550 = vpow.pop %v2549
        %v2551 = vmul.f32 %v2542, 1.442695
        %v2552 = vpow.pop %v2551
        %v2553 = vmul.f32 %v2543, 1.442695
        %v2554 = vpow.pop %v2553
        %v2555 = vmul.f32 %v2544, 1.442695
        %v2556 = vpow.pop %v2555
        %v2557 = vmul.f32 %v2545, 1.442695
        %v2558 = vpow.pop %v2557
        %v2559 = vmul.f32 %v2546, 1.442695
        %v2560 = vpow.pop %v2559
        %v2561 = vmul.f32 %v2547, 1.442695
        %v2562 = vpow.pop %v2561
        %v2563 = vmul.f32 %v2548, 1.442695
        %v2564 = vpow.pop %v2563
        %2565 = vadd.xlane.f32.xlu0 %v2550
        %v2566 = vpop.xlane.xlu0 %2565
        %2567 = vadd.xlane.f32.xlu0 %v2552
        %v2568 = vpop.xlane.xlu0 %2567
        %2569 = vadd.xlane.f32.xlu0 %v2554
        %v2570 = vpop.xlane.xlu0 %2569
        %2571 = vadd.xlane.f32.xlu0 %v2556
        %v2572 = vpop.xlane.xlu0 %2571
        %2573 = vadd.xlane.f32.xlu0 %v2558
        %v2574 = vpop.xlane.xlu0 %2573
        %2575 = vadd.xlane.f32.xlu0 %v2560
        %v2576 = vpop.xlane.xlu0 %2575
        %2577 = vadd.xlane.f32.xlu0 %v2562
        %v2578 = vpop.xlane.xlu0 %2577
        %2579 = vadd.xlane.f32.xlu0 %v2564
        %v2580 = vpop.xlane.xlu0 %2579
        %v2581 = vrcp.pop %v2566
        %v2582 = vrcp.pop %v2568
        %v2583 = vrcp.pop %v2570
        %v2584 = vrcp.pop %v2572
        %v2585 = vrcp.pop %v2574
        %v2586 = vrcp.pop %v2576
        %v2587 = vrcp.pop %v2578
        %v2588 = vrcp.pop %v2580
        %v2589 = vmul.f32 %v2550, %v2581
        %v2590 = vmul.f32 %v2552, %v2582
        %v2591 = vmul.f32 %v2554, %v2583
        %v2592 = vmul.f32 %v2556, %v2584
        %v2593 = vmul.f32 %v2558, %v2585
        %v2594 = vmul.f32 %v2560, %v2586
        %v2595 = vmul.f32 %v2562, %v2587
        %v2596 = vmul.f32 %v2564, %v2588
        %v2597 = vpack.c.bf16 %v2590, %v2589
        %v2598 = vpack.c.bf16 %v2592, %v2591
        %v2599 = vpack.c.bf16 %v2594, %v2593
        %v2600 = vpack.c.bf16 %v2596, %v2595
        %v2617 = vunpack.c.l.b16 %v2327
        %v2618 = vunpack.c.l.b16 %v2328
        %v2619 = vunpack.c.l.b16 %v2329
        %v2620 = vunpack.c.l.b16 %v2330
        %v2621 = vunpack.c.l.b16 %v2331
        %v2622 = vunpack.c.l.b16 %v2332
        %v2623 = vunpack.c.l.b16 %v2333
        %v2624 = vunpack.c.l.b16 %v2334
        %v2625 = vunpack.c.l.b16 %v2335
        %v2626 = vunpack.c.l.b16 %v2336
        %v2627 = vunpack.c.l.b16 %v2337
        %v2628 = vunpack.c.l.b16 %v2338
        %v2629 = vunpack.c.l.b16 %v2339
        %v2630 = vunpack.c.l.b16 %v2340
        %v2631 = vunpack.c.l.b16 %v2341
        %v2632 = vunpack.c.l.b16 %v2342
        %v2633 = vpack.c.b16 %v2618, %v2617
        %v2634 = vpack.c.b16 %v2620, %v2619
        %v2635 = vpack.c.b16 %v2622, %v2621
        %v2636 = vpack.c.b16 %v2624, %v2623
        %v2637 = vpack.c.b16 %v2626, %v2625
        %v2638 = vpack.c.b16 %v2628, %v2627
        %v2639 = vpack.c.b16 %v2630, %v2629
        %v2640 = vpack.c.b16 %v2632, %v2631
        %2641 = vrot.lane.b32.xlu0 %v2633, 32
        %v2642 = vpop.permute.xlu0 %2641
        %2643 = vrot.lane.b32.xlu0 %v2634, 32
        %v2644 = vpop.permute.xlu0 %2643
        %2645 = vrot.lane.b32.xlu0 %v2635, 32
        %v2646 = vpop.permute.xlu0 %2645
        %2647 = vrot.lane.b32.xlu0 %v2636, 32
        %v2648 = vpop.permute.xlu0 %2647
        %2649 = vrot.lane.b32.xlu0 %v2637, 32
        %v2650 = vpop.permute.xlu0 %2649
        %2651 = vrot.lane.b32.xlu0 %v2638, 32
        %v2652 = vpop.permute.xlu0 %2651
        %2653 = vrot.lane.b32.xlu0 %v2639, 32
        %v2654 = vpop.permute.xlu0 %2653
        %2655 = vrot.lane.b32.xlu0 %v2640, 32
        %v2656 = vpop.permute.xlu0 %2655
        %2665 = vmatprep.subr.bf16.mxu0 0
        %2666 = vmatpush1.bf16.msra.mxu0 %v2642
        %2667 = vmatprep.subr.bf16.mxu0 0
        %2668 = vmatpush1.bf16.msra.mxu0 %v2644
        %2669 = vmatprep.subr.bf16.mxu0 0
        %2670 = vmatpush1.bf16.msra.mxu0 %v2646
        %2671 = vmatprep.subr.bf16.mxu0 0
        %2672 = vmatpush1.bf16.msra.mxu0 %v2648
        %2673 = vmatprep.subr.bf16.mxu0 0
        %2674 = vmatpush1.bf16.msra.mxu0 %v2650
        %2675 = vmatprep.subr.bf16.mxu0 0
        %2676 = vmatpush1.bf16.msra.mxu0 %v2652
        %2677 = vmatprep.subr.bf16.mxu0 0
        %2678 = vmatpush1.bf16.msra.mxu0 %v2654
        %2679 = vmatprep.subr.bf16.mxu0 0
        %2680 = vmatpush1.bf16.msra.mxu0 %v2656
        %2681 = vmatprep.subr.bf16.mxu0 0
        %2682 = vmatpush1.bf16.msra.mxu0 0
        %2683 = vmatprep.subr.bf16.mxu0 0
        %2684 = vmatpush1.bf16.msra.mxu0 0
        %2685 = vmatprep.subr.bf16.mxu0 0
        %2686 = vmatpush1.bf16.msra.mxu0 0
        %2687 = vmatprep.subr.bf16.mxu0 0
        %2688 = vmatpush1.bf16.msra.mxu0 0
        %2689 = vmatprep.subr.bf16.mxu0 0
        %2690 = vmatpush1.bf16.msra.mxu0 0
        %2691 = vmatprep.subr.bf16.mxu0 0
        %2692 = vmatpush1.bf16.msra.mxu0 0
        %2693 = vmatprep.subr.bf16.mxu0 0
        %2694 = vmatpush1.bf16.msra.mxu0 0
        %2695 = vmatprep.subr.bf16.mxu0 0
        %2696 = vmatpush1.bf16.msra.mxu0 0
        %2697 = vmatprep.mubr.bf16.mxu0 0
        %2698 = vmatmul.mubr.bf16.gmra.mrb[0].mxu0 %v2597
        %v2699 = vpop.f32.mrb[0].mxu0
        %v2700 = vadd.f32 0.0, %v2699
        %v2701 = vpop.f32.mrb[0].mxu0
        %v2702 = vpop.f32.mrb[0].mxu0
        %v2703 = vadd.f32 0.0, %v2702
        %v2704 = vpop.f32.mrb[0].mxu0
        %2705 = vmatprep.mubr.bf16.mxu0 0
        %2706 = vmatmul.mubr.bf16.gmra.mrb[0].mxu0 %v2598
        %v2707 = vpop.f32.mrb[0].mxu0
        %v2708 = vadd.f32 0.0, %v2707
        %v2709 = vpop.f32.mrb[0].mxu0
        %v2710 = vpop.f32.mrb[0].mxu0
        %v2711 = vadd.f32 0.0, %v2710
        %v2712 = vpop.f32.mrb[0].mxu0
        %2713 = vmatprep.mubr.bf16.mxu0 0
        %2714 = vmatmul.mubr.bf16.gmra.mrb[0].mxu0 %v2599
        %v2715 = vpop.f32.mrb[0].mxu0
        %v2716 = vadd.f32 0.0, %v2715
        %v2717 = vpop.f32.mrb[0].mxu0
        %v2718 = vpop.f32.mrb[0].mxu0
        %v2719 = vadd.f32 0.0, %v2718
        %v2720 = vpop.f32.mrb[0].mxu0
        %2721 = vmatprep.mubr.bf16.mxu0 0
        %2722 = vmatmul.mubr.bf16.gmra.mrb[0].mxu0 %v2600
        %v2723 = vpop.f32.mrb[0].mxu0
        %v2724 = vadd.f32 0.0, %v2723
        %v2725 = vpop.f32.mrb[0].mxu0
        %v2726 = vpop.f32.mrb[0].mxu0
        %v2727 = vadd.f32 0.0, %v2726
        %v2728 = vpop.f32.mrb[0].mxu0
        %2729 = vdwg.mxu0
        %v2730 = vpack.c.bf16 %v2703, %v2700
        %v2731 = vpack.c.bf16 %v2711, %v2708
        %v2732 = vpack.c.bf16 %v2719, %v2716
        %v2733 = vpack.c.bf16 %v2727, %v2724
        %2738 = vrot.lane.b32.xlu0 %v2730, 96
        %v2739 = vpop.permute.xlu0 %2738
        %2740 = vrot.lane.b32.xlu0 %v2731, 96
        %v2741 = vpop.permute.xlu0 %2740
        %2742 = vrot.lane.b32.xlu0 %v2732, 96
        %v2743 = vpop.permute.xlu0 %2742
        %2744 = vrot.lane.b32.xlu0 %v2733, 96
        %v2745 = vpop.permute.xlu0 %2744
        %vm2750 = vcmask 1048320
        %2751 = vst.msk [vmem:[#allocation2] sm:$0xff] %vm2750, %v2739
        %2752 = vst.msk [vmem:[#allocation2 + $0x8] sm:$0xff] %vm2750, %v2741
        %2753 = vst.msk [vmem:[#allocation2 + $0x10] sm:$0xff] %vm2750, %v2743
        %2754 = vst.msk [vmem:[#allocation2 + $0x18] sm:$0xff] %vm2750, %v2745
        %v2755 = vld [vmem:[#allocation2] sm:$0xff]
        %v2756 = vld [vmem:[#allocation2 + $0x8] sm:$0xff]
        %v2757 = vld [vmem:[#allocation2 + $0x10] sm:$0xff]
        %v2758 = vld [vmem:[#allocation2 + $0x18] sm:$0xff]
        %v2759 = vld [vmem:[#allocation12] sm:$0xf]
        %v2760 = vld [vmem:[#allocation12 + $0x4] sm:$0xf]
        %v2761 = vld [vmem:[#allocation12 + $0x8] sm:$0xf]
        %v2762 = vld [vmem:[#allocation12 + $0xc] sm:$0xf]
        %v2763 = vld [vmem:[#allocation12 + $0x10] sm:$0xf]
        %v2764 = vld [vmem:[#allocation12 + $0x14] sm:$0xf]
        %v2765 = vld [vmem:[#allocation12 + $0x18] sm:$0xf]
        %v2766 = vld [vmem:[#allocation12 + $0x1c] sm:$0xf]
        %v2767 = vld [vmem:[#allocation12 + $0x20] sm:$0xf]
        %v2768 = vld [vmem:[#allocation12 + $0x24] sm:$0xf]
        %v2769 = vld [vmem:[#allocation12 + $0x28] sm:$0xf]
        %v2770 = vld [vmem:[#allocation12 + $0x2c] sm:$0xf]
        %v2771 = vld [vmem:[#allocation12 + $0x30] sm:$0xf]
        %v2772 = vld [vmem:[#allocation12 + $0x34] sm:$0xf]
        %v2773 = vld [vmem:[#allocation12 + $0x38] sm:$0xf]
        %v2774 = vld [vmem:[#allocation12 + $0x3c] sm:$0xf]
        %v2791 = vunpack.c.l.b16 %v2759
        %v2792 = vunpack.c.l.b16 %v2760
        %v2793 = vunpack.c.l.b16 %v2761
        %v2794 = vunpack.c.l.b16 %v2762
        %v2795 = vunpack.c.l.b16 %v2763
        %v2796 = vunpack.c.l.b16 %v2764
        %v2797 = vunpack.c.l.b16 %v2765
        %v2798 = vunpack.c.l.b16 %v2766
        %v2799 = vunpack.c.l.b16 %v2767
        %v2800 = vunpack.c.l.b16 %v2768
        %v2801 = vunpack.c.l.b16 %v2769
        %v2802 = vunpack.c.l.b16 %v2770
        %v2803 = vunpack.c.l.b16 %v2771
        %v2804 = vunpack.c.l.b16 %v2772
        %v2805 = vunpack.c.l.b16 %v2773
        %v2806 = vunpack.c.l.b16 %v2774
        %v2807 = vpack.c.b16 %v2792, %v2791
        %v2808 = vpack.c.b16 %v2794, %v2793
        %v2809 = vpack.c.b16 %v2796, %v2795
        %v2810 = vpack.c.b16 %v2798, %v2797
        %v2811 = vpack.c.b16 %v2800, %v2799
        %v2812 = vpack.c.b16 %v2802, %v2801
        %v2813 = vpack.c.b16 %v2804, %v2803
        %v2814 = vpack.c.b16 %v2806, %v2805
        %2823 = vmatprep.subr.bf16.mxu0 0
        %2824 = vmatpush1.bf16.msra.mxu0 %v2807
        %2825 = vmatprep.subr.bf16.mxu0 0
        %2826 = vmatpush1.bf16.msra.mxu0 %v2808
        %2827 = vmatprep.subr.bf16.mxu0 0
        %2828 = vmatpush1.bf16.msra.mxu0 %v2809
        %2829 = vmatprep.subr.bf16.mxu0 0
        %2830 = vmatpush1.bf16.msra.mxu0 %v2810
        %2831 = vmatprep.subr.bf16.mxu0 0
        %2832 = vmatpush1.bf16.msra.mxu0 %v2811
        %2833 = vmatprep.subr.bf16.mxu0 0
        %2834 = vmatpush1.bf16.msra.mxu0 %v2812
        %2835 = vmatprep.subr.bf16.mxu0 0
        %2836 = vmatpush1.bf16.msra.mxu0 %v2813
        %2837 = vmatprep.subr.bf16.mxu0 0
        %2838 = vmatpush1.bf16.msra.mxu0 %v2814
        %2839 = vmatprep.subr.bf16.mxu0 0
        %2840 = vmatpush1.bf16.msra.mxu0 0
        %2841 = vmatprep.subr.bf16.mxu0 0
        %2842 = vmatpush1.bf16.msra.mxu0 0
        %2843 = vmatprep.subr.bf16.mxu0 0
        %2844 = vmatpush1.bf16.msra.mxu0 0
        %2845 = vmatprep.subr.bf16.mxu0 0
        %2846 = vmatpush1.bf16.msra.mxu0 0
        %2847 = vmatprep.subr.bf16.mxu0 0
        %2848 = vmatpush1.bf16.msra.mxu0 0
        %2849 = vmatprep.subr.bf16.mxu0 0
        %2850 = vmatpush1.bf16.msra.mxu0 0
        %2851 = vmatprep.subr.bf16.mxu0 0
        %2852 = vmatpush1.bf16.msra.mxu0 0
        %2853 = vmatprep.subr.bf16.mxu0 0
        %2854 = vmatpush1.bf16.msra.mxu0 0
        %2855 = vmatprep.mubr.bf16.mxu0 0
        %2856 = vmatmul.mubr.bf16.gmra.mrb[0].mxu0 %v2755
        %v2857 = vpop.f32.mrb[0].mxu0
        %v2858 = vadd.f32 0.0, %v2857
        %v2859 = vpop.f32.mrb[0].mxu0
        %v2860 = vpop.f32.mrb[0].mxu0
        %v2861 = vadd.f32 0.0, %v2860
        %v2862 = vpop.f32.mrb[0].mxu0
        %2863 = vmatprep.mubr.bf16.mxu0 0
        %2864 = vmatmul.mubr.bf16.gmra.mrb[0].mxu0 %v2756
        %v2865 = vpop.f32.mrb[0].mxu0
        %v2866 = vadd.f32 0.0, %v2865
        %v2867 = vpop.f32.mrb[0].mxu0
        %v2868 = vpop.f32.mrb[0].mxu0
        %v2869 = vadd.f32 0.0, %v2868
        %v2870 = vpop.f32.mrb[0].mxu0
        %2871 = vmatprep.mubr.bf16.mxu0 0
        %2872 = vmatmul.mubr.bf16.gmra.mrb[0].mxu0 %v2757
        %v2873 = vpop.f32.mrb[0].mxu0
        %v2874 = vadd.f32 0.0, %v2873
        %v2875 = vpop.f32.mrb[0].mxu0
        %v2876 = vpop.f32.mrb[0].mxu0
        %v2877 = vadd.f32 0.0, %v2876
        %v2878 = vpop.f32.mrb[0].mxu0
        %2879 = vmatprep.mubr.bf16.mxu0 0
        %2880 = vmatmul.mubr.bf16.gmra.mrb[0].mxu0 %v2758
        %v2881 = vpop.f32.mrb[0].mxu0
        %v2882 = vadd.f32 0.0, %v2881
        %v2883 = vpop.f32.mrb[0].mxu0
        %v2884 = vpop.f32.mrb[0].mxu0
        %v2885 = vadd.f32 0.0, %v2884
        %v2886 = vpop.f32.mrb[0].mxu0
        %2887 = vdwg.mxu0
        %v2888 = vadd.f32 %v887, %v2858
        %v2889 = vadd.f32 %v888, %v2861
        %v2890 = vadd.f32 %v889, %v2866
        %v2891 = vadd.f32 %v890, %v2869
        %v2892 = vadd.f32 %v891, %v2874
        %v2893 = vadd.f32 %v892, %v2877
        %v2894 = vadd.f32 %v893, %v2882
        %v2895 = vadd.f32 %v894, %v2885
        %v2896 = vld [vmem:[%s6] sm:$0x1]
        %v2897 = vld [vmem:[%s7] sm:$0x1]
        %2898 = vadd.xlane.f32.xlu0 %v2888
        %v2899 = vpop.xlane.xlu0 %2898
        %2900 = vadd.xlane.f32.xlu0 %v2889
        %v2901 = vpop.xlane.xlu0 %2900
        %2902 = vadd.xlane.f32.xlu0 %v2890
        %v2903 = vpop.xlane.xlu0 %2902
        %2904 = vadd.xlane.f32.xlu0 %v2891
        %v2905 = vpop.xlane.xlu0 %2904
        %2906 = vadd.xlane.f32.xlu0 %v2892
        %v2907 = vpop.xlane.xlu0 %2906
        %2908 = vadd.xlane.f32.xlu0 %v2893
        %v2909 = vpop.xlane.xlu0 %2908
        %2910 = vadd.xlane.f32.xlu0 %v2894
        %v2911 = vpop.xlane.xlu0 %2910
        %2912 = vadd.xlane.f32.xlu0 %v2895
        %v2913 = vpop.xlane.xlu0 %2912
        %v2914 = vmul.f32 %v2899, %v770
        %v2915 = vmul.f32 %v2901, %v770
        %v2916 = vmul.f32 %v2903, %v770
        %v2917 = vmul.f32 %v2905, %v770
        %v2918 = vmul.f32 %v2907, %v770
        %v2919 = vmul.f32 %v2909, %v770
        %v2920 = vmul.f32 %v2911, %v770
        %v2921 = vmul.f32 %v2913, %v770
        %v2922 = vmul.f32 %v2888, %v2888
        %v2923 = vmul.f32 %v2889, %v2889
        %v2924 = vmul.f32 %v2890, %v2890
        %v2925 = vmul.f32 %v2891, %v2891
        %v2926 = vmul.f32 %v2892, %v2892
        %v2927 = vmul.f32 %v2893, %v2893
        %v2928 = vmul.f32 %v2894, %v2894
        %v2929 = vmul.f32 %v2895, %v2895
        %2930 = vadd.xlane.f32.xlu0 %v2922
        %v2931 = vpop.xlane.xlu0 %2930
        %2932 = vadd.xlane.f32.xlu0 %v2923
        %v2933 = vpop.xlane.xlu0 %2932
        %2934 = vadd.xlane.f32.xlu0 %v2924
        %v2935 = vpop.xlane.xlu0 %2934
        %2936 = vadd.xlane.f32.xlu0 %v2925
        %v2937 = vpop.xlane.xlu0 %2936
        %2938 = vadd.xlane.f32.xlu0 %v2926
        %v2939 = vpop.xlane.xlu0 %2938
        %2940 = vadd.xlane.f32.xlu0 %v2927
        %v2941 = vpop.xlane.xlu0 %2940
        %2942 = vadd.xlane.f32.xlu0 %v2928
        %v2943 = vpop.xlane.xlu0 %2942
        %2944 = vadd.xlane.f32.xlu0 %v2929
        %v2945 = vpop.xlane.xlu0 %2944
        %v2946 = vmul.f32 %v2931, %v770
        %v2947 = vmul.f32 %v2933, %v770
        %v2948 = vmul.f32 %v2935, %v770
        %v2949 = vmul.f32 %v2937, %v770
        %v2950 = vmul.f32 %v2939, %v770
        %v2951 = vmul.f32 %v2941, %v770
        %v2952 = vmul.f32 %v2943, %v770
        %v2953 = vmul.f32 %v2945, %v770
        %v2954 = vmul.f32 %v2914, %v2914
        %v2955 = vmul.f32 %v2915, %v2915
        %v2956 = vmul.f32 %v2916, %v2916
        %v2957 = vmul.f32 %v2917, %v2917
        %v2958 = vmul.f32 %v2918, %v2918
        %v2959 = vmul.f32 %v2919, %v2919
        %v2960 = vmul.f32 %v2920, %v2920
        %v2961 = vmul.f32 %v2921, %v2921
        %v2962 = vsub.f32 %v2946, %v2954
        %v2963 = vsub.f32 %v2947, %v2955
        %v2964 = vsub.f32 %v2948, %v2956
        %v2965 = vsub.f32 %v2949, %v2957
        %v2966 = vsub.f32 %v2950, %v2958
        %v2967 = vsub.f32 %v2951, %v2959
        %v2968 = vsub.f32 %v2952, %v2960
        %v2969 = vsub.f32 %v2953, %v2961
        %v2970 = vmax.f32 %v2962, 0.0
        %v2971 = vmax.f32 %v2963, 0.0
        %v2972 = vmax.f32 %v2964, 0.0
        %v2973 = vmax.f32 %v2965, 0.0
        %v2974 = vmax.f32 %v2966, 0.0
        %v2975 = vmax.f32 %v2967, 0.0
        %v2976 = vmax.f32 %v2968, 0.0
        %v2977 = vmax.f32 %v2969, 0.0
        %v2978 = vsub.f32 %v2888, %v2914
        %v2979 = vsub.f32 %v2889, %v2915
        %v2980 = vsub.f32 %v2890, %v2916
        %v2981 = vsub.f32 %v2891, %v2917
        %v2982 = vsub.f32 %v2892, %v2918
        %v2983 = vsub.f32 %v2893, %v2919
        %v2984 = vsub.f32 %v2894, %v2920
        %v2985 = vsub.f32 %v2895, %v2921
        %v2986 = vadd.f32 %v2970, 1e-05
        %v2987 = vadd.f32 %v2971, 1e-05
        %v2988 = vadd.f32 %v2972, 1e-05
        %v2989 = vadd.f32 %v2973, 1e-05
        %v2990 = vadd.f32 %v2974, 1e-05
        %v2991 = vadd.f32 %v2975, 1e-05
        %v2992 = vadd.f32 %v2976, 1e-05
        %v2993 = vadd.f32 %v2977, 1e-05
        %v2994 = vrsqrt.pop %v2986
        %v2995 = vrsqrt.pop %v2987
        %v2996 = vrsqrt.pop %v2988
        %v2997 = vrsqrt.pop %v2989
        %v2998 = vrsqrt.pop %v2990
        %v2999 = vrsqrt.pop %v2991
        %v3000 = vrsqrt.pop %v2992
        %v3001 = vrsqrt.pop %v2993
        %v3002 = vmul.f32 %v2978, %v2994
        %v3003 = vmul.f32 %v2979, %v2995
        %v3004 = vmul.f32 %v2980, %v2996
        %v3005 = vmul.f32 %v2981, %v2997
        %v3006 = vmul.f32 %v2982, %v2998
        %v3007 = vmul.f32 %v2983, %v2999
        %v3008 = vmul.f32 %v2984, %v3000
        %v3009 = vmul.f32 %v2985, %v3001
        %v3011 = vlaneseq
        %v3012 = vshrl.u32 %v3011, 7
        %v3013 = vsub.s32 0, %v3012
        %v3014 = vrot.slane %v2896, %v3013
        %v3016 = vmul.f32 %v3002, %v3014
        %v3017 = vmul.f32 %v3003, %v3014
        %v3018 = vmul.f32 %v3004, %v3014
        %v3019 = vmul.f32 %v3005, %v3014
        %v3020 = vmul.f32 %v3006, %v3014
        %v3021 = vmul.f32 %v3007, %v3014
        %v3022 = vmul.f32 %v3008, %v3014
        %v3023 = vmul.f32 %v3009, %v3014
        %v3025 = vlaneseq
        %v3026 = vshrl.u32 %v3025, 7
        %v3027 = vsub.s32 0, %v3026
        %v3028 = vrot.slane %v2897, %v3027
        %v3030 = vadd.f32 %v3016, %v3028
        %v3031 = vadd.f32 %v3017, %v3028
        %v3032 = vadd.f32 %v3018, %v3028
        %v3033 = vadd.f32 %v3019, %v3028
        %v3034 = vadd.f32 %v3020, %v3028
        %v3035 = vadd.f32 %v3021, %v3028
        %v3036 = vadd.f32 %v3022, %v3028
        %v3037 = vadd.f32 %v3023, %v3028
        %v3038 = vpack.c.bf16 %v3031, %v3030
        %v3039 = vpack.c.bf16 %v3033, %v3032
        %v3040 = vpack.c.bf16 %v3035, %v3034
        %v3041 = vpack.c.bf16 %v3037, %v3036
        %v3042 = vld [vmem:[#allocation14] sm:$0xff]
        %v3043 = vld [vmem:[#allocation14 + $0x8] sm:$0xff]
        %v3044 = vld [vmem:[#allocation14 + $0x10] sm:$0xff]
        %v3045 = vld [vmem:[#allocation14 + $0x18] sm:$0xff]
        %v3046 = vld [vmem:[#allocation14 + $0x20] sm:$0xff]
        %v3047 = vld [vmem:[#allocation14 + $0x28] sm:$0xff]
        %v3048 = vld [vmem:[#allocation14 + $0x30] sm:$0xff]
        %v3049 = vld [vmem:[#allocation14 + $0x38] sm:$0xff]
        %v3050 = vld [vmem:[#allocation14 + $0x40] sm:$0xff]
        %v3051 = vld [vmem:[#allocation14 + $0x48] sm:$0xff]
        %v3052 = vld [vmem:[#allocation14 + $0x50] sm:$0xff]
        %v3053 = vld [vmem:[#allocation14 + $0x58] sm:$0xff]
        %v3054 = vld [vmem:[#allocation14 + $0x60] sm:$0xff]
        %v3055 = vld [vmem:[#allocation14 + $0x68] sm:$0xff]
        %v3056 = vld [vmem:[#allocation14 + $0x70] sm:$0xff]
        %v3057 = vld [vmem:[#allocation14 + $0x78] sm:$0xff]
        %v3058 = vld [vmem:[%s11] sm:$0x3]
        %v3060 = vlaneseq
        %v3061 = vshrl.u32 %v3060, 7
        %v3062 = vsub.s32 0, %v3061
        %v3063 = vrot.slane %v3058, %v3062
        %v3064 = vlaneseq
        %v3065 = vshrl.u32 %v3064, 7
        %v3066 = vsub.s32 1, %v3065
        %v3067 = vrot.slane %v3058, %v3066
        %v3086 = vunpack.c.l.b16 %v3042
        %v3087 = vunpack.c.h.b16 %v3042
        %v3088 = vunpack.c.l.b16 %v3043
        %v3089 = vunpack.c.h.b16 %v3043
        %v3090 = vunpack.c.l.b16 %v3044
        %v3091 = vunpack.c.h.b16 %v3044
        %v3092 = vunpack.c.l.b16 %v3045
        %v3093 = vunpack.c.h.b16 %v3045
        %v3094 = vunpack.c.l.b16 %v3046
        %v3095 = vunpack.c.h.b16 %v3046
        %v3096 = vunpack.c.l.b16 %v3047
        %v3097 = vunpack.c.h.b16 %v3047
        %v3098 = vunpack.c.l.b16 %v3048
        %v3099 = vunpack.c.h.b16 %v3048
        %v3100 = vunpack.c.l.b16 %v3049
        %v3101 = vunpack.c.h.b16 %v3049
        %v3102 = vunpack.c.l.b16 %v3050
        %v3103 = vunpack.c.h.b16 %v3050
        %v3104 = vunpack.c.l.b16 %v3051
        %v3105 = vunpack.c.h.b16 %v3051
        %v3106 = vunpack.c.l.b16 %v3052
        %v3107 = vunpack.c.h.b16 %v3052
        %v3108 = vunpack.c.l.b16 %v3053
        %v3109 = vunpack.c.h.b16 %v3053
        %v3110 = vunpack.c.l.b16 %v3054
        %v3111 = vunpack.c.h.b16 %v3054
        %v3112 = vunpack.c.l.b16 %v3055
        %v3113 = vunpack.c.h.b16 %v3055
        %v3114 = vunpack.c.l.b16 %v3056
        %v3115 = vunpack.c.h.b16 %v3056
        %v3116 = vunpack.c.l.b16 %v3057
        %v3117 = vunpack.c.h.b16 %v3057
        %v3118 = vpack.c.b16 %v3088, %v3086
        %v3119 = vpack.c.b16 %v3089, %v3087
        %v3120 = vpack.c.b16 %v3092, %v3090
        %v3121 = vpack.c.b16 %v3093, %v3091
        %v3122 = vpack.c.b16 %v3096, %v3094
        %v3123 = vpack.c.b16 %v3097, %v3095
        %v3124 = vpack.c.b16 %v3100, %v3098
        %v3125 = vpack.c.b16 %v3101, %v3099
        %v3126 = vpack.c.b16 %v3104, %v3102
        %v3127 = vpack.c.b16 %v3105, %v3103
        %v3128 = vpack.c.b16 %v3108, %v3106
        %v3129 = vpack.c.b16 %v3109, %v3107
        %v3130 = vpack.c.b16 %v3112, %v3110
        %v3131 = vpack.c.b16 %v3113, %v3111
        %v3132 = vpack.c.b16 %v3116, %v3114
        %v3133 = vpack.c.b16 %v3117, %v3115
        %3150 = vmatprep.subr.bf16.mxu0 %v3119
        %3151 = vmatpush1.bf16.msra.mxu0 %v3118
        %3152 = vmatprep.subr.bf16.mxu0 %v3121
        %3153 = vmatpush1.bf16.msra.mxu0 %v3120
        %3154 = vmatprep.subr.bf16.mxu0 %v3123
        %3155 = vmatpush1.bf16.msra.mxu0 %v3122
        %3156 = vmatprep.subr.bf16.mxu0 %v3125
        %3157 = vmatpush1.bf16.msra.mxu0 %v3124
        %3158 = vmatprep.subr.bf16.mxu0 %v3127
        %3159 = vmatpush1.bf16.msra.mxu0 %v3126
        %3160 = vmatprep.subr.bf16.mxu0 %v3129
        %3161 = vmatpush1.bf16.msra.mxu0 %v3128
        %3162 = vmatprep.subr.bf16.mxu0 %v3131
        %3163 = vmatpush1.bf16.msra.mxu0 %v3130
        %3164 = vmatprep.subr.bf16.mxu0 %v3133
        %3165 = vmatpush1.bf16.msra.mxu0 %v3132
        %3166 = vmatprep.subr.bf16.mxu0 0
        %3167 = vmatpush1.bf16.msra.mxu0 0
        %3168 = vmatprep.subr.bf16.mxu0 0
        %3169 = vmatpush1.bf16.msra.mxu0 0
        %3170 = vmatprep.subr.bf16.mxu0 0
        %3171 = vmatpush1.bf16.msra.mxu0 0
        %3172 = vmatprep.subr.bf16.mxu0 0
        %3173 = vmatpush1.bf16.msra.mxu0 0
        %3174 = vmatprep.subr.bf16.mxu0 0
        %3175 = vmatpush1.bf16.msra.mxu0 0
        %3176 = vmatprep.subr.bf16.mxu0 0
        %3177 = vmatpush1.bf16.msra.mxu0 0
        %3178 = vmatprep.subr.bf16.mxu0 0
        %3179 = vmatpush1.bf16.msra.mxu0 0
        %3180 = vmatprep.subr.bf16.mxu0 0
        %3181 = vmatpush1.bf16.msra.mxu0 0
        %3182 = vmatprep.mubr.bf16.mxu0 0
        %3183 = vmatmul.mubr.bf16.gmra.mrb[0].mxu0 %v3038
        %v3184 = vpop.f32.mrb[0].mxu0
        %v3185 = vadd.f32 %v3063, %v3184
        %v3186 = vpop.f32.mrb[0].mxu0
        %v3187 = vadd.f32 %v3067, %v3186
        %v3188 = vpop.f32.mrb[0].mxu0
        %v3189 = vadd.f32 %v3063, %v3188
        %v3190 = vpop.f32.mrb[0].mxu0
        %v3191 = vadd.f32 %v3067, %v3190
        %3192 = vmatprep.mubr.bf16.mxu0 0
        %3193 = vmatmul.mubr.bf16.gmra.mrb[0].mxu0 %v3039
        %v3194 = vpop.f32.mrb[0].mxu0
        %v3195 = vadd.f32 %v3063, %v3194
        %v3196 = vpop.f32.mrb[0].mxu0
        %v3197 = vadd.f32 %v3067, %v3196
        %v3198 = vpop.f32.mrb[0].mxu0
        %v3199 = vadd.f32 %v3063, %v3198
        %v3200 = vpop.f32.mrb[0].mxu0
        %v3201 = vadd.f32 %v3067, %v3200
        %3202 = vmatprep.mubr.bf16.mxu0 0
        %3203 = vmatmul.mubr.bf16.gmra.mrb[0].mxu0 %v3040
        %v3204 = vpop.f32.mrb[0].mxu0
        %v3205 = vadd.f32 %v3063, %v3204
        %v3206 = vpop.f32.mrb[0].mxu0
        %v3207 = vadd.f32 %v3067, %v3206
        %v3208 = vpop.f32.mrb[0].mxu0
        %v3209 = vadd.f32 %v3063, %v3208
        %v3210 = vpop.f32.mrb[0].mxu0
        %v3211 = vadd.f32 %v3067, %v3210
        %3212 = vmatprep.mubr.bf16.mxu0 0
        %3213 = vmatmul.mubr.bf16.gmra.mrb[0].mxu0 %v3041
        %v3214 = vpop.f32.mrb[0].mxu0
        %v3215 = vadd.f32 %v3063, %v3214
        %v3216 = vpop.f32.mrb[0].mxu0
        %v3217 = vadd.f32 %v3067, %v3216
        %v3218 = vpop.f32.mrb[0].mxu0
        %v3219 = vadd.f32 %v3063, %v3218
        %v3220 = vpop.f32.mrb[0].mxu0
        %v3221 = vadd.f32 %v3067, %v3220
        %3222 = vdwg.mxu0
        %v3223 = vmul.f32 %v3185, %v3185
        %v3224 = vmul.f32 %v3187, %v3187
        %v3225 = vmul.f32 %v3189, %v3189
        %v3226 = vmul.f32 %v3191, %v3191
        %v3227 = vmul.f32 %v3195, %v3195
        %v3228 = vmul.f32 %v3197, %v3197
        %v3229 = vmul.f32 %v3199, %v3199
        %v3230 = vmul.f32 %v3201, %v3201
        %v3231 = vmul.f32 %v3205, %v3205
        %v3232 = vmul.f32 %v3207, %v3207
        %v3233 = vmul.f32 %v3209, %v3209
        %v3234 = vmul.f32 %v3211, %v3211
        %v3235 = vmul.f32 %v3215, %v3215
        %v3236 = vmul.f32 %v3217, %v3217
        %v3237 = vmul.f32 %v3219, %v3219
        %v3238 = vmul.f32 %v3221, %v3221
        %v3239 = vmul.f32 %v3185, %v3223
        %v3240 = vmul.f32 %v3187, %v3224
        %v3241 = vmul.f32 %v3189, %v3225
        %v3242 = vmul.f32 %v3191, %v3226
        %v3243 = vmul.f32 %v3195, %v3227
        %v3244 = vmul.f32 %v3197, %v3228
        %v3245 = vmul.f32 %v3199, %v3229
        %v3246 = vmul.f32 %v3201, %v3230
        %v3247 = vmul.f32 %v3205, %v3231
        %v3248 = vmul.f32 %v3207, %v3232
        %v3249 = vmul.f32 %v3209, %v3233
        %v3250 = vmul.f32 %v3211, %v3234
        %v3251 = vmul.f32 %v3215, %v3235
        %v3252 = vmul.f32 %v3217, %v3236
        %v3253 = vmul.f32 %v3219, %v3237
        %v3254 = vmul.f32 %v3221, %v3238
        %v3255 = vmul.f32 %v3239, 0.044715
        %v3256 = vmul.f32 %v3240, 0.044715
        %v3257 = vmul.f32 %v3241, 0.044715
        %v3258 = vmul.f32 %v3242, 0.044715
        %v3259 = vmul.f32 %v3243, 0.044715
        %v3260 = vmul.f32 %v3244, 0.044715
        %v3261 = vmul.f32 %v3245, 0.044715
        %v3262 = vmul.f32 %v3246, 0.044715
        %v3263 = vmul.f32 %v3247, 0.044715
        %v3264 = vmul.f32 %v3248, 0.044715
        %v3265 = vmul.f32 %v3249, 0.044715
        %v3266 = vmul.f32 %v3250, 0.044715
        %v3267 = vmul.f32 %v3251, 0.044715
        %v3268 = vmul.f32 %v3252, 0.044715
        %v3269 = vmul.f32 %v3253, 0.044715
        %v3270 = vmul.f32 %v3254, 0.044715
        %v3271 = vadd.f32 %v3185, %v3255
        %v3272 = vadd.f32 %v3187, %v3256
        %v3273 = vadd.f32 %v3189, %v3257
        %v3274 = vadd.f32 %v3191, %v3258
        %v3275 = vadd.f32 %v3195, %v3259
        %v3276 = vadd.f32 %v3197, %v3260
        %v3277 = vadd.f32 %v3199, %v3261
        %v3278 = vadd.f32 %v3201, %v3262
        %v3279 = vadd.f32 %v3205, %v3263
        %v3280 = vadd.f32 %v3207, %v3264
        %v3281 = vadd.f32 %v3209, %v3265
        %v3282 = vadd.f32 %v3211, %v3266
        %v3283 = vadd.f32 %v3215, %v3267
        %v3284 = vadd.f32 %v3217, %v3268
        %v3285 = vadd.f32 %v3219, %v3269
        %v3286 = vadd.f32 %v3221, %v3270
        %v3287 = vmul.f32 %v3271, 0.7978846
        %v3288 = vmul.f32 %v3272, 0.7978846
        %v3289 = vmul.f32 %v3273, 0.7978846
        %v3290 = vmul.f32 %v3274, 0.7978846
        %v3291 = vmul.f32 %v3275, 0.7978846
        %v3292 = vmul.f32 %v3276, 0.7978846
        %v3293 = vmul.f32 %v3277, 0.7978846
        %v3294 = vmul.f32 %v3278, 0.7978846
        %v3295 = vmul.f32 %v3279, 0.7978846
        %v3296 = vmul.f32 %v3280, 0.7978846
        %v3297 = vmul.f32 %v3281, 0.7978846
        %v3298 = vmul.f32 %v3282, 0.7978846
        %v3299 = vmul.f32 %v3283, 0.7978846
        %v3300 = vmul.f32 %v3284, 0.7978846
        %v3301 = vmul.f32 %v3285, 0.7978846
        %v3302 = vmul.f32 %v3286, 0.7978846
        %v3303 = vtanh.pop %v3287
        %v3304 = vtanh.pop %v3288
        %v3305 = vtanh.pop %v3289
        %v3306 = vtanh.pop %v3290
        %v3307 = vtanh.pop %v3291
        %v3308 = vtanh.pop %v3292
        %v3309 = vtanh.pop %v3293
        %v3310 = vtanh.pop %v3294
        %v3311 = vtanh.pop %v3295
        %v3312 = vtanh.pop %v3296
        %v3313 = vtanh.pop %v3297
        %v3314 = vtanh.pop %v3298
        %v3315 = vtanh.pop %v3299
        %v3316 = vtanh.pop %v3300
        %v3317 = vtanh.pop %v3301
        %v3318 = vtanh.pop %v3302
        %v3319 = vadd.f32 %v3303, 1.0
        %v3320 = vadd.f32 %v3304, 1.0
        %v3321 = vadd.f32 %v3305, 1.0
        %v3322 = vadd.f32 %v3306, 1.0
        %v3323 = vadd.f32 %v3307, 1.0
        %v3324 = vadd.f32 %v3308, 1.0
        %v3325 = vadd.f32 %v3309, 1.0
        %v3326 = vadd.f32 %v3310, 1.0
        %v3327 = vadd.f32 %v3311, 1.0
        %v3328 = vadd.f32 %v3312, 1.0
        %v3329 = vadd.f32 %v3313, 1.0
        %v3330 = vadd.f32 %v3314, 1.0
        %v3331 = vadd.f32 %v3315, 1.0
        %v3332 = vadd.f32 %v3316, 1.0
        %v3333 = vadd.f32 %v3317, 1.0
        %v3334 = vadd.f32 %v3318, 1.0
        %v3335 = vmul.f32 %v3319, 0.5
        %v3336 = vmul.f32 %v3320, 0.5
        %v3337 = vmul.f32 %v3321, 0.5
        %v3338 = vmul.f32 %v3322, 0.5
        %v3339 = vmul.f32 %v3323, 0.5
        %v3340 = vmul.f32 %v3324, 0.5
        %v3341 = vmul.f32 %v3325, 0.5
        %v3342 = vmul.f32 %v3326, 0.5
        %v3343 = vmul.f32 %v3327, 0.5
        %v3344 = vmul.f32 %v3328, 0.5
        %v3345 = vmul.f32 %v3329, 0.5
        %v3346 = vmul.f32 %v3330, 0.5
        %v3347 = vmul.f32 %v3331, 0.5
        %v3348 = vmul.f32 %v3332, 0.5
        %v3349 = vmul.f32 %v3333, 0.5
        %v3350 = vmul.f32 %v3334, 0.5
        %v3351 = vmul.f32 %v3185, %v3335
        %v3352 = vmul.f32 %v3187, %v3336
        %v3353 = vmul.f32 %v3189, %v3337
        %v3354 = vmul.f32 %v3191, %v3338
        %v3355 = vmul.f32 %v3195, %v3339
        %v3356 = vmul.f32 %v3197, %v3340
        %v3357 = vmul.f32 %v3199, %v3341
        %v3358 = vmul.f32 %v3201, %v3342
        %v3359 = vmul.f32 %v3205, %v3343
        %v3360 = vmul.f32 %v3207, %v3344
        %v3361 = vmul.f32 %v3209, %v3345
        %v3362 = vmul.f32 %v3211, %v3346
        %v3363 = vmul.f32 %v3215, %v3347
        %v3364 = vmul.f32 %v3217, %v3348
        %v3365 = vmul.f32 %v3219, %v3349
        %v3366 = vmul.f32 %v3221, %v3350
        %v3367 = vld [vmem:[#allocation15] sm:$0xff]
        %v3368 = vld [vmem:[#allocation15 + $0x8] sm:$0xff]
        %v3369 = vld [vmem:[#allocation15 + $0x10] sm:$0xff]
        %v3370 = vld [vmem:[#allocation15 + $0x18] sm:$0xff]
        %v3371 = vld [vmem:[#allocation15 + $0x20] sm:$0xff]
        %v3372 = vld [vmem:[#allocation15 + $0x28] sm:$0xff]
        %v3373 = vld [vmem:[#allocation15 + $0x30] sm:$0xff]
        %v3374 = vld [vmem:[#allocation15 + $0x38] sm:$0xff]
        %v3375 = vld [vmem:[#allocation15 + $0x40] sm:$0xff]
        %v3376 = vld [vmem:[#allocation15 + $0x48] sm:$0xff]
        %v3377 = vld [vmem:[#allocation15 + $0x50] sm:$0xff]
        %v3378 = vld [vmem:[#allocation15 + $0x58] sm:$0xff]
        %v3379 = vld [vmem:[#allocation15 + $0x60] sm:$0xff]
        %v3380 = vld [vmem:[#allocation15 + $0x68] sm:$0xff]
        %v3381 = vld [vmem:[#allocation15 + $0x70] sm:$0xff]
        %v3382 = vld [vmem:[#allocation15 + $0x78] sm:$0xff]
        %v3383 = vld [vmem:[%s13] sm:$0x3]
        %v3385 = vlaneseq
        %v3386 = vshrl.u32 %v3385, 7
        %v3387 = vsub.s32 0, %v3386
        %v3388 = vrot.slane %v3383, %v3387
        %v3389 = vlaneseq
        %v3390 = vshrl.u32 %v3389, 7
        %v3391 = vsub.s32 1, %v3390
        %v3392 = vrot.slane %v3383, %v3391
        %v3411 = vunpack.c.l.b16 %v3367
        %v3412 = vunpack.c.h.b16 %v3367
        %v3413 = vunpack.c.l.b16 %v3368
        %v3414 = vunpack.c.h.b16 %v3368
        %v3415 = vunpack.c.l.b16 %v3369
        %v3416 = vunpack.c.h.b16 %v3369
        %v3417 = vunpack.c.l.b16 %v3370
        %v3418 = vunpack.c.h.b16 %v3370
        %v3419 = vunpack.c.l.b16 %v3371
        %v3420 = vunpack.c.h.b16 %v3371
        %v3421 = vunpack.c.l.b16 %v3372
        %v3422 = vunpack.c.h.b16 %v3372
        %v3423 = vunpack.c.l.b16 %v3373
        %v3424 = vunpack.c.h.b16 %v3373
        %v3425 = vunpack.c.l.b16 %v3374
        %v3426 = vunpack.c.h.b16 %v3374
        %v3427 = vunpack.c.l.b16 %v3375
        %v3428 = vunpack.c.h.b16 %v3375
        %v3429 = vunpack.c.l.b16 %v3376
        %v3430 = vunpack.c.h.b16 %v3376
        %v3431 = vunpack.c.l.b16 %v3377
        %v3432 = vunpack.c.h.b16 %v3377
        %v3433 = vunpack.c.l.b16 %v3378
        %v3434 = vunpack.c.h.b16 %v3378
        %v3435 = vunpack.c.l.b16 %v3379
        %v3436 = vunpack.c.h.b16 %v3379
        %v3437 = vunpack.c.l.b16 %v3380
        %v3438 = vunpack.c.h.b16 %v3380
        %v3439 = vunpack.c.l.b16 %v3381
        %v3440 = vunpack.c.h.b16 %v3381
        %v3441 = vunpack.c.l.b16 %v3382
        %v3442 = vunpack.c.h.b16 %v3382
        %v3443 = vpack.c.b16 %v3413, %v3411
        %v3444 = vpack.c.b16 %v3414, %v3412
        %v3445 = vpack.c.b16 %v3417, %v3415
        %v3446 = vpack.c.b16 %v3418, %v3416
        %v3447 = vpack.c.b16 %v3421, %v3419
        %v3448 = vpack.c.b16 %v3422, %v3420
        %v3449 = vpack.c.b16 %v3425, %v3423
        %v3450 = vpack.c.b16 %v3426, %v3424
        %v3451 = vpack.c.b16 %v3429, %v3427
        %v3452 = vpack.c.b16 %v3430, %v3428
        %v3453 = vpack.c.b16 %v3433, %v3431
        %v3454 = vpack.c.b16 %v3434, %v3432
        %v3455 = vpack.c.b16 %v3437, %v3435
        %v3456 = vpack.c.b16 %v3438, %v3436
        %v3457 = vpack.c.b16 %v3441, %v3439
        %v3458 = vpack.c.b16 %v3442, %v3440
        %3475 = vmatprep.subr.bf16.mxu0 %v3444
        %3476 = vmatpush1.bf16.msra.mxu0 %v3443
        %3477 = vmatprep.subr.bf16.mxu0 %v3446
        %3478 = vmatpush1.bf16.msra.mxu0 %v3445
        %3479 = vmatprep.subr.bf16.mxu0 %v3448
        %3480 = vmatpush1.bf16.msra.mxu0 %v3447
        %3481 = vmatprep.subr.bf16.mxu0 %v3450
        %3482 = vmatpush1.bf16.msra.mxu0 %v3449
        %3483 = vmatprep.subr.bf16.mxu0 %v3452
        %3484 = vmatpush1.bf16.msra.mxu0 %v3451
        %3485 = vmatprep.subr.bf16.mxu0 %v3454
        %3486 = vmatpush1.bf16.msra.mxu0 %v3453
        %3487 = vmatprep.subr.bf16.mxu0 %v3456
        %3488 = vmatpush1.bf16.msra.mxu0 %v3455
        %3489 = vmatprep.subr.bf16.mxu0 %v3458
        %3490 = vmatpush1.bf16.msra.mxu0 %v3457
        %3491 = vmatprep.subr.bf16.mxu0 0
        %3492 = vmatpush1.bf16.msra.mxu0 0
        %3493 = vmatprep.subr.bf16.mxu0 0
        %3494 = vmatpush1.bf16.msra.mxu0 0
        %3495 = vmatprep.subr.bf16.mxu0 0
        %3496 = vmatpush1.bf16.msra.mxu0 0
        %3497 = vmatprep.subr.bf16.mxu0 0
        %3498 = vmatpush1.bf16.msra.mxu0 0
        %3499 = vmatprep.subr.bf16.mxu0 0
        %3500 = vmatpush1.bf16.msra.mxu0 0
        %3501 = vmatprep.subr.bf16.mxu0 0
        %3502 = vmatpush1.bf16.msra.mxu0 0
        %3503 = vmatprep.subr.bf16.mxu0 0
        %3504 = vmatpush1.bf16.msra.mxu0 0
        %3505 = vmatprep.subr.bf16.mxu0 0
        %3506 = vmatpush1.bf16.msra.mxu0 0
        %3507 = vmatprep.mubr.bf16.mxu0 0
        %3508 = vmatmul.mubr.bf16.gmra.mrb[0].mxu0 %v3038
        %v3509 = vpop.f32.mrb[0].mxu0
        %v3510 = vadd.f32 %v3388, %v3509
        %v3511 = vpop.f32.mrb[0].mxu0
        %v3512 = vadd.f32 %v3392, %v3511
        %v3513 = vpop.f32.mrb[0].mxu0
        %v3514 = vadd.f32 %v3388, %v3513
        %v3515 = vpop.f32.mrb[0].mxu0
        %v3516 = vadd.f32 %v3392, %v3515
        %3517 = vmatprep.mubr.bf16.mxu0 0
        %3518 = vmatmul.mubr.bf16.gmra.mrb[0].mxu0 %v3039
        %v3519 = vpop.f32.mrb[0].mxu0
        %v3520 = vadd.f32 %v3388, %v3519
        %v3521 = vpop.f32.mrb[0].mxu0
        %v3522 = vadd.f32 %v3392, %v3521
        %v3523 = vpop.f32.mrb[0].mxu0
        %v3524 = vadd.f32 %v3388, %v3523
        %v3525 = vpop.f32.mrb[0].mxu0
        %v3526 = vadd.f32 %v3392, %v3525
        %3527 = vmatprep.mubr.bf16.mxu0 0
        %3528 = vmatmul.mubr.bf16.gmra.mrb[0].mxu0 %v3040
        %v3529 = vpop.f32.mrb[0].mxu0
        %v3530 = vadd.f32 %v3388, %v3529
        %v3531 = vpop.f32.mrb[0].mxu0
        %v3532 = vadd.f32 %v3392, %v3531
        %v3533 = vpop.f32.mrb[0].mxu0
        %v3534 = vadd.f32 %v3388, %v3533
        %v3535 = vpop.f32.mrb[0].mxu0
        %v3536 = vadd.f32 %v3392, %v3535
        %3537 = vmatprep.mubr.bf16.mxu0 0
        %3538 = vmatmul.mubr.bf16.gmra.mrb[0].mxu0 %v3041
        %v3539 = vpop.f32.mrb[0].mxu0
        %v3540 = vadd.f32 %v3388, %v3539
        %v3541 = vpop.f32.mrb[0].mxu0
        %v3542 = vadd.f32 %v3392, %v3541
        %v3543 = vpop.f32.mrb[0].mxu0
        %v3544 = vadd.f32 %v3388, %v3543
        %v3545 = vpop.f32.mrb[0].mxu0
        %v3546 = vadd.f32 %v3392, %v3545
        %3547 = vdwg.mxu0
        %v3548 = vmul.f32 %v3351, %v3510
        %v3549 = vmul.f32 %v3352, %v3512
        %v3550 = vmul.f32 %v3353, %v3514
        %v3551 = vmul.f32 %v3354, %v3516
        %v3552 = vmul.f32 %v3355, %v3520
        %v3553 = vmul.f32 %v3356, %v3522
        %v3554 = vmul.f32 %v3357, %v3524
        %v3555 = vmul.f32 %v3358, %v3526
        %v3556 = vmul.f32 %v3359, %v3530
        %v3557 = vmul.f32 %v3360, %v3532
        %v3558 = vmul.f32 %v3361, %v3534
        %v3559 = vmul.f32 %v3362, %v3536
        %v3560 = vmul.f32 %v3363, %v3540
        %v3561 = vmul.f32 %v3364, %v3542
        %v3562 = vmul.f32 %v3365, %v3544
        %v3563 = vmul.f32 %v3366, %v3546
        %v3564 = vpack.c.bf16 %v3550, %v3548
        %v3565 = vpack.c.bf16 %v3551, %v3549
        %v3566 = vpack.c.bf16 %v3554, %v3552
        %v3567 = vpack.c.bf16 %v3555, %v3553
        %v3568 = vpack.c.bf16 %v3558, %v3556
        %v3569 = vpack.c.bf16 %v3559, %v3557
        %v3570 = vpack.c.bf16 %v3562, %v3560
        %v3571 = vpack.c.bf16 %v3563, %v3561
        %v3572 = vld [vmem:[#allocation17] sm:$0xf]
        %v3573 = vld [vmem:[#allocation17 + $0x4] sm:$0xf]
        %v3574 = vld [vmem:[#allocation17 + $0x8] sm:$0xf]
        %v3575 = vld [vmem:[#allocation17 + $0xc] sm:$0xf]
        %v3576 = vld [vmem:[#allocation17 + $0x10] sm:$0xf]
        %v3577 = vld [vmem:[#allocation17 + $0x14] sm:$0xf]
        %v3578 = vld [vmem:[#allocation17 + $0x18] sm:$0xf]
        %v3579 = vld [vmem:[#allocation17 + $0x1c] sm:$0xf]
        %v3580 = vld [vmem:[#allocation17 + $0x20] sm:$0xf]
        %v3581 = vld [vmem:[#allocation17 + $0x24] sm:$0xf]
        %v3582 = vld [vmem:[#allocation17 + $0x28] sm:$0xf]
        %v3583 = vld [vmem:[#allocation17 + $0x2c] sm:$0xf]
        %v3584 = vld [vmem:[#allocation17 + $0x30] sm:$0xf]
        %v3585 = vld [vmem:[#allocation17 + $0x34] sm:$0xf]
        %v3586 = vld [vmem:[#allocation17 + $0x38] sm:$0xf]
        %v3587 = vld [vmem:[#allocation17 + $0x3c] sm:$0xf]
        %v3588 = vld [vmem:[#allocation17 + $0x40] sm:$0xf]
        %v3589 = vld [vmem:[#allocation17 + $0x44] sm:$0xf]
        %v3590 = vld [vmem:[#allocation17 + $0x48] sm:$0xf]
        %v3591 = vld [vmem:[#allocation17 + $0x4c] sm:$0xf]
        %v3592 = vld [vmem:[#allocation17 + $0x50] sm:$0xf]
        %v3593 = vld [vmem:[#allocation17 + $0x54] sm:$0xf]
        %v3594 = vld [vmem:[#allocation17 + $0x58] sm:$0xf]
        %v3595 = vld [vmem:[#allocation17 + $0x5c] sm:$0xf]
        %v3596 = vld [vmem:[#allocation17 + $0x60] sm:$0xf]
        %v3597 = vld [vmem:[#allocation17 + $0x64] sm:$0xf]
        %v3598 = vld [vmem:[#allocation17 + $0x68] sm:$0xf]
        %v3599 = vld [vmem:[#allocation17 + $0x6c] sm:$0xf]
        %v3600 = vld [vmem:[#allocation17 + $0x70] sm:$0xf]
        %v3601 = vld [vmem:[#allocation17 + $0x74] sm:$0xf]
        %v3602 = vld [vmem:[#allocation17 + $0x78] sm:$0xf]
        %v3603 = vld [vmem:[#allocation17 + $0x7c] sm:$0xf]
        %v3604 = vld [vmem:[%s15] sm:$0x1]
        %v3606 = vlaneseq
        %v3607 = vshrl.u32 %v3606, 7
        %v3608 = vsub.s32 0, %v3607
        %v3609 = vrot.slane %v3604, %v3608
        %v3643 = vunpack.c.l.b16 %v3572
        %v3644 = vunpack.c.l.b16 %v3573
        %v3645 = vunpack.c.l.b16 %v3574
        %v3646 = vunpack.c.l.b16 %v3575
        %v3647 = vunpack.c.l.b16 %v3576
        %v3648 = vunpack.c.l.b16 %v3577
        %v3649 = vunpack.c.l.b16 %v3578
        %v3650 = vunpack.c.l.b16 %v3579
        %v3651 = vunpack.c.l.b16 %v3580
        %v3652 = vunpack.c.l.b16 %v3581
        %v3653 = vunpack.c.l.b16 %v3582
        %v3654 = vunpack.c.l.b16 %v3583
        %v3655 = vunpack.c.l.b16 %v3584
        %v3656 = vunpack.c.l.b16 %v3585
        %v3657 = vunpack.c.l.b16 %v3586
        %v3658 = vunpack.c.l.b16 %v3587
        %v3659 = vunpack.c.l.b16 %v3588
        %v3660 = vunpack.c.l.b16 %v3589
        %v3661 = vunpack.c.l.b16 %v3590
        %v3662 = vunpack.c.l.b16 %v3591
        %v3663 = vunpack.c.l.b16 %v3592
        %v3664 = vunpack.c.l.b16 %v3593
        %v3665 = vunpack.c.l.b16 %v3594
        %v3666 = vunpack.c.l.b16 %v3595
        %v3667 = vunpack.c.l.b16 %v3596
        %v3668 = vunpack.c.l.b16 %v3597
        %v3669 = vunpack.c.l.b16 %v3598
        %v3670 = vunpack.c.l.b16 %v3599
        %v3671 = vunpack.c.l.b16 %v3600
        %v3672 = vunpack.c.l.b16 %v3601
        %v3673 = vunpack.c.l.b16 %v3602
        %v3674 = vunpack.c.l.b16 %v3603
        %v3675 = vpack.c.b16 %v3644, %v3643
        %v3676 = vpack.c.b16 %v3646, %v3645
        %v3677 = vpack.c.b16 %v3648, %v3647
        %v3678 = vpack.c.b16 %v3650, %v3649
        %v3679 = vpack.c.b16 %v3652, %v3651
        %v3680 = vpack.c.b16 %v3654, %v3653
        %v3681 = vpack.c.b16 %v3656, %v3655
        %v3682 = vpack.c.b16 %v3658, %v3657
        %v3683 = vpack.c.b16 %v3660, %v3659
        %v3684 = vpack.c.b16 %v3662, %v3661
        %v3685 = vpack.c.b16 %v3664, %v3663
        %v3686 = vpack.c.b16 %v3666, %v3665
        %v3687 = vpack.c.b16 %v3668, %v3667
        %v3688 = vpack.c.b16 %v3670, %v3669
        %v3689 = vpack.c.b16 %v3672, %v3671
        %v3690 = vpack.c.b16 %v3674, %v3673
        %3707 = vmatprep.subr.bf16.mxu0 0
        %3708 = vmatpush1.bf16.msra.mxu0 %v3675
        %3709 = vmatprep.subr.bf16.mxu0 0
        %3710 = vmatpush1.bf16.msra.mxu0 %v3676
        %3711 = vmatprep.subr.bf16.mxu0 0
        %3712 = vmatpush1.bf16.msra.mxu0 %v3677
        %3713 = vmatprep.subr.bf16.mxu0 0
        %3714 = vmatpush1.bf16.msra.mxu0 %v3678
        %3715 = vmatprep.subr.bf16.mxu0 0
        %3716 = vmatpush1.bf16.msra.mxu0 %v3679
        %3717 = vmatprep.subr.bf16.mxu0 0
        %3718 = vmatpush1.bf16.msra.mxu0 %v3680
        %3719 = vmatprep.subr.bf16.mxu0 0
        %3720 = vmatpush1.bf16.msra.mxu0 %v3681
        %3721 = vmatprep.subr.bf16.mxu0 0
        %3722 = vmatpush1.bf16.msra.mxu0 %v3682
        %3723 = vmatprep.subr.bf16.mxu0 0
        %3724 = vmatpush1.bf16.msra.mxu0 %v3683
        %3725 = vmatprep.subr.bf16.mxu0 0
        %3726 = vmatpush1.bf16.msra.mxu0 %v3684
        %3727 = vmatprep.subr.bf16.mxu0 0
        %3728 = vmatpush1.bf16.msra.mxu0 %v3685
        %3729 = vmatprep.subr.bf16.mxu0 0
        %3730 = vmatpush1.bf16.msra.mxu0 %v3686
        %3731 = vmatprep.subr.bf16.mxu0 0
        %3732 = vmatpush1.bf16.msra.mxu0 %v3687
        %3733 = vmatprep.subr.bf16.mxu0 0
        %3734 = vmatpush1.bf16.msra.mxu0 %v3688
        %3735 = vmatprep.subr.bf16.mxu0 0
        %3736 = vmatpush1.bf16.msra.mxu0 %v3689
        %3737 = vmatprep.subr.bf16.mxu0 0
        %3738 = vmatpush1.bf16.msra.mxu0 %v3690
        %3739 = vmatprep.mubr.bf16.mxu0 %v3565
        %3740 = vmatmul.mubr.bf16.gmra.mrb[0].mxu0 %v3564
        %v3741 = vpop.f32.mrb[0].mxu0
        %v3742 = vadd.f32 %v3609, %v3741
        %v3743 = vpop.f32.mrb[0].mxu0
        %v3744 = vpop.f32.mrb[0].mxu0
        %v3745 = vadd.f32 %v3609, %v3744
        %v3746 = vpop.f32.mrb[0].mxu0
        %3747 = vmatprep.mubr.bf16.mxu0 %v3567
        %3748 = vmatmul.mubr.bf16.gmra.mrb[0].mxu0 %v3566
        %v3749 = vpop.f32.mrb[0].mxu0
        %v3750 = vadd.f32 %v3609, %v3749
        %v3751 = vpop.f32.mrb[0].mxu0
        %v3752 = vpop.f32.mrb[0].mxu0
        %v3753 = vadd.f32 %v3609, %v3752
        %v3754 = vpop.f32.mrb[0].mxu0
        %3755 = vmatprep.mubr.bf16.mxu0 %v3569
        %3756 = vmatmul.mubr.bf16.gmra.mrb[0].mxu0 %v3568
        %v3757 = vpop.f32.mrb[0].mxu0
        %v3758 = vadd.f32 %v3609, %v3757
        %v3759 = vpop.f32.mrb[0].mxu0
        %v3760 = vpop.f32.mrb[0].mxu0
        %v3761 = vadd.f32 %v3609, %v3760
        %v3762 = vpop.f32.mrb[0].mxu0
        %3763 = vmatprep.mubr.bf16.mxu0 %v3571
        %3764 = vmatmul.mubr.bf16.gmra.mrb[0].mxu0 %v3570
        %v3765 = vpop.f32.mrb[0].mxu0
        %v3766 = vadd.f32 %v3609, %v3765
        %v3767 = vpop.f32.mrb[0].mxu0
        %v3768 = vpop.f32.mrb[0].mxu0
        %v3769 = vadd.f32 %v3609, %v3768
        %v3770 = vpop.f32.mrb[0].mxu0
        %3771 = vdwg.mxu0
        %v3772 = vadd.f32 %v3030, %v3742
        %v3773 = vadd.f32 %v3031, %v3745
        %v3774 = vadd.f32 %v3032, %v3750
        %v3775 = vadd.f32 %v3033, %v3753
        %v3776 = vadd.f32 %v3034, %v3758
        %v3777 = vadd.f32 %v3035, %v3761
        %v3778 = vadd.f32 %v3036, %v3766
        %v3779 = vadd.f32 %v3037, %v3769
        %3780 = vst [vmem:[%s739] sm:$0xff] %v3772
        %3781 = vst [vmem:[%s739 + $0x8] sm:$0xff] %v3773
        %3782 = vst [vmem:[%s739 + $0x10] sm:$0xff] %v3774
        %3783 = vst [vmem:[%s739 + $0x18] sm:$0xff] %v3775
        %3784 = vst [vmem:[%s739 + $0x20] sm:$0xff] %v3776
        %3785 = vst [vmem:[%s739 + $0x28] sm:$0xff] %v3777
        %3786 = vst [vmem:[%s739 + $0x30] sm:$0xff] %v3778
        %3787 = vst [vmem:[%s739 + $0x38] sm:$0xff] %v3779
        %s3788 = sand.u32 %s419, 1
        %s3789 = scalar_lea.sflag [#allocation5], %s3788
        %s3790 = sand.u32 %s419, 1
        %s3791 = smul.addr %s3790, 64
        %s3792 = scalar_lea.vmem [#allocation18], %s3791
        // Predicated region
        $region121: #{tpu_custom_call.1} parent=83 // pred_check
          %p3793 = pneg %p429
        $region122: #{tpu_custom_call.1} parent=83 // pred_check_branch
          %3795 = sbr.rel (%p3793) target = $region124
        $region123: #{tpu_custom_call.1} parent=83 // pred_region
          %s3796 = smul.u32 8, %s44
          %s3798 = ssub.s32 1024, 1024
          %3799 = vsyncadd %s3789, %s3798
          %s3800 = smul.addr %s43, 16
          %s3801 = sadd.s32 %s3796, %s3800
          %s3802 = smul.addr %s3801, 128
          %s3803 = scalar_lea.hbm %s16, %s3802
          %s3804 = sshll.u32 %s3792, 4
          %s3805 = int_to_ptr.vmem [resolvable:$true] %s3804
          %3810 = dma.vmem_to_hbm [thread:$0]  %s3805, 1024, %s3803, %s3789, 128, 128, 8
        $region124: #{tpu_custom_call.1} parent=83 // pred_fallthru
          _
      $region84: #{tpu_custom_call.1} parent=5 // pred_fallthru
        _
      %p3811 = scmp.le.s32.totalorder 2, %s34
      // Predicated region
      $region125: #{tpu_custom_call.1} parent=5 // pred_check
        %p3812 = pneg %p3811
      $region126: #{tpu_custom_call.1} parent=5 // pred_check_branch
        %3814 = sbr.rel (%p3812) target = $region128
      $region127: #{tpu_custom_call.1} parent=5 // pred_region
        %s3815 = ssub.s32 %s34, 2
        // Predicated region
        $region129: #{tpu_custom_call.1} parent=127 // pred_check
          %p3816 = pneg %p435
        $region130: #{tpu_custom_call.1} parent=127 // pred_check_branch
          %3818 = sbr.rel (%p3816) target = $region132
        $region131: #{tpu_custom_call.1} parent=127 // pred_region
          %s3819 = sand.u32 %s420, 1
          %s3820 = scalar_lea.sflag [#allocation5], %s3819
          %s3821 = sand.u32 %s420, 1
          %s3822 = smul.addr %s3821, 64
          %s3823 = scalar_lea.vmem [#allocation18], %s3822
          %3824 = dma.done %s3820, 1024
        $region132: #{tpu_custom_call.1} parent=127 // pred_fallthru
          _
      $region128: #{tpu_custom_call.1} parent=5 // pred_fallthru
        _
    $region6: #{tpu_custom_call.1} parent=1 // loop_footer
      %s38 = sadd.s32 1, %s34
    $region7: #{tpu_custom_call.1} parent=1 // loop_footer_branch
      %33 = sbr.rel target = $region3
    $region8: #{tpu_custom_call.1} parent=1 // loop_exit
      _
    %3825 = vsyncpa [#allocation4], 1
    %s3826 = scalar_lea.sflag [#allocation4], 1
    %3827 = vsyncpa %s3826, 1
    %3828 = vsyncpa [#allocation7], 1
    %3829 = vsyncpa [#allocation10], 1
    %s3830 = scalar_lea.sflag [#allocation10], 1
    %3831 = vsyncpa %s3830, 1
    %3832 = vsyncpa [#allocation13], 1
    %3833 = vsyncpa [#allocation16], 1
    %3834 = vsyncpa [#allocation5], 1
    %s3835 = scalar_lea.sflag [#allocation5], 1
    %3836 = vsyncpa %s3835, 1

</llo_original>
